<compile_context>
chip_gen: v6e
topology: v6e:2x2x1
jax: 0.10.0
libtpu: 0.0.40
codegen_flags: <defaults>
</compile_context>

<pallas_src>
import math
import functools

import jax
import jax.numpy as jnp
from jax import lax
from jax.experimental import pallas as pl
from jax.experimental.pallas import tpu as pltpu

LN_EPS = 1e-5                      # torch.nn.LayerNorm default
INV_SQRT2 = 0.7071067811865476
MASK_NEG = -1e30                   # large finite negative (exp underflows to exactly 0)


# ---------------------------------------------------------------------------
# In-kernel math helpers
# ---------------------------------------------------------------------------
def _erf(x):
    # TODO(synk): lax.erf has no Mosaic TPU lowering; Abramowitz & Stegun 7.1.26
    # rational approximation (|err| < 1.5e-7) matches torch's exact-erf GELU in f32.
    a1, a2, a3, a4, a5 = (0.254829592, -0.284496736, 1.421413741,
                          -1.453152027, 1.061405429)
    p = 0.3275911
    s = jnp.where(x >= 0.0, 1.0, -1.0)
    ax = jnp.abs(x)
    t = pl.reciprocal(1.0 + p * ax, approx=True)      # divide -> EUP slot
    poly = ((((a5 * t + a4) * t + a3) * t + a2) * t + a1) * t
    return s * (1.0 - poly * jnp.exp(-ax * ax))


def _gelu(x):
    # torch.nn.GELU() default: exact (erf-based) GELU
    return 0.5 * x * (1.0 + _erf(x * INV_SQRT2))


def _layer_norm(x, gamma, beta):
    mu = jnp.mean(x, axis=-1, keepdims=True)
    xc = x - mu
    var = jnp.mean(xc * xc, axis=-1, keepdims=True)
    return xc * lax.rsqrt(var + LN_EPS) * gamma + beta


# ---------------------------------------------------------------------------
# Fused encoder kernel: grid = (batch_tile, block); activation resident in VMEM
# ---------------------------------------------------------------------------
def _encoder_kernel(n_head, Bt, L, resident,
                    obs_ref,      # (R, obs_dim)     R = Bt * L folded rows
                    mask_ref,     # (Bt, L, L)       raw atten_masks (0 / nonzero)
                    ln0_ref,      # (2, obs_dim)     [gamma, beta] of obs LayerNorm
                    wemb_ref,     # (obs_dim, D)
                    evec_ref,     # (3, D)           [b_emb, ln_gamma, ln_beta]
                    wqkv_ref,     # (n_block, D, 3D) or (D, 3D)   q cols pre-scaled
                    bqkv_ref,     # (n_block, 1, 3D) or (1, 3D)
                    wp_ref,       # (n_block, D, D)  or (D, D)    output projection
                    wm1_ref,      # (n_block, D, D)  or (D, D)    mlp fc1
                    wm2_ref,      # (n_block, D, D)  or (D, D)    mlp fc2
                    vec_ref,      # (n_block, 8, D)  or (8, D)
                    out_ref,      # (R, D)           VMEM-resident activation / output
                    y_sc):        # (R, D) scratch   attention output (row-slab writes)
    blk = pl.program_id(1)

    # --- blk == 0: obs_encoder (LayerNorm -> Linear -> GELU) + Encoder.ln ---------
    @pl.when(blk == 0)
    def _():
        o = obs_ref[...]
        h = _layer_norm(o, ln0_ref[0:1, :], ln0_ref[1:2, :])
        h = jnp.dot(h, wemb_ref[...], preferred_element_type=jnp.float32) + evec_ref[0:1, :]
        h = _gelu(h)
        out_ref[...] = _layer_norm(h, evec_ref[1:2, :], evec_ref[2:3, :])

    x = out_ref[...]                                   # (R, D) resident activation
    D = x.shape[-1]
    hs = D // n_head

    def blkw(ref):
        # VMEM-resident weights are indexed by the block grid axis in-kernel;
        # streamed weights already arrive as the current block's slice.
        return ref[blk] if resident else ref[...]

    wqkv = blkw(wqkv_ref)                              # (D, 3D)
    bqkv = blkw(bqkv_ref)                              # (1, 3D)
    wp = blkw(wp_ref)                                  # (D, D)
    vec = blkw(vec_ref)                                # (8, D)

    # --- SelfAttention -------------------------------------------------------------
    # fused q/k/v projection on the folded rows: one (R, D) @ (D, 3D) matmul
    qkv = jnp.dot(x, wqkv, preferred_element_type=jnp.float32) + bqkv     # (R, 3D)

    # attention per batch element (L x L scores, no masked cross-batch waste);
    # the per-head output projection is accumulated so there is no lane-masked
    # concat scratch — only full-width (L, D) row-slab writes.
    # TODO(synk): for large Bt*n_head (>=8 heads, R>=256) switch these Python
    # loops to lax.fori_loop(unroll=2) to bound live ranges / compile time.
    for b in range(Bt):
        rows = slice(b * L, (b + 1) * L)
        bias_b = jnp.where(mask_ref[b] == 0.0, jnp.float32(MASK_NEG), jnp.float32(0.0))
        qkv_b = qkv[rows, :]                           # (L, 3D)
        yb = None
        for h in range(n_head):
            q = qkv_b[:, h * hs:(h + 1) * hs]          # already scaled by 1/sqrt(hs)
            k = qkv_b[:, D + h * hs:D + (h + 1) * hs]
            v = qkv_b[:, 2 * D + h * hs:2 * D + (h + 1) * hs]
            s = lax.dot_general(q, k, (((1,), (1,)), ((), ())),
                                preferred_element_type=jnp.float32) + bias_b
            s = s - jnp.max(s, axis=-1, keepdims=True)
            e = jnp.exp(s)
            att = e * pl.reciprocal(jnp.sum(e, axis=-1, keepdims=True), approx=True)
            av = jnp.dot(att, v, preferred_element_type=jnp.float32)       # (L, hs)
            contrib = jnp.dot(av, wp[h * hs:(h + 1) * hs, :],
                              preferred_element_type=jnp.float32)          # (L, D)
            yb = contrib if yb is None else yb + contrib
        y_sc[rows, :] = yb

    y = y_sc[...] + vec[0:1, :]                        # + proj bias

    # residual + ln1
    h1 = _layer_norm(x + y, vec[3:4, :], vec[4:5, :])

    # MLP: Linear -> GELU -> Linear (full folded-row matmuls)
    m = jnp.dot(h1, blkw(wm1_ref), preferred_element_type=jnp.float32) + vec[1:2, :]
    m = _gelu(m)
    m = jnp.dot(m, blkw(wm2_ref), preferred_element_type=jnp.float32) + vec[2:3, :]

    # residual + ln2  (stays resident in VMEM; written to HBM once per batch tile)
    out_ref[...] = _layer_norm(h1 + m, vec[5:6, :], vec[6:7, :])


# ---------------------------------------------------------------------------
# Wrapper
# ---------------------------------------------------------------------------
def _vmem_capacity_bytes():
    try:
        cap = getattr(pltpu.get_tpu_info(), "vmem_capacity_bytes", None)
        if cap:
            return int(cap)
    except Exception:
        pass
    return 64 * 1024 * 1024        # conservative default (v7x per-TC VMEM)


def _pick_batch_tile(B, L, max_rows):
    """Largest divisor Bt of B with Bt*L <= max_rows and (Bt*L) % 8 == 0.
    Bt == B (full-extent block) is always layout-legal and preferred when it fits.
    No forced >= 2 grid steps: v5e/v6e are single-TensorCore chips."""
    if B * L <= max_rows:
        return B
    for bt in range(B, 0, -1):
        if B % bt:
            continue
        r = bt * L
        if r <= max_rows and r % 8 == 0:
            return bt
    return B   # nothing sublane-aligned fits; fall back to the full batch block


def encoder_forward(state, obs, atten_masks, params, *, n_head, batch_tile=None):
    del state                                   # encode_state=False path
    B, L, obs_dim = obs.shape
    D = params["w_emb"].shape[1]
    n_block = params["w_qkv"].shape[0]
    assert D % n_head == 0
    hs = D // n_head

    vmem_cap = _vmem_capacity_bytes()
    max_rows = 512 if vmem_cap >= 96 * 1024 * 1024 else 256
    Bt = _pick_batch_tile(B, L, max_rows) if batch_tile is None else batch_tile
    assert B % Bt == 0 and (Bt == B or (Bt * L) % 8 == 0)
    n_bt = B // Bt
    R = Bt * L                                  # folded rows per grid step

    # Activations flow as 2-D (B*L, feat) slabs (wrapper-side reshapes are free XLA).
    obs2d = obs.reshape(B * L, obs_dim)
    masks = atten_masks.astype(jnp.float32)     # compact (B, L, L); bias built in-kernel

    # Fold the 1/sqrt(hs) attention scale into the q-columns of the fused QKV
    # weight/bias (constant-folds under jit; zero in-kernel cost).
    scale = 1.0 / math.sqrt(hs)
    col_scale = jnp.concatenate([jnp.full((D,), scale, jnp.float32),
                                 jnp.ones((2 * D,), jnp.float32)])
    w_qkv = params["w_qkv"] * col_scale[None, None, :]
    b_qkv = params["b_qkv"] * col_scale[None, None, :]
    w_proj = params["w_pm"][:, 0]
    w_mlp1 = params["w_pm"][:, 1]
    w_mlp2 = params["w_pm"][:, 2]

    # Keep all per-block weights VMEM-resident (one DMA per call) when they fit;
    # otherwise stream them per block (re-DMA'd once per batch tile).
    weight_bytes = 4 * n_block * (3 * D * D + 3 * D + 3 * D * D + 8 * D)
    act_bytes = 4 * (R * obs_dim + Bt * L * L + 2 * R * D + R * 3 * D
                     + 2 * obs_dim + 3 * D + obs_dim * D)
    vmem_limit = max(16 * 1024 * 1024, min(vmem_cap * 3 // 4, 96 * 1024 * 1024))
    resident = (2 * weight_bytes + 3 * act_bytes) < int(0.7 * vmem_limit)
    # TODO(synk): for production D (>=512) on v7x (64 MiB VMEM), tile the QKV/MLP
    # output (N) dimension into 256-lane strips and/or store streamed weights in
    # bf16 instead of relying on the streaming fallback alone.

    if resident:
        def _resident_spec(shape):
            return pl.BlockSpec(shape, lambda bt, blk: (0,) * len(shape))
        wqkv_spec = _resident_spec((n_block, D, 3 * D))
        bqkv_spec = _resident_spec((n_block, 1, 3 * D))
        wmat_specs = [_resident_spec((n_block, D, D)) for _ in range(3)]
        vec_spec = _resident_spec((n_block, 8, D))
    else:
        wqkv_spec = pl.BlockSpec((None, D, 3 * D), lambda bt, blk: (blk, 0, 0))
        bqkv_spec = pl.BlockSpec((None, 1, 3 * D), lambda bt, blk: (blk, 0, 0))
        wmat_specs = [pl.BlockSpec((None, D, D), lambda bt, blk: (blk, 0, 0))
                      for _ in range(3)]
        vec_spec = pl.BlockSpec((None, 8, D), lambda bt, blk: (blk, 0, 0))

    kernel = functools.partial(_encoder_kernel, n_head, Bt, L, resident)

    out2d = pl.pallas_call(
        kernel,
        out_shape=jax.ShapeDtypeStruct((B * L, D), jnp.float32),
        grid=(n_bt, n_block),
        in_specs=[
            pl.BlockSpec((R, obs_dim), lambda bt, blk: (bt, 0)),       # obs rows
            pl.BlockSpec((Bt, L, L), lambda bt, blk: (bt, 0, 0)),      # raw mask
            pl.BlockSpec((2, obs_dim), lambda bt, blk: (0, 0)),        # ln0 gamma/beta
            pl.BlockSpec((obs_dim, D), lambda bt, blk: (0, 0)),        # w_emb
            pl.BlockSpec((3, D), lambda bt, blk: (0, 0)),              # emb bias + ln
            wqkv_spec, bqkv_spec,
            wmat_specs[0], wmat_specs[1], wmat_specs[2],
            vec_spec,
        ],
        out_specs=pl.BlockSpec((R, D), lambda bt, blk: (bt, 0)),
        scratch_shapes=[pltpu.VMEM((R, D), jnp.float32)],
        compiler_params=pltpu.CompilerParams(
            dimension_semantics=("parallel", "arbitrary"),
            vmem_limit_bytes=int(vmem_limit),
        ),
    )(obs2d, masks, params["ln0_gb"], params["w_emb"], params["emb_vec"],
      w_qkv, b_qkv, w_proj, w_mlp1, w_mlp2, params["vec"])

    return out2d.reshape(B, L, D)


# ---------------------------------------------------------------------------
# Deterministic parameter init (shapes per the torch module __init__),
# stacked over blocks for the single-pallas_call layout.
# ---------------------------------------------------------------------------
def init_params(key, obs_dim, n_embd, n_block):
    def nrm(k, shape, scale=0.1):
        return (scale * jax.random.normal(k, shape)).astype(jnp.float32)

    k_emb, k_blk = jax.random.split(key)
    ks = jax.random.split(k_emb, 6)
    params = {
        "ln0_gb": jnp.stack([1.0 + nrm(ks[0], (obs_dim,)), nrm(ks[1], (obs_dim,), 0.05)]),
        "w_emb": nrm(ks[2], (obs_dim, n_embd)),
        "emb_vec": jnp.stack([nrm(ks[3], (n_embd,), 0.05),          # obs_encoder bias
                              1.0 + nrm(ks[4], (n_embd,)),          # Encoder.ln gamma
                              nrm(ks[5], (n_embd,), 0.05)]),        # Encoder.ln beta
    }
    w_qkv, b_qkv, w_pm, vec = [], [], [], []
    for kb in jax.random.split(k_blk, n_block):
        bks = jax.random.split(kb, 10)
        w_qkv.append(jnp.concatenate([nrm(bks[0], (n_embd, n_embd)),     # query
                                      nrm(bks[1], (n_embd, n_embd)),     # key
                                      nrm(bks[2], (n_embd, n_embd))],    # value
                                     axis=1))                            # (D, 3D)
        b_qkv.append(jnp.concatenate([nrm(bks[3], (n_embd,), 0.05),
                                      nrm(bks[4], (n_embd,), 0.05),
                                      nrm(bks[5], (n_embd,), 0.05)])[None, :])
        w_pm.append(jnp.stack([nrm(bks[6], (n_embd, n_embd)),            # proj
                               nrm(bks[7], (n_embd, n_embd)),            # mlp fc1
                               nrm(bks[8], (n_embd, n_embd))]))          # mlp fc2
        vks = jax.random.split(bks[9], 7)
        vec.append(jnp.stack([nrm(vks[0], (n_embd,), 0.05),              # b_proj
                              nrm(vks[1], (n_embd,), 0.05),              # b_mlp1
                              nrm(vks[2], (n_embd,), 0.05),              # b_mlp2
                              1.0 + nrm(vks[3], (n_embd,)),              # ln1 gamma
                              nrm(vks[4], (n_embd,), 0.05),              # ln1 beta
                              1.0 + nrm(vks[5], (n_embd,)),              # ln2 gamma
                              nrm(vks[6], (n_embd,), 0.05),              # ln2 beta
                              jnp.zeros((n_embd,), jnp.float32)]))       # pad
    params["w_qkv"] = jnp.stack(w_qkv)
    params["b_qkv"] = jnp.stack(b_qkv)
    params["w_pm"] = jnp.stack(w_pm)
    params["vec"] = jnp.stack(vec)
    return params


# ---------------------------------------------------------------------------
# Pure-JAX reference (exact erf GELU, exact softmax) to validate the kernel
# ---------------------------------------------------------------------------
def ref_encoder(obs, atten_masks, params, *, n_head):
    def ln(x, g, b):
        mu = x.mean(-1, keepdims=True)
        var = ((x - mu) ** 2).mean(-1, keepdims=True)
        return (x - mu) / jnp.sqrt(var + LN_EPS) * g + b

    def gelu(x):
        return 0.5 * x * (1.0 + lax.erf(x * INV_SQRT2))

    B, L, _ = obs.shape
    D = params["w_emb"].shape[1]
    hs = D // n_head

    x = ln(obs, params["ln0_gb"][0], params["ln0_gb"][1])
    x = gelu(x @ params["w_emb"] + params["emb_vec"][0])
    rep = ln(x, params["emb_vec"][1], params["emb_vec"][2])

    for i in range(params["w_qkv"].shape[0]):
        wqkv = params["w_qkv"][i]
        bqkv = params["b_qkv"][i][0]
        wp, wm1, wm2 = params["w_pm"][i]
        bp, bm1, bm2, g1, be1, g2, be2 = params["vec"][i][:7]
        qkv = rep @ wqkv + bqkv
        q = qkv[..., :D].reshape(B, L, n_head, hs)
        k = qkv[..., D:2 * D].reshape(B, L, n_head, hs)
        v = qkv[..., 2 * D:].reshape(B, L, n_head, hs)
        att = jnp.einsum("blhd,bmhd->bhlm", q, k) / math.sqrt(hs)
        att = jnp.where(atten_masks[:, None, :, :] == 0, -jnp.inf, att)
        att = jax.nn.softmax(att, axis=-1)
        y = jnp.einsum("bhlm,bmhd->blhd", att, v).reshape(B, L, D)
        y = y @ wp + bp
        h = ln(rep + y, g1, be1)
        m = gelu(h @ wm1 + bm1) @ wm2 + bm2
        rep = ln(h + m, g2, be2)
    return rep


if __name__ == "__main__":
    # Small shapes consistent with Encoder(state_dim, obs_dim, n_block, n_embd,
    # n_head, n_agent, encode_state=False)
    B, n_agent, state_dim, obs_dim = 4, 8, 48, 32
    n_block, n_embd, n_head = 2, 32, 2
    L = n_agent

    key = jax.random.PRNGKey(0)
    k_p, k_obs, k_state = jax.random.split(key, 3)
    params = init_params(k_p, obs_dim, n_embd, n_block)
    obs = jax.random.normal(k_obs, (B, L, obs_dim), jnp.float32)
    state = jax.random.normal(k_state, (B, L, state_dim), jnp.float32)  # unused
    atten_masks = jnp.broadcast_to(
        jnp.tril(jnp.ones((L, L), jnp.float32)), (B, L, L))

    out = encoder_forward(state, obs, atten_masks, params, n_head=n_head)
    out = jax.block_until_ready(out)

    ref = ref_encoder(obs, atten_masks, params, n_head=n_head)
    assert out.shape == (B, L, n_embd), out.shape
    err = float(jnp.max(jnp.abs(out - ref)))
    assert err < 2e-2, f"max abs err {err}"
    print("KERNEL_OK")
</pallas_src>

<mosaic_0001>
module attributes {stable_mosaic.version = 11 : i64} {
  func.func @_encoder_kernel(%arg0: i32, %arg1: i32, %arg2: memref<32x32xf32, #tpu.memory_space<vmem>>, %arg3: memref<4x8x8xf32, #tpu.memory_space<vmem>>, %arg4: memref<2x32xf32, #tpu.memory_space<vmem>>, %arg5: memref<32x32xf32, #tpu.memory_space<vmem>>, %arg6: memref<3x32xf32, #tpu.memory_space<vmem>>, %arg7: memref<2x32x96xf32, #tpu.memory_space<vmem>>, %arg8: memref<2x1x96xf32, #tpu.memory_space<vmem>>, %arg9: memref<2x32x32xf32, #tpu.memory_space<vmem>>, %arg10: memref<2x32x32xf32, #tpu.memory_space<vmem>>, %arg11: memref<2x32x32xf32, #tpu.memory_space<vmem>>, %arg12: memref<2x8x32xf32, #tpu.memory_space<vmem>>, %arg13: memref<32x32xf32, #tpu.memory_space<vmem>>, %arg14: memref<32x32xf32, #tpu.memory_space<vmem>>) attributes {dimension_semantics = [#tpu.dimension_semantics<parallel>, #tpu.dimension_semantics<arbitrary>], iteration_bounds = array<i64: 1, 2>, scalar_prefetch = 0 : i64, scratch_operands = 1 : i64, tpu.core_type = #tpu.core_type<tc>, window_params = [{transform_indices = @transform_0, window_bounds = array<i64: 32, 32>}, {transform_indices = @transform_1, window_bounds = array<i64: 4, 8, 8>}, {pipeline_mode = #tpu.pipeline_mode<synchronous>, transform_indices = @transform_2, window_bounds = array<i64: 2, 32>}, {pipeline_mode = #tpu.pipeline_mode<synchronous>, transform_indices = @transform_3, window_bounds = array<i64: 32, 32>}, {pipeline_mode = #tpu.pipeline_mode<synchronous>, transform_indices = @transform_4, window_bounds = array<i64: 3, 32>}, {pipeline_mode = #tpu.pipeline_mode<synchronous>, transform_indices = @transform_5, window_bounds = array<i64: 2, 32, 96>}, {pipeline_mode = #tpu.pipeline_mode<synchronous>, transform_indices = @transform_6, window_bounds = array<i64: 2, 1, 96>}, {pipeline_mode = #tpu.pipeline_mode<synchronous>, transform_indices = @transform_7, window_bounds = array<i64: 2, 32, 32>}, {pipeline_mode = #tpu.pipeline_mode<synchronous>, transform_indices = @transform_8, window_bounds = array<i64: 2, 32, 32>}, {pipeline_mode = #tpu.pipeline_mode<synchronous>, transform_indices = @transform_9, window_bounds = array<i64: 2, 32, 32>}, {pipeline_mode = #tpu.pipeline_mode<synchronous>, transform_indices = @transform_10, window_bounds = array<i64: 2, 8, 32>}, {transform_indices = @transform_11, window_bounds = array<i64: 32, 32>}]} {
    %c0_i32 = arith.constant 0 : i32
    %0 = arith.cmpi eq, %arg1, %c0_i32 : i32
    %1 = arith.extui %0 : i1 to i32
    %c0_i32_0 = arith.constant 0 : i32
    %2 = arith.cmpi ne, %1, %c0_i32_0 : i32
    scf.if %2 {
      %c0_111 = arith.constant 0 : index
      %c0_112 = arith.constant 0 : index
      %308 = vector.load %arg2[%c0_111, %c0_112] : memref<32x32xf32, #tpu.memory_space<vmem>>, vector<32x32xf32>
      %c0_113 = arith.constant 0 : index
      %c0_114 = arith.constant 0 : index
      %309 = vector.load %arg4[%c0_113, %c0_114] : memref<2x32xf32, #tpu.memory_space<vmem>>, vector<1x32xf32>
      %c1_115 = arith.constant 1 : index
      %c0_116 = arith.constant 0 : index
      %310 = vector.load %arg4[%c1_115, %c0_116] : memref<2x32xf32, #tpu.memory_space<vmem>>, vector<1x32xf32>
      %cst_117 = arith.constant dense<0.000000e+00> : vector<32xf32>
      %311 = vector.multi_reduction <add>, %308, %cst_117 [1] : vector<32x32xf32> to vector<32xf32>
      %312 = vector.shape_cast %311 : vector<32xf32> to vector<32x1xf32>
      %cst_118 = arith.constant 3.200000e+01 : f32
      %313 = vector.broadcast %cst_118 : f32 to vector<32x1xf32>
      %314 = arith.divf %312, %313 : vector<32x1xf32>
      %315 = vector.broadcast %314 : vector<32x1xf32> to vector<32x32xf32>
      %316 = arith.subf %308, %315 : vector<32x32xf32>
      %317 = arith.mulf %316, %316 : vector<32x32xf32>
      %cst_119 = arith.constant dense<0.000000e+00> : vector<32xf32>
      %318 = vector.multi_reduction <add>, %317, %cst_119 [1] : vector<32x32xf32> to vector<32xf32>
      %319 = vector.shape_cast %318 : vector<32xf32> to vector<32x1xf32>
      %cst_120 = arith.constant 3.200000e+01 : f32
      %320 = vector.broadcast %cst_120 : f32 to vector<32x1xf32>
      %321 = arith.divf %319, %320 : vector<32x1xf32>
      %cst_121 = arith.constant 9.99999974E-6 : f32
      %322 = vector.broadcast %cst_121 : f32 to vector<32x1xf32>
      %323 = arith.addf %321, %322 : vector<32x1xf32>
      %324 = math.rsqrt %323 : vector<32x1xf32>
      %325 = vector.broadcast %324 : vector<32x1xf32> to vector<32x32xf32>
      %326 = arith.mulf %316, %325 : vector<32x32xf32>
      %327 = vector.broadcast %309 : vector<1x32xf32> to vector<32x32xf32>
      %328 = arith.mulf %326, %327 : vector<32x32xf32>
      %329 = vector.broadcast %310 : vector<1x32xf32> to vector<32x32xf32>
      %330 = arith.addf %328, %329 : vector<32x32xf32>
      %c0_122 = arith.constant 0 : index
      %c0_123 = arith.constant 0 : index
      %331 = vector.load %arg5[%c0_122, %c0_123] : memref<32x32xf32, #tpu.memory_space<vmem>>, vector<32x32xf32>
      %cst_124 = arith.constant dense<0.000000e+00> : vector<32x32xf32>
      %332 = tpu.matmul %330, %331, %cst_124 {dimension_numbers = #tpu.dot_dimension_numbers<[1], [0], [0], [1], [0, 0, 1, 1], [], []>} : vector<32x32xf32>, vector<32x32xf32>, vector<32x32xf32> -> vector<32x32xf32>
      %c0_125 = arith.constant 0 : index
      %c0_126 = arith.constant 0 : index
      %333 = vector.load %arg6[%c0_125, %c0_126] : memref<3x32xf32, #tpu.memory_space<vmem>>, vector<1x32xf32>
      %334 = vector.broadcast %333 : vector<1x32xf32> to vector<32x32xf32>
      %335 = arith.addf %332, %334 : vector<32x32xf32>
      %cst_127 = arith.constant 5.000000e-01 : f32
      %336 = vector.broadcast %cst_127 : f32 to vector<32x32xf32>
      %337 = arith.mulf %336, %335 : vector<32x32xf32>
      %cst_128 = arith.constant 0.707106769 : f32
      %338 = vector.broadcast %cst_128 : f32 to vector<32x32xf32>
      %339 = arith.mulf %335, %338 : vector<32x32xf32>
      %cst_129 = arith.constant 0.000000e+00 : f32
      %340 = vector.broadcast %cst_129 : f32 to vector<32x32xf32>
      %341 = arith.cmpf oge, %339, %340 : vector<32x32xf32>
      %cst_130 = arith.constant 1.000000e+00 : f32
      %cst_131 = arith.constant -1.000000e+00 : f32
      %342 = vector.broadcast %cst_130 : f32 to vector<32x32xf32>
      %343 = vector.broadcast %cst_131 : f32 to vector<32x32xf32>
      %344 = arith.select %341, %342, %343 : vector<32x32xi1>, vector<32x32xf32>
      %345 = math.absf %339 : vector<32x32xf32>
      %cst_132 = arith.constant 0.327591091 : f32
      %346 = vector.broadcast %cst_132 : f32 to vector<32x32xf32>
      %347 = arith.mulf %346, %345 : vector<32x32xf32>
      %cst_133 = arith.constant 1.000000e+00 : f32
      %348 = vector.broadcast %cst_133 : f32 to vector<32x32xf32>
      %349 = arith.addf %348, %347 : vector<32x32xf32>
      %350 = tpu.reciprocal %349 {approx = true} : vector<32x32xf32> -> vector<32x32xf32>
      %cst_134 = arith.constant 1.06140542 : f32
      %351 = vector.broadcast %cst_134 : f32 to vector<32x32xf32>
      %352 = arith.mulf %351, %350 : vector<32x32xf32>
      %cst_135 = arith.constant -1.45315206 : f32
      %353 = vector.broadcast %cst_135 : f32 to vector<32x32xf32>
      %354 = arith.addf %352, %353 : vector<32x32xf32>
      %355 = arith.mulf %354, %350 : vector<32x32xf32>
      %cst_136 = arith.constant 1.42141378 : f32
      %356 = vector.broadcast %cst_136 : f32 to vector<32x32xf32>
      %357 = arith.addf %355, %356 : vector<32x32xf32>
      %358 = arith.mulf %357, %350 : vector<32x32xf32>
      %cst_137 = arith.constant -0.284496725 : f32
      %359 = vector.broadcast %cst_137 : f32 to vector<32x32xf32>
      %360 = arith.addf %358, %359 : vector<32x32xf32>
      %361 = arith.mulf %360, %350 : vector<32x32xf32>
      %cst_138 = arith.constant 0.254829586 : f32
      %362 = vector.broadcast %cst_138 : f32 to vector<32x32xf32>
      %363 = arith.addf %361, %362 : vector<32x32xf32>
      %364 = arith.mulf %363, %350 : vector<32x32xf32>
      %cst_139 = arith.constant 0.000000e+00 : f32
      %365 = vector.broadcast %cst_139 : f32 to vector<32x32xf32>
      %366 = arith.subf %365, %345 : vector<32x32xf32>
      %367 = arith.mulf %366, %345 : vector<32x32xf32>
      %368 = math.exp %367 : vector<32x32xf32>
      %369 = arith.mulf %364, %368 : vector<32x32xf32>
      %cst_140 = arith.constant 1.000000e+00 : f32
      %370 = vector.broadcast %cst_140 : f32 to vector<32x32xf32>
      %371 = arith.subf %370, %369 : vector<32x32xf32>
      %372 = arith.mulf %344, %371 : vector<32x32xf32>
      %cst_141 = arith.constant 1.000000e+00 : f32
      %373 = vector.broadcast %cst_141 : f32 to vector<32x32xf32>
      %374 = arith.addf %373, %372 : vector<32x32xf32>
      %375 = arith.mulf %337, %374 : vector<32x32xf32>
      %c1_142 = arith.constant 1 : index
      %c0_143 = arith.constant 0 : index
      %376 = vector.load %arg6[%c1_142, %c0_143] : memref<3x32xf32, #tpu.memory_space<vmem>>, vector<1x32xf32>
      %c2_144 = arith.constant 2 : index
      %c0_145 = arith.constant 0 : index
      %377 = vector.load %arg6[%c2_144, %c0_145] : memref<3x32xf32, #tpu.memory_space<vmem>>, vector<1x32xf32>
      %cst_146 = arith.constant dense<0.000000e+00> : vector<32xf32>
      %378 = vector.multi_reduction <add>, %375, %cst_146 [1] : vector<32x32xf32> to vector<32xf32>
      %379 = vector.shape_cast %378 : vector<32xf32> to vector<32x1xf32>
      %cst_147 = arith.constant 3.200000e+01 : f32
      %380 = vector.broadcast %cst_147 : f32 to vector<32x1xf32>
      %381 = arith.divf %379, %380 : vector<32x1xf32>
      %382 = vector.broadcast %381 : vector<32x1xf32> to vector<32x32xf32>
      %383 = arith.subf %375, %382 : vector<32x32xf32>
      %384 = arith.mulf %383, %383 : vector<32x32xf32>
      %cst_148 = arith.constant dense<0.000000e+00> : vector<32xf32>
      %385 = vector.multi_reduction <add>, %384, %cst_148 [1] : vector<32x32xf32> to vector<32xf32>
      %386 = vector.shape_cast %385 : vector<32xf32> to vector<32x1xf32>
      %cst_149 = arith.constant 3.200000e+01 : f32
      %387 = vector.broadcast %cst_149 : f32 to vector<32x1xf32>
      %388 = arith.divf %386, %387 : vector<32x1xf32>
      %cst_150 = arith.constant 9.99999974E-6 : f32
      %389 = vector.broadcast %cst_150 : f32 to vector<32x1xf32>
      %390 = arith.addf %388, %389 : vector<32x1xf32>
      %391 = math.rsqrt %390 : vector<32x1xf32>
      %392 = vector.broadcast %391 : vector<32x1xf32> to vector<32x32xf32>
      %393 = arith.mulf %383, %392 : vector<32x32xf32>
      %394 = vector.broadcast %376 : vector<1x32xf32> to vector<32x32xf32>
      %395 = arith.mulf %393, %394 : vector<32x32xf32>
      %396 = vector.broadcast %377 : vector<1x32xf32> to vector<32x32xf32>
      %397 = arith.addf %395, %396 : vector<32x32xf32>
      %c0_151 = arith.constant 0 : index
      %c0_152 = arith.constant 0 : index
      %398 = vector.load %arg13[%c0_151, %c0_152] : memref<32x32xf32, #tpu.memory_space<vmem>>, vector<32x32xf32>
      tpu.vector_store %arg13[%c0_151, %c0_152], %397 {strides = array<i32>} : memref<32x32xf32, #tpu.memory_space<vmem>>, vector<32x32xf32>,
    } else {
    }
    %c0 = arith.constant 0 : index
    %c0_1 = arith.constant 0 : index
    %3 = vector.load %arg13[%c0, %c0_1] : memref<32x32xf32, #tpu.memory_space<vmem>>, vector<32x32xf32>
    %4 = arith.index_cast %arg1 : i32 to index
    %c0_2 = arith.constant 0 : index
    %c0_3 = arith.constant 0 : index
    %5 = vector.load %arg7[%4, %c0_2, %c0_3] : memref<2x32x96xf32, #tpu.memory_space<vmem>>, vector<1x32x96xf32>
    %6 = vector.shape_cast %5 : vector<1x32x96xf32> to vector<32x96xf32>
    %7 = arith.index_cast %arg1 : i32 to index
    %c0_4 = arith.constant 0 : index
    %c0_5 = arith.constant 0 : index
    %8 = vector.load %arg8[%7, %c0_4, %c0_5] : memref<2x1x96xf32, #tpu.memory_space<vmem>>, vector<1x1x96xf32>
    %9 = vector.shape_cast %8 : vector<1x1x96xf32> to vector<1x96xf32>
    %10 = arith.index_cast %arg1 : i32 to index
    %c0_6 = arith.constant 0 : index
    %c0_7 = arith.constant 0 : index
    %11 = vector.load %arg9[%10, %c0_6, %c0_7] : memref<2x32x32xf32, #tpu.memory_space<vmem>>, vector<1x32x32xf32>
    %12 = vector.shape_cast %11 : vector<1x32x32xf32> to vector<32x32xf32>
    %13 = arith.index_cast %arg1 : i32 to index
    %c0_8 = arith.constant 0 : index
    %c0_9 = arith.constant 0 : index
    %14 = vector.load %arg12[%13, %c0_8, %c0_9] : memref<2x8x32xf32, #tpu.memory_space<vmem>>, vector<1x8x32xf32>
    %15 = vector.shape_cast %14 : vector<1x8x32xf32> to vector<8x32xf32>
    %cst = arith.constant dense<0.000000e+00> : vector<32x96xf32>
    %16 = tpu.matmul %3, %6, %cst {dimension_numbers = #tpu.dot_dimension_numbers<[1], [0], [0], [1], [0, 0, 1, 1], [], []>} : vector<32x32xf32>, vector<32x96xf32>, vector<32x96xf32> -> vector<32x96xf32>
    %17 = vector.broadcast %9 : vector<1x96xf32> to vector<32x96xf32>
    %18 = arith.addf %16, %17 : vector<32x96xf32>
    %c0_10 = arith.constant 0 : index
    %c0_11 = arith.constant 0 : index
    %c0_12 = arith.constant 0 : index
    %19 = vector.load %arg3[%c0_10, %c0_11, %c0_12] : memref<4x8x8xf32, #tpu.memory_space<vmem>>, vector<1x8x8xf32>
    %20 = vector.shape_cast %19 : vector<1x8x8xf32> to vector<8x8xf32>
    %cst_13 = arith.constant 0.000000e+00 : f32
    %21 = vector.broadcast %cst_13 : f32 to vector<8x8xf32>
    %22 = arith.cmpf oeq, %20, %21 : vector<8x8xf32>
    %cst_14 = arith.constant -1.000000e+30 : f32
    %cst_15 = arith.constant 0.000000e+00 : f32
    %23 = vector.broadcast %cst_14 : f32 to vector<8x8xf32>
    %24 = vector.broadcast %cst_15 : f32 to vector<8x8xf32>
    %25 = arith.select %22, %23, %24 : vector<8x8xi1>, vector<8x8xf32>
    %26 = vector.extract_strided_slice %18 {offsets = [0, 0], sizes = [8, 96], strides = [1, 1]} : vector<32x96xf32> to vector<8x96xf32>
    %27 = vector.extract_strided_slice %26 {offsets = [0, 0], sizes = [8, 16], strides = [1, 1]} : vector<8x96xf32> to vector<8x16xf32>
    %28 = vector.extract_strided_slice %26 {offsets = [0, 32], sizes = [8, 16], strides = [1, 1]} : vector<8x96xf32> to vector<8x16xf32>
    %29 = vector.extract_strided_slice %26 {offsets = [0, 64], sizes = [8, 16], strides = [1, 1]} : vector<8x96xf32> to vector<8x16xf32>
    %cst_16 = arith.constant dense<0.000000e+00> : vector<8x8xf32>
    %30 = tpu.matmul %27, %28, %cst_16 {dimension_numbers = #tpu.dot_dimension_numbers<[1], [1], [0], [0], [0, 0, 1, 0], [], []>} : vector<8x16xf32>, vector<8x16xf32>, vector<8x8xf32> -> vector<8x8xf32>
    %31 = arith.addf %30, %25 : vector<8x8xf32>
    %cst_17 = arith.constant dense<0xFF800000> : vector<8xf32>
    %32 = vector.multi_reduction <maximumf>, %31, %cst_17 [1] : vector<8x8xf32> to vector<8xf32>
    %33 = vector.shape_cast %32 : vector<8xf32> to vector<8x1xf32>
    %34 = vector.broadcast %33 : vector<8x1xf32> to vector<8x8xf32>
    %35 = arith.subf %31, %34 : vector<8x8xf32>
    %36 = math.exp %35 : vector<8x8xf32>
    %cst_18 = arith.constant dense<0.000000e+00> : vector<8xf32>
    %37 = vector.multi_reduction <add>, %36, %cst_18 [1] : vector<8x8xf32> to vector<8xf32>
    %38 = vector.shape_cast %37 : vector<8xf32> to vector<8x1xf32>
    %39 = tpu.reciprocal %38 {approx = true} : vector<8x1xf32> -> vector<8x1xf32>
    %40 = vector.broadcast %39 : vector<8x1xf32> to vector<8x8xf32>
    %41 = arith.mulf %36, %40 : vector<8x8xf32>
    %cst_19 = arith.constant dense<0.000000e+00> : vector<8x16xf32>
    %42 = tpu.matmul %41, %29, %cst_19 {dimension_numbers = #tpu.dot_dimension_numbers<[1], [0], [0], [1], [0, 0, 1, 1], [], []>} : vector<8x8xf32>, vector<8x16xf32>, vector<8x16xf32> -> vector<8x16xf32>
    %43 = vector.extract_strided_slice %12 {offsets = [0, 0], sizes = [16, 32], strides = [1, 1]} : vector<32x32xf32> to vector<16x32xf32>
    %cst_20 = arith.constant dense<0.000000e+00> : vector<8x32xf32>
    %44 = tpu.matmul %42, %43, %cst_20 {dimension_numbers = #tpu.dot_dimension_numbers<[1], [0], [0], [1], [0, 0, 1, 1], [], []>} : vector<8x16xf32>, vector<16x32xf32>, vector<8x32xf32> -> vector<8x32xf32>
    %45 = vector.extract_strided_slice %26 {offsets = [0, 16], sizes = [8, 16], strides = [1, 1]} : vector<8x96xf32> to vector<8x16xf32>
    %46 = vector.extract_strided_slice %26 {offsets = [0, 48], sizes = [8, 16], strides = [1, 1]} : vector<8x96xf32> to vector<8x16xf32>
    %47 = vector.extract_strided_slice %26 {offsets = [0, 80], sizes = [8, 16], strides = [1, 1]} : vector<8x96xf32> to vector<8x16xf32>
    %cst_21 = arith.constant dense<0.000000e+00> : vector<8x8xf32>
    %48 = tpu.matmul %45, %46, %cst_21 {dimension_numbers = #tpu.dot_dimension_numbers<[1], [1], [0], [0], [0, 0, 1, 0], [], []>} : vector<8x16xf32>, vector<8x16xf32>, vector<8x8xf32> -> vector<8x8xf32>
    %49 = arith.addf %48, %25 : vector<8x8xf32>
    %cst_22 = arith.constant dense<0xFF800000> : vector<8xf32>
    %50 = vector.multi_reduction <maximumf>, %49, %cst_22 [1] : vector<8x8xf32> to vector<8xf32>
    %51 = vector.shape_cast %50 : vector<8xf32> to vector<8x1xf32>
    %52 = vector.broadcast %51 : vector<8x1xf32> to vector<8x8xf32>
    %53 = arith.subf %49, %52 : vector<8x8xf32>
    %54 = math.exp %53 : vector<8x8xf32>
    %cst_23 = arith.constant dense<0.000000e+00> : vector<8xf32>
    %55 = vector.multi_reduction <add>, %54, %cst_23 [1] : vector<8x8xf32> to vector<8xf32>
    %56 = vector.shape_cast %55 : vector<8xf32> to vector<8x1xf32>
    %57 = tpu.reciprocal %56 {approx = true} : vector<8x1xf32> -> vector<8x1xf32>
    %58 = vector.broadcast %57 : vector<8x1xf32> to vector<8x8xf32>
    %59 = arith.mulf %54, %58 : vector<8x8xf32>
    %cst_24 = arith.constant dense<0.000000e+00> : vector<8x16xf32>
    %60 = tpu.matmul %59, %47, %cst_24 {dimension_numbers = #tpu.dot_dimension_numbers<[1], [0], [0], [1], [0, 0, 1, 1], [], []>} : vector<8x8xf32>, vector<8x16xf32>, vector<8x16xf32> -> vector<8x16xf32>
    %61 = vector.extract_strided_slice %12 {offsets = [16, 0], sizes = [16, 32], strides = [1, 1]} : vector<32x32xf32> to vector<16x32xf32>
    %cst_25 = arith.constant dense<0.000000e+00> : vector<8x32xf32>
    %62 = tpu.matmul %60, %61, %cst_25 {dimension_numbers = #tpu.dot_dimension_numbers<[1], [0], [0], [1], [0, 0, 1, 1], [], []>} : vector<8x16xf32>, vector<16x32xf32>, vector<8x32xf32> -> vector<8x32xf32>
    %63 = arith.addf %44, %62 : vector<8x32xf32>
    %c0_26 = arith.constant 0 : index
    %c0_27 = arith.constant 0 : index
    %64 = vector.load %arg14[%c0_26, %c0_27] : memref<32x32xf32, #tpu.memory_space<vmem>>, vector<8x32xf32>
    tpu.vector_store %arg14[%c0_26, %c0_27], %63 {strides = array<i32>} : memref<32x32xf32, #tpu.memory_space<vmem>>, vector<8x32xf32>,
    %c1 = arith.constant 1 : index
    %c0_28 = arith.constant 0 : index
    %c0_29 = arith.constant 0 : index
    %65 = vector.load %arg3[%c1, %c0_28, %c0_29] : memref<4x8x8xf32, #tpu.memory_space<vmem>>, vector<1x8x8xf32>
    %66 = vector.shape_cast %65 : vector<1x8x8xf32> to vector<8x8xf32>
    %cst_30 = arith.constant 0.000000e+00 : f32
    %67 = vector.broadcast %cst_30 : f32 to vector<8x8xf32>
    %68 = arith.cmpf oeq, %66, %67 : vector<8x8xf32>
    %cst_31 = arith.constant -1.000000e+30 : f32
    %cst_32 = arith.constant 0.000000e+00 : f32
    %69 = vector.broadcast %cst_31 : f32 to vector<8x8xf32>
    %70 = vector.broadcast %cst_32 : f32 to vector<8x8xf32>
    %71 = arith.select %68, %69, %70 : vector<8x8xi1>, vector<8x8xf32>
    %72 = vector.extract_strided_slice %18 {offsets = [8, 0], sizes = [8, 96], strides = [1, 1]} : vector<32x96xf32> to vector<8x96xf32>
    %73 = vector.extract_strided_slice %72 {offsets = [0, 0], sizes = [8, 16], strides = [1, 1]} : vector<8x96xf32> to vector<8x16xf32>
    %74 = vector.extract_strided_slice %72 {offsets = [0, 32], sizes = [8, 16], strides = [1, 1]} : vector<8x96xf32> to vector<8x16xf32>
    %75 = vector.extract_strided_slice %72 {offsets = [0, 64], sizes = [8, 16], strides = [1, 1]} : vector<8x96xf32> to vector<8x16xf32>
    %cst_33 = arith.constant dense<0.000000e+00> : vector<8x8xf32>
    %76 = tpu.matmul %73, %74, %cst_33 {dimension_numbers = #tpu.dot_dimension_numbers<[1], [1], [0], [0], [0, 0, 1, 0], [], []>} : vector<8x16xf32>, vector<8x16xf32>, vector<8x8xf32> -> vector<8x8xf32>
    %77 = arith.addf %76, %71 : vector<8x8xf32>
    %cst_34 = arith.constant dense<0xFF800000> : vector<8xf32>
    %78 = vector.multi_reduction <maximumf>, %77, %cst_34 [1] : vector<8x8xf32> to vector<8xf32>
    %79 = vector.shape_cast %78 : vector<8xf32> to vector<8x1xf32>
    %80 = vector.broadcast %79 : vector<8x1xf32> to vector<8x8xf32>
    %81 = arith.subf %77, %80 : vector<8x8xf32>
    %82 = math.exp %81 : vector<8x8xf32>
    %cst_35 = arith.constant dense<0.000000e+00> : vector<8xf32>
    %83 = vector.multi_reduction <add>, %82, %cst_35 [1] : vector<8x8xf32> to vector<8xf32>
    %84 = vector.shape_cast %83 : vector<8xf32> to vector<8x1xf32>
    %85 = tpu.reciprocal %84 {approx = true} : vector<8x1xf32> -> vector<8x1xf32>
    %86 = vector.broadcast %85 : vector<8x1xf32> to vector<8x8xf32>
    %87 = arith.mulf %82, %86 : vector<8x8xf32>
    %cst_36 = arith.constant dense<0.000000e+00> : vector<8x16xf32>
    %88 = tpu.matmul %87, %75, %cst_36 {dimension_numbers = #tpu.dot_dimension_numbers<[1], [0], [0], [1], [0, 0, 1, 1], [], []>} : vector<8x8xf32>, vector<8x16xf32>, vector<8x16xf32> -> vector<8x16xf32>
    %89 = vector.extract_strided_slice %12 {offsets = [0, 0], sizes = [16, 32], strides = [1, 1]} : vector<32x32xf32> to vector<16x32xf32>
    %cst_37 = arith.constant dense<0.000000e+00> : vector<8x32xf32>
    %90 = tpu.matmul %88, %89, %cst_37 {dimension_numbers = #tpu.dot_dimension_numbers<[1], [0], [0], [1], [0, 0, 1, 1], [], []>} : vector<8x16xf32>, vector<16x32xf32>, vector<8x32xf32> -> vector<8x32xf32>
    %91 = vector.extract_strided_slice %72 {offsets = [0, 16], sizes = [8, 16], strides = [1, 1]} : vector<8x96xf32> to vector<8x16xf32>
    %92 = vector.extract_strided_slice %72 {offsets = [0, 48], sizes = [8, 16], strides = [1, 1]} : vector<8x96xf32> to vector<8x16xf32>
    %93 = vector.extract_strided_slice %72 {offsets = [0, 80], sizes = [8, 16], strides = [1, 1]} : vector<8x96xf32> to vector<8x16xf32>
    %cst_38 = arith.constant dense<0.000000e+00> : vector<8x8xf32>
    %94 = tpu.matmul %91, %92, %cst_38 {dimension_numbers = #tpu.dot_dimension_numbers<[1], [1], [0], [0], [0, 0, 1, 0], [], []>} : vector<8x16xf32>, vector<8x16xf32>, vector<8x8xf32> -> vector<8x8xf32>
    %95 = arith.addf %94, %71 : vector<8x8xf32>
    %cst_39 = arith.constant dense<0xFF800000> : vector<8xf32>
    %96 = vector.multi_reduction <maximumf>, %95, %cst_39 [1] : vector<8x8xf32> to vector<8xf32>
    %97 = vector.shape_cast %96 : vector<8xf32> to vector<8x1xf32>
    %98 = vector.broadcast %97 : vector<8x1xf32> to vector<8x8xf32>
    %99 = arith.subf %95, %98 : vector<8x8xf32>
    %100 = math.exp %99 : vector<8x8xf32>
    %cst_40 = arith.constant dense<0.000000e+00> : vector<8xf32>
    %101 = vector.multi_reduction <add>, %100, %cst_40 [1] : vector<8x8xf32> to vector<8xf32>
    %102 = vector.shape_cast %101 : vector<8xf32> to vector<8x1xf32>
    %103 = tpu.reciprocal %102 {approx = true} : vector<8x1xf32> -> vector<8x1xf32>
    %104 = vector.broadcast %103 : vector<8x1xf32> to vector<8x8xf32>
    %105 = arith.mulf %100, %104 : vector<8x8xf32>
    %cst_41 = arith.constant dense<0.000000e+00> : vector<8x16xf32>
    %106 = tpu.matmul %105, %93, %cst_41 {dimension_numbers = #tpu.dot_dimension_numbers<[1], [0], [0], [1], [0, 0, 1, 1], [], []>} : vector<8x8xf32>, vector<8x16xf32>, vector<8x16xf32> -> vector<8x16xf32>
    %107 = vector.extract_strided_slice %12 {offsets = [16, 0], sizes = [16, 32], strides = [1, 1]} : vector<32x32xf32> to vector<16x32xf32>
    %cst_42 = arith.constant dense<0.000000e+00> : vector<8x32xf32>
    %108 = tpu.matmul %106, %107, %cst_42 {dimension_numbers = #tpu.dot_dimension_numbers<[1], [0], [0], [1], [0, 0, 1, 1], [], []>} : vector<8x16xf32>, vector<16x32xf32>, vector<8x32xf32> -> vector<8x32xf32>
    %109 = arith.addf %90, %108 : vector<8x32xf32>
    %c8 = arith.constant 8 : index
    %c0_43 = arith.constant 0 : index
    %110 = vector.load %arg14[%c8, %c0_43] : memref<32x32xf32, #tpu.memory_space<vmem>>, vector<8x32xf32>
    tpu.vector_store %arg14[%c8, %c0_43], %109 {strides = array<i32>} : memref<32x32xf32, #tpu.memory_space<vmem>>, vector<8x32xf32>,
    %c2 = arith.constant 2 : index
    %c0_44 = arith.constant 0 : index
    %c0_45 = arith.constant 0 : index
    %111 = vector.load %arg3[%c2, %c0_44, %c0_45] : memref<4x8x8xf32, #tpu.memory_space<vmem>>, vector<1x8x8xf32>
    %112 = vector.shape_cast %111 : vector<1x8x8xf32> to vector<8x8xf32>
    %cst_46 = arith.constant 0.000000e+00 : f32
    %113 = vector.broadcast %cst_46 : f32 to vector<8x8xf32>
    %114 = arith.cmpf oeq, %112, %113 : vector<8x8xf32>
    %cst_47 = arith.constant -1.000000e+30 : f32
    %cst_48 = arith.constant 0.000000e+00 : f32
    %115 = vector.broadcast %cst_47 : f32 to vector<8x8xf32>
    %116 = vector.broadcast %cst_48 : f32 to vector<8x8xf32>
    %117 = arith.select %114, %115, %116 : vector<8x8xi1>, vector<8x8xf32>
    %118 = vector.extract_strided_slice %18 {offsets = [16, 0], sizes = [8, 96], strides = [1, 1]} : vector<32x96xf32> to vector<8x96xf32>
    %119 = vector.extract_strided_slice %118 {offsets = [0, 0], sizes = [8, 16], strides = [1, 1]} : vector<8x96xf32> to vector<8x16xf32>
    %120 = vector.extract_strided_slice %118 {offsets = [0, 32], sizes = [8, 16], strides = [1, 1]} : vector<8x96xf32> to vector<8x16xf32>
    %121 = vector.extract_strided_slice %118 {offsets = [0, 64], sizes = [8, 16], strides = [1, 1]} : vector<8x96xf32> to vector<8x16xf32>
    %cst_49 = arith.constant dense<0.000000e+00> : vector<8x8xf32>
    %122 = tpu.matmul %119, %120, %cst_49 {dimension_numbers = #tpu.dot_dimension_numbers<[1], [1], [0], [0], [0, 0, 1, 0], [], []>} : vector<8x16xf32>, vector<8x16xf32>, vector<8x8xf32> -> vector<8x8xf32>
    %123 = arith.addf %122, %117 : vector<8x8xf32>
    %cst_50 = arith.constant dense<0xFF800000> : vector<8xf32>
    %124 = vector.multi_reduction <maximumf>, %123, %cst_50 [1] : vector<8x8xf32> to vector<8xf32>
    %125 = vector.shape_cast %124 : vector<8xf32> to vector<8x1xf32>
    %126 = vector.broadcast %125 : vector<8x1xf32> to vector<8x8xf32>
    %127 = arith.subf %123, %126 : vector<8x8xf32>
    %128 = math.exp %127 : vector<8x8xf32>
    %cst_51 = arith.constant dense<0.000000e+00> : vector<8xf32>
    %129 = vector.multi_reduction <add>, %128, %cst_51 [1] : vector<8x8xf32> to vector<8xf32>
    %130 = vector.shape_cast %129 : vector<8xf32> to vector<8x1xf32>
    %131 = tpu.reciprocal %130 {approx = true} : vector<8x1xf32> -> vector<8x1xf32>
    %132 = vector.broadcast %131 : vector<8x1xf32> to vector<8x8xf32>
    %133 = arith.mulf %128, %132 : vector<8x8xf32>
    %cst_52 = arith.constant dense<0.000000e+00> : vector<8x16xf32>
    %134 = tpu.matmul %133, %121, %cst_52 {dimension_numbers = #tpu.dot_dimension_numbers<[1], [0], [0], [1], [0, 0, 1, 1], [], []>} : vector<8x8xf32>, vector<8x16xf32>, vector<8x16xf32> -> vector<8x16xf32>
    %135 = vector.extract_strided_slice %12 {offsets = [0, 0], sizes = [16, 32], strides = [1, 1]} : vector<32x32xf32> to vector<16x32xf32>
    %cst_53 = arith.constant dense<0.000000e+00> : vector<8x32xf32>
    %136 = tpu.matmul %134, %135, %cst_53 {dimension_numbers = #tpu.dot_dimension_numbers<[1], [0], [0], [1], [0, 0, 1, 1], [], []>} : vector<8x16xf32>, vector<16x32xf32>, vector<8x32xf32> -> vector<8x32xf32>
    %137 = vector.extract_strided_slice %118 {offsets = [0, 16], sizes = [8, 16], strides = [1, 1]} : vector<8x96xf32> to vector<8x16xf32>
    %138 = vector.extract_strided_slice %118 {offsets = [0, 48], sizes = [8, 16], strides = [1, 1]} : vector<8x96xf32> to vector<8x16xf32>
    %139 = vector.extract_strided_slice %118 {offsets = [0, 80], sizes = [8, 16], strides = [1, 1]} : vector<8x96xf32> to vector<8x16xf32>
    %cst_54 = arith.constant dense<0.000000e+00> : vector<8x8xf32>
    %140 = tpu.matmul %137, %138, %cst_54 {dimension_numbers = #tpu.dot_dimension_numbers<[1], [1], [0], [0], [0, 0, 1, 0], [], []>} : vector<8x16xf32>, vector<8x16xf32>, vector<8x8xf32> -> vector<8x8xf32>
    %141 = arith.addf %140, %117 : vector<8x8xf32>
    %cst_55 = arith.constant dense<0xFF800000> : vector<8xf32>
    %142 = vector.multi_reduction <maximumf>, %141, %cst_55 [1] : vector<8x8xf32> to vector<8xf32>
    %143 = vector.shape_cast %142 : vector<8xf32> to vector<8x1xf32>
    %144 = vector.broadcast %143 : vector<8x1xf32> to vector<8x8xf32>
    %145 = arith.subf %141, %144 : vector<8x8xf32>
    %146 = math.exp %145 : vector<8x8xf32>
    %cst_56 = arith.constant dense<0.000000e+00> : vector<8xf32>
    %147 = vector.multi_reduction <add>, %146, %cst_56 [1] : vector<8x8xf32> to vector<8xf32>
    %148 = vector.shape_cast %147 : vector<8xf32> to vector<8x1xf32>
    %149 = tpu.reciprocal %148 {approx = true} : vector<8x1xf32> -> vector<8x1xf32>
    %150 = vector.broadcast %149 : vector<8x1xf32> to vector<8x8xf32>
    %151 = arith.mulf %146, %150 : vector<8x8xf32>
    %cst_57 = arith.constant dense<0.000000e+00> : vector<8x16xf32>
    %152 = tpu.matmul %151, %139, %cst_57 {dimension_numbers = #tpu.dot_dimension_numbers<[1], [0], [0], [1], [0, 0, 1, 1], [], []>} : vector<8x8xf32>, vector<8x16xf32>, vector<8x16xf32> -> vector<8x16xf32>
    %153 = vector.extract_strided_slice %12 {offsets = [16, 0], sizes = [16, 32], strides = [1, 1]} : vector<32x32xf32> to vector<16x32xf32>
    %cst_58 = arith.constant dense<0.000000e+00> : vector<8x32xf32>
    %154 = tpu.matmul %152, %153, %cst_58 {dimension_numbers = #tpu.dot_dimension_numbers<[1], [0], [0], [1], [0, 0, 1, 1], [], []>} : vector<8x16xf32>, vector<16x32xf32>, vector<8x32xf32> -> vector<8x32xf32>
    %155 = arith.addf %136, %154 : vector<8x32xf32>
    %c16 = arith.constant 16 : index
    %c0_59 = arith.constant 0 : index
    %156 = vector.load %arg14[%c16, %c0_59] : memref<32x32xf32, #tpu.memory_space<vmem>>, vector<8x32xf32>
    tpu.vector_store %arg14[%c16, %c0_59], %155 {strides = array<i32>} : memref<32x32xf32, #tpu.memory_space<vmem>>, vector<8x32xf32>,
    %c3 = arith.constant 3 : index
    %c0_60 = arith.constant 0 : index
    %c0_61 = arith.constant 0 : index
    %157 = vector.load %arg3[%c3, %c0_60, %c0_61] : memref<4x8x8xf32, #tpu.memory_space<vmem>>, vector<1x8x8xf32>
    %158 = vector.shape_cast %157 : vector<1x8x8xf32> to vector<8x8xf32>
    %cst_62 = arith.constant 0.000000e+00 : f32
    %159 = vector.broadcast %cst_62 : f32 to vector<8x8xf32>
    %160 = arith.cmpf oeq, %158, %159 : vector<8x8xf32>
    %cst_63 = arith.constant -1.000000e+30 : f32
    %cst_64 = arith.constant 0.000000e+00 : f32
    %161 = vector.broadcast %cst_63 : f32 to vector<8x8xf32>
    %162 = vector.broadcast %cst_64 : f32 to vector<8x8xf32>
    %163 = arith.select %160, %161, %162 : vector<8x8xi1>, vector<8x8xf32>
    %164 = vector.extract_strided_slice %18 {offsets = [24, 0], sizes = [8, 96], strides = [1, 1]} : vector<32x96xf32> to vector<8x96xf32>
    %165 = vector.extract_strided_slice %164 {offsets = [0, 0], sizes = [8, 16], strides = [1, 1]} : vector<8x96xf32> to vector<8x16xf32>
    %166 = vector.extract_strided_slice %164 {offsets = [0, 32], sizes = [8, 16], strides = [1, 1]} : vector<8x96xf32> to vector<8x16xf32>
    %167 = vector.extract_strided_slice %164 {offsets = [0, 64], sizes = [8, 16], strides = [1, 1]} : vector<8x96xf32> to vector<8x16xf32>
    %cst_65 = arith.constant dense<0.000000e+00> : vector<8x8xf32>
    %168 = tpu.matmul %165, %166, %cst_65 {dimension_numbers = #tpu.dot_dimension_numbers<[1], [1], [0], [0], [0, 0, 1, 0], [], []>} : vector<8x16xf32>, vector<8x16xf32>, vector<8x8xf32> -> vector<8x8xf32>
    %169 = arith.addf %168, %163 : vector<8x8xf32>
    %cst_66 = arith.constant dense<0xFF800000> : vector<8xf32>
    %170 = vector.multi_reduction <maximumf>, %169, %cst_66 [1] : vector<8x8xf32> to vector<8xf32>
    %171 = vector.shape_cast %170 : vector<8xf32> to vector<8x1xf32>
    %172 = vector.broadcast %171 : vector<8x1xf32> to vector<8x8xf32>
    %173 = arith.subf %169, %172 : vector<8x8xf32>
    %174 = math.exp %173 : vector<8x8xf32>
    %cst_67 = arith.constant dense<0.000000e+00> : vector<8xf32>
    %175 = vector.multi_reduction <add>, %174, %cst_67 [1] : vector<8x8xf32> to vector<8xf32>
    %176 = vector.shape_cast %175 : vector<8xf32> to vector<8x1xf32>
    %177 = tpu.reciprocal %176 {approx = true} : vector<8x1xf32> -> vector<8x1xf32>
    %178 = vector.broadcast %177 : vector<8x1xf32> to vector<8x8xf32>
    %179 = arith.mulf %174, %178 : vector<8x8xf32>
    %cst_68 = arith.constant dense<0.000000e+00> : vector<8x16xf32>
    %180 = tpu.matmul %179, %167, %cst_68 {dimension_numbers = #tpu.dot_dimension_numbers<[1], [0], [0], [1], [0, 0, 1, 1], [], []>} : vector<8x8xf32>, vector<8x16xf32>, vector<8x16xf32> -> vector<8x16xf32>
    %181 = vector.extract_strided_slice %12 {offsets = [0, 0], sizes = [16, 32], strides = [1, 1]} : vector<32x32xf32> to vector<16x32xf32>
    %cst_69 = arith.constant dense<0.000000e+00> : vector<8x32xf32>
    %182 = tpu.matmul %180, %181, %cst_69 {dimension_numbers = #tpu.dot_dimension_numbers<[1], [0], [0], [1], [0, 0, 1, 1], [], []>} : vector<8x16xf32>, vector<16x32xf32>, vector<8x32xf32> -> vector<8x32xf32>
    %183 = vector.extract_strided_slice %164 {offsets = [0, 16], sizes = [8, 16], strides = [1, 1]} : vector<8x96xf32> to vector<8x16xf32>
    %184 = vector.extract_strided_slice %164 {offsets = [0, 48], sizes = [8, 16], strides = [1, 1]} : vector<8x96xf32> to vector<8x16xf32>
    %185 = vector.extract_strided_slice %164 {offsets = [0, 80], sizes = [8, 16], strides = [1, 1]} : vector<8x96xf32> to vector<8x16xf32>
    %cst_70 = arith.constant dense<0.000000e+00> : vector<8x8xf32>
    %186 = tpu.matmul %183, %184, %cst_70 {dimension_numbers = #tpu.dot_dimension_numbers<[1], [1], [0], [0], [0, 0, 1, 0], [], []>} : vector<8x16xf32>, vector<8x16xf32>, vector<8x8xf32> -> vector<8x8xf32>
    %187 = arith.addf %186, %163 : vector<8x8xf32>
    %cst_71 = arith.constant dense<0xFF800000> : vector<8xf32>
    %188 = vector.multi_reduction <maximumf>, %187, %cst_71 [1] : vector<8x8xf32> to vector<8xf32>
    %189 = vector.shape_cast %188 : vector<8xf32> to vector<8x1xf32>
    %190 = vector.broadcast %189 : vector<8x1xf32> to vector<8x8xf32>
    %191 = arith.subf %187, %190 : vector<8x8xf32>
    %192 = math.exp %191 : vector<8x8xf32>
    %cst_72 = arith.constant dense<0.000000e+00> : vector<8xf32>
    %193 = vector.multi_reduction <add>, %192, %cst_72 [1] : vector<8x8xf32> to vector<8xf32>
    %194 = vector.shape_cast %193 : vector<8xf32> to vector<8x1xf32>
    %195 = tpu.reciprocal %194 {approx = true} : vector<8x1xf32> -> vector<8x1xf32>
    %196 = vector.broadcast %195 : vector<8x1xf32> to vector<8x8xf32>
    %197 = arith.mulf %192, %196 : vector<8x8xf32>
    %cst_73 = arith.constant dense<0.000000e+00> : vector<8x16xf32>
    %198 = tpu.matmul %197, %185, %cst_73 {dimension_numbers = #tpu.dot_dimension_numbers<[1], [0], [0], [1], [0, 0, 1, 1], [], []>} : vector<8x8xf32>, vector<8x16xf32>, vector<8x16xf32> -> vector<8x16xf32>
    %199 = vector.extract_strided_slice %12 {offsets = [16, 0], sizes = [16, 32], strides = [1, 1]} : vector<32x32xf32> to vector<16x32xf32>
    %cst_74 = arith.constant dense<0.000000e+00> : vector<8x32xf32>
    %200 = tpu.matmul %198, %199, %cst_74 {dimension_numbers = #tpu.dot_dimension_numbers<[1], [0], [0], [1], [0, 0, 1, 1], [], []>} : vector<8x16xf32>, vector<16x32xf32>, vector<8x32xf32> -> vector<8x32xf32>
    %201 = arith.addf %182, %200 : vector<8x32xf32>
    %c24 = arith.constant 24 : index
    %c0_75 = arith.constant 0 : index
    %202 = vector.load %arg14[%c24, %c0_75] : memref<32x32xf32, #tpu.memory_space<vmem>>, vector<8x32xf32>
    tpu.vector_store %arg14[%c24, %c0_75], %201 {strides = array<i32>} : memref<32x32xf32, #tpu.memory_space<vmem>>, vector<8x32xf32>,
    %c0_76 = arith.constant 0 : index
    %c0_77 = arith.constant 0 : index
    %203 = vector.load %arg14[%c0_76, %c0_77] : memref<32x32xf32, #tpu.memory_space<vmem>>, vector<32x32xf32>
    %204 = vector.extract_strided_slice %15 {offsets = [0, 0], sizes = [1, 32], strides = [1, 1]} : vector<8x32xf32> to vector<1x32xf32>
    %205 = vector.broadcast %204 : vector<1x32xf32> to vector<32x32xf32>
    %206 = arith.addf %203, %205 : vector<32x32xf32>
    %207 = arith.addf %3, %206 : vector<32x32xf32>
    %208 = vector.extract_strided_slice %15 {offsets = [3, 0], sizes = [1, 32], strides = [1, 1]} : vector<8x32xf32> to vector<1x32xf32>
    %209 = vector.extract_strided_slice %15 {offsets = [4, 0], sizes = [1, 32], strides = [1, 1]} : vector<8x32xf32> to vector<1x32xf32>
    %cst_78 = arith.constant dense<0.000000e+00> : vector<32xf32>
    %210 = vector.multi_reduction <add>, %207, %cst_78 [1] : vector<32x32xf32> to vector<32xf32>
    %211 = vector.shape_cast %210 : vector<32xf32> to vector<32x1xf32>
    %cst_79 = arith.constant 3.200000e+01 : f32
    %212 = vector.broadcast %cst_79 : f32 to vector<32x1xf32>
    %213 = arith.divf %211, %212 : vector<32x1xf32>
    %214 = vector.broadcast %213 : vector<32x1xf32> to vector<32x32xf32>
    %215 = arith.subf %207, %214 : vector<32x32xf32>
    %216 = arith.mulf %215, %215 : vector<32x32xf32>
    %cst_80 = arith.constant dense<0.000000e+00> : vector<32xf32>
    %217 = vector.multi_reduction <add>, %216, %cst_80 [1] : vector<32x32xf32> to vector<32xf32>
    %218 = vector.shape_cast %217 : vector<32xf32> to vector<32x1xf32>
    %cst_81 = arith.constant 3.200000e+01 : f32
    %219 = vector.broadcast %cst_81 : f32 to vector<32x1xf32>
    %220 = arith.divf %218, %219 : vector<32x1xf32>
    %cst_82 = arith.constant 9.99999974E-6 : f32
    %221 = vector.broadcast %cst_82 : f32 to vector<32x1xf32>
    %222 = arith.addf %220, %221 : vector<32x1xf32>
    %223 = math.rsqrt %222 : vector<32x1xf32>
    %224 = vector.broadcast %223 : vector<32x1xf32> to vector<32x32xf32>
    %225 = arith.mulf %215, %224 : vector<32x32xf32>
    %226 = vector.broadcast %208 : vector<1x32xf32> to vector<32x32xf32>
    %227 = arith.mulf %225, %226 : vector<32x32xf32>
    %228 = vector.broadcast %209 : vector<1x32xf32> to vector<32x32xf32>
    %229 = arith.addf %227, %228 : vector<32x32xf32>
    %230 = arith.index_cast %arg1 : i32 to index
    %c0_83 = arith.constant 0 : index
    %c0_84 = arith.constant 0 : index
    %231 = vector.load %arg10[%230, %c0_83, %c0_84] : memref<2x32x32xf32, #tpu.memory_space<vmem>>, vector<1x32x32xf32>
    %232 = vector.shape_cast %231 : vector<1x32x32xf32> to vector<32x32xf32>
    %cst_85 = arith.constant dense<0.000000e+00> : vector<32x32xf32>
    %233 = tpu.matmul %229, %232, %cst_85 {dimension_numbers = #tpu.dot_dimension_numbers<[1], [0], [0], [1], [0, 0, 1, 1], [], []>} : vector<32x32xf32>, vector<32x32xf32>, vector<32x32xf32> -> vector<32x32xf32>
    %234 = vector.extract_strided_slice %15 {offsets = [1, 0], sizes = [1, 32], strides = [1, 1]} : vector<8x32xf32> to vector<1x32xf32>
    %235 = vector.broadcast %234 : vector<1x32xf32> to vector<32x32xf32>
    %236 = arith.addf %233, %235 : vector<32x32xf32>
    %cst_86 = arith.constant 5.000000e-01 : f32
    %237 = vector.broadcast %cst_86 : f32 to vector<32x32xf32>
    %238 = arith.mulf %237, %236 : vector<32x32xf32>
    %cst_87 = arith.constant 0.707106769 : f32
    %239 = vector.broadcast %cst_87 : f32 to vector<32x32xf32>
    %240 = arith.mulf %236, %239 : vector<32x32xf32>
    %cst_88 = arith.constant 0.000000e+00 : f32
    %241 = vector.broadcast %cst_88 : f32 to vector<32x32xf32>
    %242 = arith.cmpf oge, %240, %241 : vector<32x32xf32>
    %cst_89 = arith.constant 1.000000e+00 : f32
    %cst_90 = arith.constant -1.000000e+00 : f32
    %243 = vector.broadcast %cst_89 : f32 to vector<32x32xf32>
    %244 = vector.broadcast %cst_90 : f32 to vector<32x32xf32>
    %245 = arith.select %242, %243, %244 : vector<32x32xi1>, vector<32x32xf32>
    %246 = math.absf %240 : vector<32x32xf32>
    %cst_91 = arith.constant 0.327591091 : f32
    %247 = vector.broadcast %cst_91 : f32 to vector<32x32xf32>
    %248 = arith.mulf %247, %246 : vector<32x32xf32>
    %cst_92 = arith.constant 1.000000e+00 : f32
    %249 = vector.broadcast %cst_92 : f32 to vector<32x32xf32>
    %250 = arith.addf %249, %248 : vector<32x32xf32>
    %251 = tpu.reciprocal %250 {approx = true} : vector<32x32xf32> -> vector<32x32xf32>
    %cst_93 = arith.constant 1.06140542 : f32
    %252 = vector.broadcast %cst_93 : f32 to vector<32x32xf32>
    %253 = arith.mulf %252, %251 : vector<32x32xf32>
    %cst_94 = arith.constant -1.45315206 : f32
    %254 = vector.broadcast %cst_94 : f32 to vector<32x32xf32>
    %255 = arith.addf %253, %254 : vector<32x32xf32>
    %256 = arith.mulf %255, %251 : vector<32x32xf32>
    %cst_95 = arith.constant 1.42141378 : f32
    %257 = vector.broadcast %cst_95 : f32 to vector<32x32xf32>
    %258 = arith.addf %256, %257 : vector<32x32xf32>
    %259 = arith.mulf %258, %251 : vector<32x32xf32>
    %cst_96 = arith.constant -0.284496725 : f32
    %260 = vector.broadcast %cst_96 : f32 to vector<32x32xf32>
    %261 = arith.addf %259, %260 : vector<32x32xf32>
    %262 = arith.mulf %261, %251 : vector<32x32xf32>
    %cst_97 = arith.constant 0.254829586 : f32
    %263 = vector.broadcast %cst_97 : f32 to vector<32x32xf32>
    %264 = arith.addf %262, %263 : vector<32x32xf32>
    %265 = arith.mulf %264, %251 : vector<32x32xf32>
    %cst_98 = arith.constant 0.000000e+00 : f32
    %266 = vector.broadcast %cst_98 : f32 to vector<32x32xf32>
    %267 = arith.subf %266, %246 : vector<32x32xf32>
    %268 = arith.mulf %267, %246 : vector<32x32xf32>
    %269 = math.exp %268 : vector<32x32xf32>
    %270 = arith.mulf %265, %269 : vector<32x32xf32>
    %cst_99 = arith.constant 1.000000e+00 : f32
    %271 = vector.broadcast %cst_99 : f32 to vector<32x32xf32>
    %272 = arith.subf %271, %270 : vector<32x32xf32>
    %273 = arith.mulf %245, %272 : vector<32x32xf32>
    %cst_100 = arith.constant 1.000000e+00 : f32
    %274 = vector.broadcast %cst_100 : f32 to vector<32x32xf32>
    %275 = arith.addf %274, %273 : vector<32x32xf32>
    %276 = arith.mulf %238, %275 : vector<32x32xf32>
    %277 = arith.index_cast %arg1 : i32 to index
    %c0_101 = arith.constant 0 : index
    %c0_102 = arith.constant 0 : index
    %278 = vector.load %arg11[%277, %c0_101, %c0_102] : memref<2x32x32xf32, #tpu.memory_space<vmem>>, vector<1x32x32xf32>
    %279 = vector.shape_cast %278 : vector<1x32x32xf32> to vector<32x32xf32>
    %cst_103 = arith.constant dense<0.000000e+00> : vector<32x32xf32>
    %280 = tpu.matmul %276, %279, %cst_103 {dimension_numbers = #tpu.dot_dimension_numbers<[1], [0], [0], [1], [0, 0, 1, 1], [], []>} : vector<32x32xf32>, vector<32x32xf32>, vector<32x32xf32> -> vector<32x32xf32>
    %281 = vector.extract_strided_slice %15 {offsets = [2, 0], sizes = [1, 32], strides = [1, 1]} : vector<8x32xf32> to vector<1x32xf32>
    %282 = vector.broadcast %281 : vector<1x32xf32> to vector<32x32xf32>
    %283 = arith.addf %280, %282 : vector<32x32xf32>
    %284 = arith.addf %229, %283 : vector<32x32xf32>
    %285 = vector.extract_strided_slice %15 {offsets = [5, 0], sizes = [1, 32], strides = [1, 1]} : vector<8x32xf32> to vector<1x32xf32>
    %286 = vector.extract_strided_slice %15 {offsets = [6, 0], sizes = [1, 32], strides = [1, 1]} : vector<8x32xf32> to vector<1x32xf32>
    %cst_104 = arith.constant dense<0.000000e+00> : vector<32xf32>
    %287 = vector.multi_reduction <add>, %284, %cst_104 [1] : vector<32x32xf32> to vector<32xf32>
    %288 = vector.shape_cast %287 : vector<32xf32> to vector<32x1xf32>
    %cst_105 = arith.constant 3.200000e+01 : f32
    %289 = vector.broadcast %cst_105 : f32 to vector<32x1xf32>
    %290 = arith.divf %288, %289 : vector<32x1xf32>
    %291 = vector.broadcast %290 : vector<32x1xf32> to vector<32x32xf32>
    %292 = arith.subf %284, %291 : vector<32x32xf32>
    %293 = arith.mulf %292, %292 : vector<32x32xf32>
    %cst_106 = arith.constant dense<0.000000e+00> : vector<32xf32>
    %294 = vector.multi_reduction <add>, %293, %cst_106 [1] : vector<32x32xf32> to vector<32xf32>
    %295 = vector.shape_cast %294 : vector<32xf32> to vector<32x1xf32>
    %cst_107 = arith.constant 3.200000e+01 : f32
    %296 = vector.broadcast %cst_107 : f32 to vector<32x1xf32>
    %297 = arith.divf %295, %296 : vector<32x1xf32>
    %cst_108 = arith.constant 9.99999974E-6 : f32
    %298 = vector.broadcast %cst_108 : f32 to vector<32x1xf32>
    %299 = arith.addf %297, %298 : vector<32x1xf32>
    %300 = math.rsqrt %299 : vector<32x1xf32>
    %301 = vector.broadcast %300 : vector<32x1xf32> to vector<32x32xf32>
    %302 = arith.mulf %292, %301 : vector<32x32xf32>
    %303 = vector.broadcast %285 : vector<1x32xf32> to vector<32x32xf32>
    %304 = arith.mulf %302, %303 : vector<32x32xf32>
    %305 = vector.broadcast %286 : vector<1x32xf32> to vector<32x32xf32>
    %306 = arith.addf %304, %305 : vector<32x32xf32>
    %c0_109 = arith.constant 0 : index
    %c0_110 = arith.constant 0 : index
    %307 = vector.load %arg13[%c0_109, %c0_110] : memref<32x32xf32, #tpu.memory_space<vmem>>, vector<32x32xf32>
    tpu.vector_store %arg13[%c0_109, %c0_110], %306 {strides = array<i32>} : memref<32x32xf32, #tpu.memory_space<vmem>>, vector<32x32xf32>,
    return
  }
  func.func @transform_0(%arg0: i32, %arg1: i32) -> (i32, i32) {
    %c0_i32 = arith.constant 0 : i32
    %c0_i32_0 = arith.constant 0 : i32
    return %arg0, %c0_i32 : i32, i32
  }
  func.func @transform_1(%arg0: i32, %arg1: i32) -> (i32, i32, i32) {
    %c0_i32 = arith.constant 0 : i32
    %c0_i32_0 = arith.constant 0 : i32
    %c0_i32_1 = arith.constant 0 : i32
    return %arg0, %c0_i32, %c0_i32_0 : i32, i32, i32
  }
  func.func @transform_2(%arg0: i32, %arg1: i32) -> (i32, i32) {
    %c0_i32 = arith.constant 0 : i32
    %c0_i32_0 = arith.constant 0 : i32
    %c0_i32_1 = arith.constant 0 : i32
    return %c0_i32, %c0_i32_0 : i32, i32
  }
  func.func @transform_3(%arg0: i32, %arg1: i32) -> (i32, i32) {
    %c0_i32 = arith.constant 0 : i32
    %c0_i32_0 = arith.constant 0 : i32
    %c0_i32_1 = arith.constant 0 : i32
    return %c0_i32, %c0_i32_0 : i32, i32
  }
  func.func @transform_4(%arg0: i32, %arg1: i32) -> (i32, i32) {
    %c0_i32 = arith.constant 0 : i32
    %c0_i32_0 = arith.constant 0 : i32
    %c0_i32_1 = arith.constant 0 : i32
    return %c0_i32, %c0_i32_0 : i32, i32
  }
  func.func @transform_5(%arg0: i32, %arg1: i32) -> (i32, i32, i32) {
    %c0_i32 = arith.constant 0 : i32
    %c0_i32_0 = arith.constant 0 : i32
    %c0_i32_1 = arith.constant 0 : i32
    %c0_i32_2 = arith.constant 0 : i32
    return %c0_i32, %c0_i32_0, %c0_i32_1 : i32, i32, i32
  }
  func.func @transform_6(%arg0: i32, %arg1: i32) -> (i32, i32, i32) {
    %c0_i32 = arith.constant 0 : i32
    %c0_i32_0 = arith.constant 0 : i32
    %c0_i32_1 = arith.constant 0 : i32
    %c0_i32_2 = arith.constant 0 : i32
    return %c0_i32, %c0_i32_0, %c0_i32_1 : i32, i32, i32
  }
  func.func @transform_7(%arg0: i32, %arg1: i32) -> (i32, i32, i32) {
    %c0_i32 = arith.constant 0 : i32
    %c0_i32_0 = arith.constant 0 : i32
    %c0_i32_1 = arith.constant 0 : i32
    %c0_i32_2 = arith.constant 0 : i32
    return %c0_i32, %c0_i32_0, %c0_i32_1 : i32, i32, i32
  }
  func.func @transform_8(%arg0: i32, %arg1: i32) -> (i32, i32, i32) {
    %c0_i32 = arith.constant 0 : i32
    %c0_i32_0 = arith.constant 0 : i32
    %c0_i32_1 = arith.constant 0 : i32
    %c0_i32_2 = arith.constant 0 : i32
    return %c0_i32, %c0_i32_0, %c0_i32_1 : i32, i32, i32
  }
  func.func @transform_9(%arg0: i32, %arg1: i32) -> (i32, i32, i32) {
    %c0_i32 = arith.constant 0 : i32
    %c0_i32_0 = arith.constant 0 : i32
    %c0_i32_1 = arith.constant 0 : i32
    %c0_i32_2 = arith.constant 0 : i32
    return %c0_i32, %c0_i32_0, %c0_i32_1 : i32, i32, i32
  }
  func.func @transform_10(%arg0: i32, %arg1: i32) -> (i32, i32, i32) {
    %c0_i32 = arith.constant 0 : i32
    %c0_i32_0 = arith.constant 0 : i32
    %c0_i32_1 = arith.constant 0 : i32
    %c0_i32_2 = arith.constant 0 : i32
    return %c0_i32, %c0_i32_0, %c0_i32_1 : i32, i32, i32
  }
  func.func @transform_11(%arg0: i32, %arg1: i32) -> (i32, i32) {
    %c0_i32 = arith.constant 0 : i32
    %c0_i32_0 = arith.constant 0 : i32
    return %arg0, %c0_i32 : i32, i32
  }
}

</mosaic_0001>

<llo_original>
// kernel: tpu_custom_call.1
$region0: #{tpu_custom_call.1}
  #allocation0 [shape = 'u32[]', space=smem, size = 0x4, offset = 0x4, fixed_abs, tag = 'smem constant byte address 0x4 - core index']
  #allocation1 [shape = 'u32[144,128]{1,0:T(1,128)}', space=vmem, size = 0x12000, scoped, tag = 'internal scratch']
  #allocation2 [shape = 'f32[32,32]{1,0:T(8,128)}', space=vmem, size = 0x4000, scoped, tag = 'scratch operand']
  %s0 = inlined_call_operand.hbm [shape: f32[32,32], index: 0, kind: input, shape index: {}]
  %s1 = inlined_call_operand.hbm [shape: f32[4,8,8], index: 1, kind: input, shape index: {}]
  %s2 = inlined_call_operand.vmem [shape: f32[2,32], index: 2, kind: input, shape index: {}]
  %s3 = inlined_call_operand.hbm [shape: f32[32,32], index: 3, kind: input, shape index: {}]
  %s4 = inlined_call_operand.hbm [shape: f32[3,32], index: 4, kind: input, shape index: {}]
  %s5 = inlined_call_operand.hbm [shape: f32[2,32,96], index: 5, kind: input, shape index: {}]
  %s6 = inlined_call_operand.hbm [shape: f32[2,1,96], index: 6, kind: input, shape index: {}]
  %s7 = inlined_call_operand.hbm [shape: f32[2,32,32], index: 7, kind: input, shape index: {}]
  %s8 = inlined_call_operand.hbm [shape: f32[2,32,32], index: 8, kind: input, shape index: {}]
  %s9 = inlined_call_operand.hbm [shape: f32[2,32,32], index: 9, kind: input, shape index: {}]
  %s10 = inlined_call_operand.vmem [shape: f32[2,8,32], index: 10, kind: input, shape index: {}]
  %s11 = inlined_call_operand.hbm [shape: f32[32,32], index: 11, kind: output, shape index: {}]
  %s12 = sld [smem:[#allocation0]]
  $region117: #{tpu_custom_call.1} parent=0
    _
  %s14 = ssub.s32 1, %s12
  %s15 = scalar_select 0, %s14, %s12
  $region1: #{tpu_custom_call.1} parent=0
    #allocation3 [shape = 'u8[16384]{0}', space=vmem, size = 0x4000, scoped, tag = 'input window, operand 0, single buffered']
    #allocation4 [shape = 's32[2]{0}', space=sflag, size = 0x8, scoped, tag = 'scoped memory for tpu_custom_call.1']
    #allocation5 [shape = 's32[2]{0}', space=sflag, size = 0x8, scoped, tag = 'scoped memory for tpu_custom_call.1']
    #allocation6 [shape = 'u8[16384]{0}', space=vmem, size = 0x4000, scoped, tag = 'input window, operand 1, single buffered']
    #allocation7 [shape = 's32[1]{0}', space=sflag, size = 0x4, scoped, tag = 'scoped memory for tpu_custom_call.1']
    #allocation8 [shape = 'u8[16384]{0}', space=vmem, size = 0x4000, scoped, tag = 'input window, operand 3, single buffered']
    #allocation9 [shape = 'u8[2048]{0}', space=vmem, size = 0x800, scoped, tag = 'input window, operand 4, single buffered']
    #allocation10 [shape = 's32[1]{0}', space=sflag, size = 0x4, scoped, tag = 'scoped memory for tpu_custom_call.1']
    #allocation11 [shape = 'u8[32768]{0}', space=vmem, size = 0x8000, scoped, tag = 'input window, operand 5, single buffered']
    #allocation12 [shape = 'u8[1024]{0}', space=vmem, size = 0x400, scoped, tag = 'input window, operand 6, single buffered']
    #allocation13 [shape = 's32[1]{0}', space=sflag, size = 0x4, scoped, tag = 'scoped memory for tpu_custom_call.1']
    #allocation14 [shape = 'u8[32768]{0}', space=vmem, size = 0x8000, scoped, tag = 'input window, operand 7, single buffered']
    #allocation15 [shape = 'u8[32768]{0}', space=vmem, size = 0x8000, scoped, tag = 'input window, operand 8, single buffered']
    #allocation16 [shape = 's32[1]{0}', space=sflag, size = 0x4, scoped, tag = 'scoped memory for tpu_custom_call.1']
    #allocation17 [shape = 'u8[32768]{0}', space=vmem, size = 0x8000, scoped, tag = 'input window, operand 9, single buffered']
    #allocation18 [shape = 'u8[16384]{0}', space=vmem, size = 0x4000, scoped, tag = 'output window, operand 0, single buffered']
    %16 = vsyncpa [#allocation4], 0
    %17 = vsyncpa [#allocation7], 0
    %18 = vsyncpa [#allocation10], 0
    %19 = vsyncpa [#allocation13], 0
    %20 = vsyncpa [#allocation16], 0
    %21 = vsyncpa [#allocation5], 0
    loop: start=0, step=1, limit=4
    $region2: #{tpu_custom_call.1} parent=1 // loop_pre_header
      _
    $region3: #{tpu_custom_call.1} parent=1 // loop_header
      %s23 = sphi 0, %s27
      %p24 = scmp.ge.s32.totalorder %s23, 4
      %s30 = sphi 0, %s42
      %s31 = sphi 0, %s38
      %s32 = sphi 0, %s30
      %s33 = sphi 0, %s31
      %s34 = sphi 0, %s32
      %s35 = sphi 0, %s33
      %s45 = sphi 0, %s47
      %s48 = sphi 0, %s45
      %s49 = sphi 0, %s48
      %s65 = sphi 0, %s49
      %s71 = sphi 0, %s73
      %s74 = sphi 0, %s71
      %s75 = sphi 0, %s74
      %s91 = sphi 0, %s75
      %s95 = sphi 0, %s95
      %s97 = sphi 0, %s95
      %s98 = sphi 0, %s97
      %s112 = sphi 0, %s98
      %s116 = sphi 0, %s116
      %s118 = sphi 0, %s116
      %s119 = sphi 0, %s118
      %s133 = sphi 0, %s119
      %s137 = sphi 0, %s137
      %s139 = sphi 0, %s137
      %s140 = sphi 0, %s139
      %s154 = sphi 0, %s140
      %s158 = sphi 0, %s158
      %s160 = sphi 0, %s158
      %s161 = sphi 0, %s160
      %s175 = sphi 0, %s161
      %s179 = sphi 0, %s179
      %s181 = sphi 0, %s179
      %s182 = sphi 0, %s181
      %s196 = sphi 0, %s182
      %s200 = sphi 0, %s200
      %s202 = sphi 0, %s200
      %s203 = sphi 0, %s202
      %s217 = sphi 0, %s203
      %s221 = sphi 0, %s221
      %s223 = sphi 0, %s221
      %s224 = sphi 0, %s223
      %s238 = sphi 0, %s224
      %s242 = sphi 0, %s242
      %s244 = sphi 0, %s242
      %s245 = sphi 0, %s244
      %s259 = sphi 0, %s245
      %s263 = sphi 0, %s263
      %s265 = sphi 0, %s263
      %s266 = sphi 0, %s265
      %s280 = sphi 0, %s266
      %s286 = sphi 0, %s288
      %s289 = sphi 0, %s286
      %s290 = sphi 0, %s289
      %s306 = sphi 0, %s290
    $region4: #{tpu_custom_call.1} parent=1 // loop_header_branch
      %26 = sbr.rel (%p24) target = $region8
    $region5: #{tpu_custom_call.1} parent=1 // loop_body
      %s28 = ssub.s32 %s23, 1
      %s29 = ssub.s32 %s23, 2
      %s36 = sadd.s32 1, %s31
      %p37 = scmp.ge.s32.totalorder %s36, 2
      %s38 = scalar_select %p37, 0, %s36
      %s39 = sadd.s32 1, %s30
      %s40 = scalar_select %p37, %s39, %s30
      %p41 = scmp.ge.s32.totalorder %s40, 1
      %s42 = scalar_select %p41, 0, %s40
      %s43 = ssub.s32 %s30, %s42
      %p44 = scmp.eq.s32.totalorder %s43, 0
      %s46 = sadd.s32 %s45, 1
      %s47 = scalar_select %p44, %s45, %s46
      %p50 = pneg %p44
      %p51 = scmp.eq.s32.totalorder %s23, 1
      %p52 = por %p50, %p51
      %p53 = scmp.ne.s32.totalorder %s45, %s48
      %p54 = scmp.eq.s32.totalorder %s23, 0
      %p55 = por %p53, %p54
      %p56 = scmp.ne.s32.totalorder %s45, %s48
      %p57 = scmp.eq.s32.totalorder %s28, 1
      %p58 = por %p56, %p57
      %p59 = scmp.ne.s32.totalorder %s48, %s49
      %p60 = scmp.eq.s32.totalorder %s28, 0
      %p61 = por %p59, %p60
      %p62 = scmp.ne.s32.totalorder %s48, %s49
      %p63 = scmp.eq.s32.totalorder %s29, 1
      %p64 = por %p62, %p63
      %p66 = scmp.ne.s32.totalorder %s49, %s65
      %p67 = scmp.eq.s32.totalorder %s29, 0
      %p68 = por %p66, %p67
      %s69 = ssub.s32 %s30, %s42
      %p70 = scmp.eq.s32.totalorder %s69, 0
      %s72 = sadd.s32 %s71, 1
      %s73 = scalar_select %p70, %s71, %s72
      %p76 = pneg %p70
      %p77 = scmp.eq.s32.totalorder %s23, 1
      %p78 = por %p76, %p77
      %p79 = scmp.ne.s32.totalorder %s71, %s74
      %p80 = scmp.eq.s32.totalorder %s23, 0
      %p81 = por %p79, %p80
      %p82 = scmp.ne.s32.totalorder %s71, %s74
      %p83 = scmp.eq.s32.totalorder %s28, 1
      %p84 = por %p82, %p83
      %p85 = scmp.ne.s32.totalorder %s74, %s75
      %p86 = scmp.eq.s32.totalorder %s28, 0
      %p87 = por %p85, %p86
      %p88 = scmp.ne.s32.totalorder %s74, %s75
      %p89 = scmp.eq.s32.totalorder %s29, 1
      %p90 = por %p88, %p89
      %p92 = scmp.ne.s32.totalorder %s75, %s91
      %p93 = scmp.eq.s32.totalorder %s29, 0
      %p94 = por %p92, %p93
      %s96 = sadd.s32 %s95, 1
      %p99 = scmp.eq.s32.totalorder %s23, 1
      %p100 = scmp.ne.s32.totalorder %s95, %s97
      %p101 = scmp.eq.s32.totalorder %s23, 0
      %p102 = por %p100, %p101
      %p103 = scmp.ne.s32.totalorder %s95, %s97
      %p104 = scmp.eq.s32.totalorder %s28, 1
      %p105 = por %p103, %p104
      %p106 = scmp.ne.s32.totalorder %s97, %s98
      %p107 = scmp.eq.s32.totalorder %s28, 0
      %p108 = por %p106, %p107
      %p109 = scmp.ne.s32.totalorder %s97, %s98
      %p110 = scmp.eq.s32.totalorder %s29, 1
      %p111 = por %p109, %p110
      %p113 = scmp.ne.s32.totalorder %s98, %s112
      %p114 = scmp.eq.s32.totalorder %s29, 0
      %p115 = por %p113, %p114
      %s117 = sadd.s32 %s116, 1
      %p120 = scmp.eq.s32.totalorder %s23, 1
      %p121 = scmp.ne.s32.totalorder %s116, %s118
      %p122 = scmp.eq.s32.totalorder %s23, 0
      %p123 = por %p121, %p122
      %p124 = scmp.ne.s32.totalorder %s116, %s118
      %p125 = scmp.eq.s32.totalorder %s28, 1
      %p126 = por %p124, %p125
      %p127 = scmp.ne.s32.totalorder %s118, %s119
      %p128 = scmp.eq.s32.totalorder %s28, 0
      %p129 = por %p127, %p128
      %p130 = scmp.ne.s32.totalorder %s118, %s119
      %p131 = scmp.eq.s32.totalorder %s29, 1
      %p132 = por %p130, %p131
      %p134 = scmp.ne.s32.totalorder %s119, %s133
      %p135 = scmp.eq.s32.totalorder %s29, 0
      %p136 = por %p134, %p135
      %s138 = sadd.s32 %s137, 1
      %p141 = scmp.eq.s32.totalorder %s23, 1
      %p142 = scmp.ne.s32.totalorder %s137, %s139
      %p143 = scmp.eq.s32.totalorder %s23, 0
      %p144 = por %p142, %p143
      %p145 = scmp.ne.s32.totalorder %s137, %s139
      %p146 = scmp.eq.s32.totalorder %s28, 1
      %p147 = por %p145, %p146
      %p148 = scmp.ne.s32.totalorder %s139, %s140
      %p149 = scmp.eq.s32.totalorder %s28, 0
      %p150 = por %p148, %p149
      %p151 = scmp.ne.s32.totalorder %s139, %s140
      %p152 = scmp.eq.s32.totalorder %s29, 1
      %p153 = por %p151, %p152
      %p155 = scmp.ne.s32.totalorder %s140, %s154
      %p156 = scmp.eq.s32.totalorder %s29, 0
      %p157 = por %p155, %p156
      %s159 = sadd.s32 %s158, 1
      %p162 = scmp.eq.s32.totalorder %s23, 1
      %p163 = scmp.ne.s32.totalorder %s158, %s160
      %p164 = scmp.eq.s32.totalorder %s23, 0
      %p165 = por %p163, %p164
      %p166 = scmp.ne.s32.totalorder %s158, %s160
      %p167 = scmp.eq.s32.totalorder %s28, 1
      %p168 = por %p166, %p167
      %p169 = scmp.ne.s32.totalorder %s160, %s161
      %p170 = scmp.eq.s32.totalorder %s28, 0
      %p171 = por %p169, %p170
      %p172 = scmp.ne.s32.totalorder %s160, %s161
      %p173 = scmp.eq.s32.totalorder %s29, 1
      %p174 = por %p172, %p173
      %p176 = scmp.ne.s32.totalorder %s161, %s175
      %p177 = scmp.eq.s32.totalorder %s29, 0
      %p178 = por %p176, %p177
      %s180 = sadd.s32 %s179, 1
      %p183 = scmp.eq.s32.totalorder %s23, 1
      %p184 = scmp.ne.s32.totalorder %s179, %s181
      %p185 = scmp.eq.s32.totalorder %s23, 0
      %p186 = por %p184, %p185
      %p187 = scmp.ne.s32.totalorder %s179, %s181
      %p188 = scmp.eq.s32.totalorder %s28, 1
      %p189 = por %p187, %p188
      %p190 = scmp.ne.s32.totalorder %s181, %s182
      %p191 = scmp.eq.s32.totalorder %s28, 0
      %p192 = por %p190, %p191
      %p193 = scmp.ne.s32.totalorder %s181, %s182
      %p194 = scmp.eq.s32.totalorder %s29, 1
      %p195 = por %p193, %p194
      %p197 = scmp.ne.s32.totalorder %s182, %s196
      %p198 = scmp.eq.s32.totalorder %s29, 0
      %p199 = por %p197, %p198
      %s201 = sadd.s32 %s200, 1
      %p204 = scmp.eq.s32.totalorder %s23, 1
      %p205 = scmp.ne.s32.totalorder %s200, %s202
      %p206 = scmp.eq.s32.totalorder %s23, 0
      %p207 = por %p205, %p206
      %p208 = scmp.ne.s32.totalorder %s200, %s202
      %p209 = scmp.eq.s32.totalorder %s28, 1
      %p210 = por %p208, %p209
      %p211 = scmp.ne.s32.totalorder %s202, %s203
      %p212 = scmp.eq.s32.totalorder %s28, 0
      %p213 = por %p211, %p212
      %p214 = scmp.ne.s32.totalorder %s202, %s203
      %p215 = scmp.eq.s32.totalorder %s29, 1
      %p216 = por %p214, %p215
      %p218 = scmp.ne.s32.totalorder %s203, %s217
      %p219 = scmp.eq.s32.totalorder %s29, 0
      %p220 = por %p218, %p219
      %s222 = sadd.s32 %s221, 1
      %p225 = scmp.eq.s32.totalorder %s23, 1
      %p226 = scmp.ne.s32.totalorder %s221, %s223
      %p227 = scmp.eq.s32.totalorder %s23, 0
      %p228 = por %p226, %p227
      %p229 = scmp.ne.s32.totalorder %s221, %s223
      %p230 = scmp.eq.s32.totalorder %s28, 1
      %p231 = por %p229, %p230
      %p232 = scmp.ne.s32.totalorder %s223, %s224
      %p233 = scmp.eq.s32.totalorder %s28, 0
      %p234 = por %p232, %p233
      %p235 = scmp.ne.s32.totalorder %s223, %s224
      %p236 = scmp.eq.s32.totalorder %s29, 1
      %p237 = por %p235, %p236
      %p239 = scmp.ne.s32.totalorder %s224, %s238
      %p240 = scmp.eq.s32.totalorder %s29, 0
      %p241 = por %p239, %p240
      %s243 = sadd.s32 %s242, 1
      %p246 = scmp.eq.s32.totalorder %s23, 1
      %p247 = scmp.ne.s32.totalorder %s242, %s244
      %p248 = scmp.eq.s32.totalorder %s23, 0
      %p249 = por %p247, %p248
      %p250 = scmp.ne.s32.totalorder %s242, %s244
      %p251 = scmp.eq.s32.totalorder %s28, 1
      %p252 = por %p250, %p251
      %p253 = scmp.ne.s32.totalorder %s244, %s245
      %p254 = scmp.eq.s32.totalorder %s28, 0
      %p255 = por %p253, %p254
      %p256 = scmp.ne.s32.totalorder %s244, %s245
      %p257 = scmp.eq.s32.totalorder %s29, 1
      %p258 = por %p256, %p257
      %p260 = scmp.ne.s32.totalorder %s245, %s259
      %p261 = scmp.eq.s32.totalorder %s29, 0
      %p262 = por %p260, %p261
      %s264 = sadd.s32 %s263, 1
      %p267 = scmp.eq.s32.totalorder %s23, 1
      %p268 = scmp.ne.s32.totalorder %s263, %s265
      %p269 = scmp.eq.s32.totalorder %s23, 0
      %p270 = por %p268, %p269
      %p271 = scmp.ne.s32.totalorder %s263, %s265
      %p272 = scmp.eq.s32.totalorder %s28, 1
      %p273 = por %p271, %p272
      %p274 = scmp.ne.s32.totalorder %s265, %s266
      %p275 = scmp.eq.s32.totalorder %s28, 0
      %p276 = por %p274, %p275
      %p277 = scmp.ne.s32.totalorder %s265, %s266
      %p278 = scmp.eq.s32.totalorder %s29, 1
      %p279 = por %p277, %p278
      %p281 = scmp.ne.s32.totalorder %s266, %s280
      %p282 = scmp.eq.s32.totalorder %s29, 0
      %p283 = por %p281, %p282
      %s284 = ssub.s32 %s30, %s42
      %p285 = scmp.eq.s32.totalorder %s284, 0
      %s287 = sadd.s32 %s286, 1
      %s288 = scalar_select %p285, %s286, %s287
      %p291 = pneg %p285
      %p292 = scmp.eq.s32.totalorder %s23, 1
      %p293 = por %p291, %p292
      %p294 = scmp.ne.s32.totalorder %s286, %s289
      %p295 = scmp.eq.s32.totalorder %s23, 0
      %p296 = por %p294, %p295
      %p297 = scmp.ne.s32.totalorder %s286, %s289
      %p298 = scmp.eq.s32.totalorder %s28, 1
      %p299 = por %p297, %p298
      %p300 = scmp.ne.s32.totalorder %s289, %s290
      %p301 = scmp.eq.s32.totalorder %s28, 0
      %p302 = por %p300, %p301
      %p303 = scmp.ne.s32.totalorder %s289, %s290
      %p304 = scmp.eq.s32.totalorder %s29, 1
      %p305 = por %p303, %p304
      %p307 = scmp.ne.s32.totalorder %s290, %s306
      %p308 = scmp.eq.s32.totalorder %s29, 0
      %p309 = por %p307, %p308
      %p310 = scmp.le.s32.totalorder 1, %s23
      %p311 = scmp.lt.s32.totalorder %s23, 3
      %p312 = pnand %p310, %p311
      %p313 = pneg %p312
      // Predicated region
      $region9: #{tpu_custom_call.1} parent=5 // pred_check
        _
      $region10: #{tpu_custom_call.1} parent=5 // pred_check_branch
        %315 = sbr.rel (%p312) target = $region12
      $region11: #{tpu_custom_call.1} parent=5 // pred_region
        %s316 = ssub.s32 %s23, 1
        // Predicated region
        $region13: #{tpu_custom_call.1} parent=11 // pred_check
          %p317 = pneg %p61
        $region14: #{tpu_custom_call.1} parent=11 // pred_check_branch
          %319 = sbr.rel (%p317) target = $region16
        $region15: #{tpu_custom_call.1} parent=11 // pred_region
          %s320 = smul.u32 4, %s32
          %s322 = ssub.s32 512, 512
          %323 = vsyncadd [#allocation4], %s322
          %s324 = smul.addr %s320, 128
          %s325 = scalar_lea.hbm %s0, %s324
          %s326 = sshll.u32 [#allocation3], 4
          %s327 = int_to_ptr.vmem [resolvable:$true] %s326
          %332 = dma.hbm_to_vmem [thread:$0]  %s325, 512, %s327, [#allocation4], 128, 128, 8
        $region16: #{tpu_custom_call.1} parent=11 // pred_fallthru
          _
        // Predicated region
        $region17: #{tpu_custom_call.1} parent=11 // pred_check
          %p333 = pneg %p87
        $region18: #{tpu_custom_call.1} parent=11 // pred_check_branch
          %335 = sbr.rel (%p333) target = $region20
        $region19: #{tpu_custom_call.1} parent=11 // pred_region
          %s336 = smul.u32 4, %s32
          %s338 = ssub.s32 512, 512
          %339 = vsyncadd [#allocation7], %s338
          %s340 = smul.addr %s336, 128
          %s341 = scalar_lea.hbm %s1, %s340
          %s342 = sshll.u32 [#allocation6], 4
          %s343 = int_to_ptr.vmem [resolvable:$true] %s342
          %348 = dma.hbm_to_vmem [thread:$0]  %s341, 512, %s343, [#allocation7], 128, 128, 8
        $region20: #{tpu_custom_call.1} parent=11 // pred_fallthru
          _
        // Predicated region
        $region21: #{tpu_custom_call.1} parent=11 // pred_check
          %p349 = pneg %p108
        $region22: #{tpu_custom_call.1} parent=11 // pred_check_branch
          %351 = sbr.rel (%p349) target = $region24
        $region23: #{tpu_custom_call.1} parent=11 // pred_region
          _
        $region24: #{tpu_custom_call.1} parent=11 // pred_fallthru
          _
        // Predicated region
        $region25: #{tpu_custom_call.1} parent=11 // pred_check
          %p352 = pneg %p129
        $region26: #{tpu_custom_call.1} parent=11 // pred_check_branch
          %354 = sbr.rel (%p352) target = $region28
        $region27: #{tpu_custom_call.1} parent=11 // pred_region
          %s356 = ssub.s32 512, 512
          %357 = vsyncadd [#allocation7], %s356
          %s358 = sshll.u32 [#allocation8], 4
          %s359 = int_to_ptr.vmem [resolvable:$true] %s358
          %364 = dma.hbm_to_vmem [thread:$0]  %s3, 512, %s359, [#allocation7], 128, 128, 8
        $region28: #{tpu_custom_call.1} parent=11 // pred_fallthru
          _
        // Predicated region
        $region29: #{tpu_custom_call.1} parent=11 // pred_check
          %p365 = pneg %p150
        $region30: #{tpu_custom_call.1} parent=11 // pred_check_branch
          %367 = sbr.rel (%p365) target = $region32
        $region31: #{tpu_custom_call.1} parent=11 // pred_region
          %s369 = ssub.s32 64, 64
          %370 = vsyncadd [#allocation10], %s369
          %s372 = sshll.u32 [#allocation9], 4
          %s373 = int_to_ptr.vmem [resolvable:$true] %s372
          %375 = dma.hbm_to_vmem [thread:$0]  %s4, 64, %s373, [#allocation10]
        $region32: #{tpu_custom_call.1} parent=11 // pred_fallthru
          _
        // Predicated region
        $region33: #{tpu_custom_call.1} parent=11 // pred_check
          %p376 = pneg %p171
        $region34: #{tpu_custom_call.1} parent=11 // pred_check_branch
          %378 = sbr.rel (%p376) target = $region36
        $region35: #{tpu_custom_call.1} parent=11 // pred_region
          %s380 = ssub.s32 1024, 1024
          %381 = vsyncadd [#allocation10], %s380
          %s382 = sshll.u32 [#allocation11], 4
          %s383 = int_to_ptr.vmem [resolvable:$true] %s382
          %388 = dma.hbm_to_vmem [thread:$0]  %s5, 1024, %s383, [#allocation10], 128, 128, 8
        $region36: #{tpu_custom_call.1} parent=11 // pred_fallthru
          _
        // Predicated region
        $region37: #{tpu_custom_call.1} parent=11 // pred_check
          %p389 = pneg %p192
        $region38: #{tpu_custom_call.1} parent=11 // pred_check_branch
          %391 = sbr.rel (%p389) target = $region40
        $region39: #{tpu_custom_call.1} parent=11 // pred_region
          %s393 = ssub.s32 32, 32
          %394 = vsyncadd [#allocation13], %s393
          %s395 = sshll.u32 [#allocation12], 4
          %s396 = int_to_ptr.vmem [resolvable:$true] %s395
          %401 = dma.hbm_to_vmem [thread:$0]  %s6, 32, %s396, [#allocation13], 16, 16, 1
        $region40: #{tpu_custom_call.1} parent=11 // pred_fallthru
          _
        // Predicated region
        $region41: #{tpu_custom_call.1} parent=11 // pred_check
          %p402 = pneg %p213
        $region42: #{tpu_custom_call.1} parent=11 // pred_check_branch
          %404 = sbr.rel (%p402) target = $region44
        $region43: #{tpu_custom_call.1} parent=11 // pred_region
          %s406 = ssub.s32 1024, 1024
          %407 = vsyncadd [#allocation13], %s406
          %s408 = sshll.u32 [#allocation14], 4
          %s409 = int_to_ptr.vmem [resolvable:$true] %s408
          %414 = dma.hbm_to_vmem [thread:$0]  %s7, 1024, %s409, [#allocation13], 128, 128, 8
        $region44: #{tpu_custom_call.1} parent=11 // pred_fallthru
          _
        // Predicated region
        $region45: #{tpu_custom_call.1} parent=11 // pred_check
          %p415 = pneg %p234
        $region46: #{tpu_custom_call.1} parent=11 // pred_check_branch
          %417 = sbr.rel (%p415) target = $region48
        $region47: #{tpu_custom_call.1} parent=11 // pred_region
          %s419 = ssub.s32 1024, 1024
          %420 = vsyncadd [#allocation16], %s419
          %s421 = sshll.u32 [#allocation15], 4
          %s422 = int_to_ptr.vmem [resolvable:$true] %s421
          %427 = dma.hbm_to_vmem [thread:$0]  %s8, 1024, %s422, [#allocation16], 128, 128, 8
        $region48: #{tpu_custom_call.1} parent=11 // pred_fallthru
          _
        // Predicated region
        $region49: #{tpu_custom_call.1} parent=11 // pred_check
          %p428 = pneg %p255
        $region50: #{tpu_custom_call.1} parent=11 // pred_check_branch
          %430 = sbr.rel (%p428) target = $region52
        $region51: #{tpu_custom_call.1} parent=11 // pred_region
          %s432 = ssub.s32 1024, 1024
          %433 = vsyncadd [#allocation16], %s432
          %s434 = sshll.u32 [#allocation17], 4
          %s435 = int_to_ptr.vmem [resolvable:$true] %s434
          %440 = dma.hbm_to_vmem [thread:$0]  %s9, 1024, %s435, [#allocation16], 128, 128, 8
        $region52: #{tpu_custom_call.1} parent=11 // pred_fallthru
          _
        // Predicated region
        $region53: #{tpu_custom_call.1} parent=11 // pred_check
          %p441 = pneg %p276
        $region54: #{tpu_custom_call.1} parent=11 // pred_check_branch
          %443 = sbr.rel (%p441) target = $region56
        $region55: #{tpu_custom_call.1} parent=11 // pred_region
          _
        $region56: #{tpu_custom_call.1} parent=11 // pred_fallthru
          _
      $region12: #{tpu_custom_call.1} parent=5 // pred_fallthru
        _
      %p444 = scmp.lt.s32.totalorder %s23, 2
      // Predicated region
      $region57: #{tpu_custom_call.1} parent=5 // pred_check
        %p445 = pneg %p444
      $region58: #{tpu_custom_call.1} parent=5 // pred_check_branch
        %447 = sbr.rel (%p445) target = $region60
      $region59: #{tpu_custom_call.1} parent=5 // pred_region
        _
      $region60: #{tpu_custom_call.1} parent=5 // pred_fallthru
        _
      %p448 = scmp.le.s32.totalorder 1, %s23
      %p449 = scmp.lt.s32.totalorder %s23, 3
      %p450 = pnand %p448, %p449
      %p451 = pneg %p450
      // Predicated region
      $region61: #{tpu_custom_call.1} parent=5 // pred_check
        _
      $region62: #{tpu_custom_call.1} parent=5 // pred_check_branch
        %453 = sbr.rel (%p450) target = $region64
      $region63: #{tpu_custom_call.1} parent=5 // pred_region
        %s454 = ssub.s32 %s23, 1
        // Predicated region
        $region65: #{tpu_custom_call.1} parent=63 // pred_check
          %p455 = pneg %p61
        $region66: #{tpu_custom_call.1} parent=63 // pred_check_branch
          %457 = sbr.rel (%p455) target = $region68
        $region67: #{tpu_custom_call.1} parent=63 // pred_region
          %458 = dma.done [#allocation4], 512
        $region68: #{tpu_custom_call.1} parent=63 // pred_fallthru
          _
        // Predicated region
        $region69: #{tpu_custom_call.1} parent=63 // pred_check
          %p459 = pneg %p87
        $region70: #{tpu_custom_call.1} parent=63 // pred_check_branch
          %461 = sbr.rel (%p459) target = $region72
        $region71: #{tpu_custom_call.1} parent=63 // pred_region
          %462 = dma.done [#allocation7], 512
        $region72: #{tpu_custom_call.1} parent=63 // pred_fallthru
          _
        // Predicated region
        $region73: #{tpu_custom_call.1} parent=63 // pred_check
          %p463 = pneg %p129
        $region74: #{tpu_custom_call.1} parent=63 // pred_check_branch
          %465 = sbr.rel (%p463) target = $region76
        $region75: #{tpu_custom_call.1} parent=63 // pred_region
          %466 = dma.done [#allocation7], 512
        $region76: #{tpu_custom_call.1} parent=63 // pred_fallthru
          _
        // Predicated region
        $region77: #{tpu_custom_call.1} parent=63 // pred_check
          %p467 = pneg %p150
        $region78: #{tpu_custom_call.1} parent=63 // pred_check_branch
          %469 = sbr.rel (%p467) target = $region80
        $region79: #{tpu_custom_call.1} parent=63 // pred_region
          %470 = dma.done [#allocation10], 64
        $region80: #{tpu_custom_call.1} parent=63 // pred_fallthru
          _
        // Predicated region
        $region81: #{tpu_custom_call.1} parent=63 // pred_check
          %p471 = pneg %p171
        $region82: #{tpu_custom_call.1} parent=63 // pred_check_branch
          %473 = sbr.rel (%p471) target = $region84
        $region83: #{tpu_custom_call.1} parent=63 // pred_region
          %474 = dma.done [#allocation10], 1024
        $region84: #{tpu_custom_call.1} parent=63 // pred_fallthru
          _
        // Predicated region
        $region85: #{tpu_custom_call.1} parent=63 // pred_check
          %p475 = pneg %p192
        $region86: #{tpu_custom_call.1} parent=63 // pred_check_branch
          %477 = sbr.rel (%p475) target = $region88
        $region87: #{tpu_custom_call.1} parent=63 // pred_region
          %478 = dma.done [#allocation13], 32
        $region88: #{tpu_custom_call.1} parent=63 // pred_fallthru
          _
        // Predicated region
        $region89: #{tpu_custom_call.1} parent=63 // pred_check
          %p479 = pneg %p213
        $region90: #{tpu_custom_call.1} parent=63 // pred_check_branch
          %481 = sbr.rel (%p479) target = $region92
        $region91: #{tpu_custom_call.1} parent=63 // pred_region
          %482 = dma.done [#allocation13], 1024
        $region92: #{tpu_custom_call.1} parent=63 // pred_fallthru
          _
        // Predicated region
        $region93: #{tpu_custom_call.1} parent=63 // pred_check
          %p483 = pneg %p234
        $region94: #{tpu_custom_call.1} parent=63 // pred_check_branch
          %485 = sbr.rel (%p483) target = $region96
        $region95: #{tpu_custom_call.1} parent=63 // pred_region
          %486 = dma.done [#allocation16], 1024
        $region96: #{tpu_custom_call.1} parent=63 // pred_fallthru
          _
        // Predicated region
        $region97: #{tpu_custom_call.1} parent=63 // pred_check
          %p487 = pneg %p255
        $region98: #{tpu_custom_call.1} parent=63 // pred_check_branch
          %489 = sbr.rel (%p487) target = $region100
        $region99: #{tpu_custom_call.1} parent=63 // pred_region
          %490 = dma.done [#allocation16], 1024
        $region100: #{tpu_custom_call.1} parent=63 // pred_fallthru
          _
        %p491 = pneg %p61
        %p492 = pneg %p58
        %p493 = pneg %p87
        %p494 = pneg %p84
        %p495 = pneg %p108
        %p496 = pneg %p105
        %p497 = pneg %p129
        %p498 = pneg %p126
        %p499 = pneg %p150
        %p500 = pneg %p147
        %p501 = pneg %p171
        %p502 = pneg %p168
        %p503 = pneg %p192
        %p504 = pneg %p189
        %p505 = pneg %p213
        %p506 = pneg %p210
        %p507 = pneg %p234
        %p508 = pneg %p231
        %p509 = pneg %p255
        %p510 = pneg %p252
        %p511 = pneg %p276
        %p512 = pneg %p273
        %p513 = pneg %p302
        %p514 = pneg %p299
        %s515 = smul.u32 4, %s32
        %s516 = smul.u32 4, %s32
        %s517 = smul.u32 4, %s32
        %p518 = scmp.eq.s32.totalorder %s33, 0
        // Predicated region
        $region101: #{tpu_custom_call.1} parent=63 // pred_check
          %p519 = pneg %p518
        $region102: #{tpu_custom_call.1} parent=63 // pred_check_branch
          %521 = sbr.rel (%p519) target = $region104
        $region103: #{tpu_custom_call.1} parent=63 // pred_region
          %v522 = vld [vmem:[#allocation3] sm:$0xff]
          %v523 = vld [vmem:[#allocation3 + $0x8] sm:$0xff]
          %v524 = vld [vmem:[#allocation3 + $0x10] sm:$0xff]
          %v525 = vld [vmem:[#allocation3 + $0x18] sm:$0xff]
          %v526 = vld [vmem:[%s2] sm:$0x1]
          %v527 = vld [vmem:[%s2 + $0x1] sm:$0x1]
          %vm528 = vcmask 261120
          %v529 = vsel %vm528, %v522, 0.0
          %530 = vadd.xlane.f32.xlu0 %v529
          %v531 = vpop.xlane.xlu0 %530
          %v532 = vsel %vm528, %v523, 0.0
          %533 = vadd.xlane.f32.xlu0 %v532
          %v534 = vpop.xlane.xlu0 %533
          %v535 = vsel %vm528, %v524, 0.0
          %536 = vadd.xlane.f32.xlu0 %v535
          %v537 = vpop.xlane.xlu0 %536
          %v538 = vsel %vm528, %v525, 0.0
          %539 = vadd.xlane.f32.xlu0 %v538
          %v540 = vpop.xlane.xlu0 %539
          %v541 = vrcp.pop 32.0
          %v542 = vmul.f32 %v531, %v541
          %v543 = vmul.f32 %v534, %v541
          %v544 = vmul.f32 %v537, %v541
          %v545 = vmul.f32 %v540, %v541
          %v546 = vsub.f32 %v522, %v542
          %v547 = vsub.f32 %v523, %v543
          %v548 = vsub.f32 %v524, %v544
          %v549 = vsub.f32 %v525, %v545
          %v550 = vmul.f32 %v546, %v546
          %v551 = vmul.f32 %v547, %v547
          %v552 = vmul.f32 %v548, %v548
          %v553 = vmul.f32 %v549, %v549
          %v554 = vsel %vm528, %v550, 0.0
          %555 = vadd.xlane.f32.xlu0 %v554
          %v556 = vpop.xlane.xlu0 %555
          %v557 = vsel %vm528, %v551, 0.0
          %558 = vadd.xlane.f32.xlu0 %v557
          %v559 = vpop.xlane.xlu0 %558
          %v560 = vsel %vm528, %v552, 0.0
          %561 = vadd.xlane.f32.xlu0 %v560
          %v562 = vpop.xlane.xlu0 %561
          %v563 = vsel %vm528, %v553, 0.0
          %564 = vadd.xlane.f32.xlu0 %v563
          %v565 = vpop.xlane.xlu0 %564
          %v566 = vmul.f32 %v556, %v541
          %v567 = vmul.f32 %v559, %v541
          %v568 = vmul.f32 %v562, %v541
          %v569 = vmul.f32 %v565, %v541
          %v570 = vadd.f32 %v566, 1e-05
          %v571 = vadd.f32 %v567, 1e-05
          %v572 = vadd.f32 %v568, 1e-05
          %v573 = vadd.f32 %v569, 1e-05
          %v574 = vrsqrt.pop %v570
          %v575 = vrsqrt.pop %v571
          %v576 = vrsqrt.pop %v572
          %v577 = vrsqrt.pop %v573
          %v578 = vmul.f32 %v546, %v574
          %v579 = vmul.f32 %v547, %v575
          %v580 = vmul.f32 %v548, %v576
          %v581 = vmul.f32 %v549, %v577
          %v582 = vlaneseq
          %v583 = vshrl.u32 %v582, 7
          %v584 = vsub.s32 0, %v583
          %v585 = vrot.slane %v526, %v584
          %v586 = vmul.f32 %v578, %v585
          %v587 = vmul.f32 %v579, %v585
          %v588 = vmul.f32 %v580, %v585
          %v589 = vmul.f32 %v581, %v585
          %v590 = vlaneseq
          %v591 = vshrl.u32 %v590, 7
          %v592 = vsub.s32 0, %v591
          %v593 = vrot.slane %v527, %v592
          %v594 = vadd.f32 %v586, %v593
          %v595 = vadd.f32 %v587, %v593
          %v596 = vadd.f32 %v588, %v593
          %v597 = vadd.f32 %v589, %v593
          %v598 = vld [vmem:[#allocation8] sm:$0xff]
          %v599 = vld [vmem:[#allocation8 + $0x8] sm:$0xff]
          %v600 = vld [vmem:[#allocation8 + $0x10] sm:$0xff]
          %v601 = vld [vmem:[#allocation8 + $0x18] sm:$0xff]
          %v602 = vld [vmem:[#allocation9] sm:$0x1]
          %v603 = vlaneseq
          %v604 = vshrl.u32 %v603, 7
          %v605 = vsub.s32 0, %v604
          %v606 = vrot.slane %v602, %v605
          %v608 = vsel %vm528, %v594, 0
          %v611 = vsel %vm528, %v595, 0
          %v614 = vsel %vm528, %v596, 0
          %v617 = vsel %vm528, %v597, 0
          %619 = vmatprep.subr.mxu0 0.0
          %620 = vmatpush1.msra.mxu0 0.0
          %621 = vmatprep.subr.mxu0 0.0
          %622 = vmatpush1.msra.mxu0 0.0
          %623 = vmatprep.subr.mxu0 0.0
          %624 = vmatpush1.msra.mxu0 0.0
          %625 = vmatprep.subr.mxu0 0.0
          %626 = vmatpush1.msra.mxu0 0.0
          %627 = vmatprep.subr.mxu0 0.0
          %628 = vmatpush1.msra.mxu0 0.0
          %629 = vmatprep.subr.mxu0 0.0
          %630 = vmatpush1.msra.mxu0 0.0
          %631 = vmatprep.subr.mxu0 0.0
          %632 = vmatpush1.msra.mxu0 0.0
          %633 = vmatprep.subr.mxu0 0.0
          %634 = vmatpush1.msra.mxu0 0.0
          %635 = vmatprep.subr.mxu0 0.0
          %636 = vmatpush1.msra.mxu0 0.0
          %637 = vmatprep.subr.mxu0 0.0
          %638 = vmatpush1.msra.mxu0 0.0
          %639 = vmatprep.subr.mxu0 0.0
          %640 = vmatpush1.msra.mxu0 0.0
          %641 = vmatprep.subr.mxu0 0.0
          %642 = vmatpush1.msra.mxu0 0.0
          %643 = vmatprep.subr.mxu0 0.0
          %644 = vmatpush1.msra.mxu0 %v601
          %645 = vmatprep.subr.mxu0 0.0
          %646 = vmatpush1.msra.mxu0 %v600
          %647 = vmatprep.subr.mxu0 0.0
          %648 = vmatpush1.msra.mxu0 %v599
          %649 = vmatprep.subr.mxu0 0.0
          %650 = vmatpush1.msra.mxu0 %v598
          %651 = vmatprep.subr.mxu0 0.0
          %652 = vmatpush2.msra.mxu0 0.0
          %653 = vmatprep.subr.mxu0 0.0
          %654 = vmatpush2.msra.mxu0 0.0
          %655 = vmatprep.subr.mxu0 0.0
          %656 = vmatpush2.msra.mxu0 0.0
          %657 = vmatprep.subr.mxu0 0.0
          %658 = vmatpush2.msra.mxu0 0.0
          %659 = vmatprep.subr.mxu0 0.0
          %660 = vmatpush2.msra.mxu0 0.0
          %661 = vmatprep.subr.mxu0 0.0
          %662 = vmatpush2.msra.mxu0 0.0
          %663 = vmatprep.subr.mxu0 0.0
          %664 = vmatpush2.msra.mxu0 0.0
          %665 = vmatprep.subr.mxu0 0.0
          %666 = vmatpush2.msra.mxu0 0.0
          %667 = vmatprep.subr.mxu0 0.0
          %668 = vmatpush2.msra.mxu0 0.0
          %669 = vmatprep.subr.mxu0 0.0
          %670 = vmatpush2.msra.mxu0 0.0
          %671 = vmatprep.subr.mxu0 0.0
          %672 = vmatpush2.msra.mxu0 0.0
          %673 = vmatprep.subr.mxu0 0.0
          %674 = vmatpush2.msra.mxu0 0.0
          %675 = vmatprep.subr.mxu0 0.0
          %676 = vmatpush2.msra.mxu0 0.0
          %677 = vmatprep.subr.mxu0 0.0
          %678 = vmatpush2.msra.mxu0 0.0
          %679 = vmatprep.subr.mxu0 0.0
          %680 = vmatpush2.msra.mxu0 0.0
          %681 = vmatprep.subr.mxu0 0.0
          %682 = vmatpush2.msra.mxu0 0.0
          %683 = vmatprep.mubr.f32.mxu0 0.0
          %684 = vmatmul.mubr.f32.gmra.mxu0 %v608
          %v685 = vpop.f32.mrf.mxu0
          %v686 = vadd.f32 %v606, %v685
          %v687 = vpop.f32.mrf.mxu0
          %688 = vmatprep.mubr.f32.mxu0 0.0
          %689 = vmatmul.mubr.f32.gmra.mxu0 %v611
          %v690 = vpop.f32.mrf.mxu0
          %v691 = vadd.f32 %v606, %v690
          %v692 = vpop.f32.mrf.mxu0
          %693 = vmatprep.mubr.f32.mxu0 0.0
          %694 = vmatmul.mubr.f32.gmra.mxu0 %v614
          %v695 = vpop.f32.mrf.mxu0
          %v696 = vadd.f32 %v606, %v695
          %v697 = vpop.f32.mrf.mxu0
          %698 = vmatprep.mubr.f32.mxu0 0.0
          %699 = vmatmul.mubr.f32.gmra.mxu0 %v617
          %v700 = vpop.f32.mrf.mxu0
          %v701 = vadd.f32 %v606, %v700
          %v702 = vpop.f32.mrf.mxu0
          %703 = vdwg.mxu0
          %v704 = vmul.f32 %v686, 0.5
          %v705 = vmul.f32 %v691, 0.5
          %v706 = vmul.f32 %v696, 0.5
          %v707 = vmul.f32 %v701, 0.5
          %v708 = vmul.f32 %v686, 0.70710677
          %v709 = vmul.f32 %v691, 0.70710677
          %v710 = vmul.f32 %v696, 0.70710677
          %v711 = vmul.f32 %v701, 0.70710677
          %vm712 = vcmp.ge.f32.partialorder %v708, 0.0
          %vm713 = vcmp.ge.f32.partialorder %v709, 0.0
          %vm714 = vcmp.ge.f32.partialorder %v710, 0.0
          %vm715 = vcmp.ge.f32.partialorder %v711, 0.0
          %v716 = vsel %vm712, 1.0, -1.0
          %v717 = vsel %vm713, 1.0, -1.0
          %v718 = vsel %vm714, 1.0, -1.0
          %v719 = vsel %vm715, 1.0, -1.0
          %v720 = vand.u32 2147483647, %v708
          %v721 = vand.u32 2147483647, %v709
          %v722 = vand.u32 2147483647, %v710
          %v723 = vand.u32 2147483647, %v711
          %v724 = vmul.f32 %v720, 0.3275911
          %v725 = vmul.f32 %v721, 0.3275911
          %v726 = vmul.f32 %v722, 0.3275911
          %v727 = vmul.f32 %v723, 0.3275911
          %v728 = vadd.f32 %v724, 1.0
          %v729 = vadd.f32 %v725, 1.0
          %v730 = vadd.f32 %v726, 1.0
          %v731 = vadd.f32 %v727, 1.0
          %v732 = vrcp.pop %v728
          %v733 = vrcp.pop %v729
          %v734 = vrcp.pop %v730
          %v735 = vrcp.pop %v731
          %v736 = vmul.f32 %v732, 1.0614054
          %v737 = vmul.f32 %v733, 1.0614054
          %v738 = vmul.f32 %v734, 1.0614054
          %v739 = vmul.f32 %v735, 1.0614054
          %v740 = vadd.f32 %v736, -1.4531521
          %v741 = vadd.f32 %v737, -1.4531521
          %v742 = vadd.f32 %v738, -1.4531521
          %v743 = vadd.f32 %v739, -1.4531521
          %v744 = vmul.f32 %v740, %v732
          %v745 = vmul.f32 %v741, %v733
          %v746 = vmul.f32 %v742, %v734
          %v747 = vmul.f32 %v743, %v735
          %v748 = vadd.f32 %v744, 1.4214138
          %v749 = vadd.f32 %v745, 1.4214138
          %v750 = vadd.f32 %v746, 1.4214138
          %v751 = vadd.f32 %v747, 1.4214138
          %v752 = vmul.f32 %v748, %v732
          %v753 = vmul.f32 %v749, %v733
          %v754 = vmul.f32 %v750, %v734
          %v755 = vmul.f32 %v751, %v735
          %v756 = vadd.f32 %v752, -0.28449672
          %v757 = vadd.f32 %v753, -0.28449672
          %v758 = vadd.f32 %v754, -0.28449672
          %v759 = vadd.f32 %v755, -0.28449672
          %v760 = vmul.f32 %v756, %v732
          %v761 = vmul.f32 %v757, %v733
          %v762 = vmul.f32 %v758, %v734
          %v763 = vmul.f32 %v759, %v735
          %v764 = vadd.f32 %v760, 0.2548296
          %v765 = vadd.f32 %v761, 0.2548296
          %v766 = vadd.f32 %v762, 0.2548296
          %v767 = vadd.f32 %v763, 0.2548296
          %v768 = vmul.f32 %v764, %v732
          %v769 = vmul.f32 %v765, %v733
          %v770 = vmul.f32 %v766, %v734
          %v771 = vmul.f32 %v767, %v735
          %v772 = vsub.f32 0.0, %v720
          %v773 = vsub.f32 0.0, %v721
          %v774 = vsub.f32 0.0, %v722
          %v775 = vsub.f32 0.0, %v723
          %v776 = vmul.f32 %v772, %v720
          %v777 = vmul.f32 %v773, %v721
          %v778 = vmul.f32 %v774, %v722
          %v779 = vmul.f32 %v775, %v723
          %v780 = vmul.f32 %v776, 1.442695
          %v781 = vpow.pop %v780
          %v782 = vmul.f32 %v777, 1.442695
          %v783 = vpow.pop %v782
          %v784 = vmul.f32 %v778, 1.442695
          %v785 = vpow.pop %v784
          %v786 = vmul.f32 %v779, 1.442695
          %v787 = vpow.pop %v786
          %v788 = vmul.f32 %v768, %v781
          %v789 = vmul.f32 %v769, %v783
          %v790 = vmul.f32 %v770, %v785
          %v791 = vmul.f32 %v771, %v787
          %v792 = vsub.f32 1.0, %v788
          %v793 = vsub.f32 1.0, %v789
          %v794 = vsub.f32 1.0, %v790
          %v795 = vsub.f32 1.0, %v791
          %v796 = vmul.f32 %v716, %v792
          %v797 = vmul.f32 %v717, %v793
          %v798 = vmul.f32 %v718, %v794
          %v799 = vmul.f32 %v719, %v795
          %v800 = vadd.f32 %v796, 1.0
          %v801 = vadd.f32 %v797, 1.0
          %v802 = vadd.f32 %v798, 1.0
          %v803 = vadd.f32 %v799, 1.0
          %v804 = vmul.f32 %v704, %v800
          %v805 = vmul.f32 %v705, %v801
          %v806 = vmul.f32 %v706, %v802
          %v807 = vmul.f32 %v707, %v803
          %v808 = vld [vmem:[#allocation9 + $0x1] sm:$0x1]
          %v809 = vld [vmem:[#allocation9 + $0x2] sm:$0x1]
          %v810 = vsel %vm528, %v804, 0.0
          %811 = vadd.xlane.f32.xlu0 %v810
          %v812 = vpop.xlane.xlu0 %811
          %v813 = vsel %vm528, %v805, 0.0
          %814 = vadd.xlane.f32.xlu0 %v813
          %v815 = vpop.xlane.xlu0 %814
          %v816 = vsel %vm528, %v806, 0.0
          %817 = vadd.xlane.f32.xlu0 %v816
          %v818 = vpop.xlane.xlu0 %817
          %v819 = vsel %vm528, %v807, 0.0
          %820 = vadd.xlane.f32.xlu0 %v819
          %v821 = vpop.xlane.xlu0 %820
          %v822 = vmul.f32 %v812, %v541
          %v823 = vmul.f32 %v815, %v541
          %v824 = vmul.f32 %v818, %v541
          %v825 = vmul.f32 %v821, %v541
          %v826 = vsub.f32 %v804, %v822
          %v827 = vsub.f32 %v805, %v823
          %v828 = vsub.f32 %v806, %v824
          %v829 = vsub.f32 %v807, %v825
          %v830 = vmul.f32 %v826, %v826
          %v831 = vmul.f32 %v827, %v827
          %v832 = vmul.f32 %v828, %v828
          %v833 = vmul.f32 %v829, %v829
          %v834 = vsel %vm528, %v830, 0.0
          %835 = vadd.xlane.f32.xlu0 %v834
          %v836 = vpop.xlane.xlu0 %835
          %v837 = vsel %vm528, %v831, 0.0
          %838 = vadd.xlane.f32.xlu0 %v837
          %v839 = vpop.xlane.xlu0 %838
          %v840 = vsel %vm528, %v832, 0.0
          %841 = vadd.xlane.f32.xlu0 %v840
          %v842 = vpop.xlane.xlu0 %841
          %v843 = vsel %vm528, %v833, 0.0
          %844 = vadd.xlane.f32.xlu0 %v843
          %v845 = vpop.xlane.xlu0 %844
          %v846 = vmul.f32 %v836, %v541
          %v847 = vmul.f32 %v839, %v541
          %v848 = vmul.f32 %v842, %v541
          %v849 = vmul.f32 %v845, %v541
          %v850 = vadd.f32 %v846, 1e-05
          %v851 = vadd.f32 %v847, 1e-05
          %v852 = vadd.f32 %v848, 1e-05
          %v853 = vadd.f32 %v849, 1e-05
          %v854 = vrsqrt.pop %v850
          %v855 = vrsqrt.pop %v851
          %v856 = vrsqrt.pop %v852
          %v857 = vrsqrt.pop %v853
          %v858 = vmul.f32 %v826, %v854
          %v859 = vmul.f32 %v827, %v855
          %v860 = vmul.f32 %v828, %v856
          %v861 = vmul.f32 %v829, %v857
          %v862 = vlaneseq
          %v863 = vshrl.u32 %v862, 7
          %v864 = vsub.s32 0, %v863
          %v865 = vrot.slane %v808, %v864
          %v866 = vmul.f32 %v858, %v865
          %v867 = vmul.f32 %v859, %v865
          %v868 = vmul.f32 %v860, %v865
          %v869 = vmul.f32 %v861, %v865
          %v870 = vlaneseq
          %v871 = vshrl.u32 %v870, 7
          %v872 = vsub.s32 0, %v871
          %v873 = vrot.slane %v809, %v872
          %v874 = vadd.f32 %v866, %v873
          %v875 = vadd.f32 %v867, %v873
          %v876 = vadd.f32 %v868, %v873
          %v877 = vadd.f32 %v869, %v873
          %878 = vst.msk [vmem:[#allocation18] sm:$0xff] %vm528, %v874
          %879 = vst.msk [vmem:[#allocation18 + $0x8] sm:$0xff] %vm528, %v875
          %880 = vst.msk [vmem:[#allocation18 + $0x10] sm:$0xff] %vm528, %v876
          %881 = vst.msk [vmem:[#allocation18 + $0x18] sm:$0xff] %vm528, %v877
        $region104: #{tpu_custom_call.1} parent=63 // pred_fallthru
          _
        %v882 = vld [vmem:[#allocation18] sm:$0xff]
        %v883 = vld [vmem:[#allocation18 + $0x8] sm:$0xff]
        %v884 = vld [vmem:[#allocation18 + $0x10] sm:$0xff]
        %v885 = vld [vmem:[#allocation18 + $0x18] sm:$0xff]
        %s886 = smul.u32 %s33, 32
        %s887 = scalar_lea.vmem [#allocation11], %s886
        %v888 = vld [vmem:[%s887] sm:$0xff]
        %v889 = vld [vmem:[%s887 + $0x8] sm:$0xff]
        %v890 = vld [vmem:[%s887 + $0x10] sm:$0xff]
        %v891 = vld [vmem:[%s887 + $0x18] sm:$0xff]
        %s892 = scalar_lea.vmem [#allocation12], %s33
        %v893 = vld [vmem:[%s892] sm:$0x1]
        %s894 = scalar_lea.vmem [#allocation14], %s886
        %v895 = vld [vmem:[%s894] sm:$0xff]
        %v896 = vld [vmem:[%s894 + $0x8] sm:$0xff]
        %v897 = vld [vmem:[%s894 + $0x10] sm:$0xff]
        %v898 = vld [vmem:[%s894 + $0x18] sm:$0xff]
        %s899 = smul.u32 %s33, 8
        %s900 = scalar_lea.vmem %s10, %s899
        %v901 = vld [vmem:[%s900] sm:$0xff]
        %v903 = vlaneseq
        %v904 = vshrl.u32 %v903, 7
        %v905 = vsub.s32 0, %v904
        %v906 = vrot.slane %v893, %v905
        %vm908 = vcmask 261120
        %v910 = vsel %vm908, %v882, 0
        %v913 = vsel %vm908, %v883, 0
        %v916 = vsel %vm908, %v884, 0
        %v919 = vsel %vm908, %v885, 0
        %921 = vmatprep.subr.mxu0 0.0
        %922 = vmatpush1.msra.mxu0 0.0
        %923 = vmatprep.subr.mxu0 0.0
        %924 = vmatpush1.msra.mxu0 0.0
        %925 = vmatprep.subr.mxu0 0.0
        %926 = vmatpush1.msra.mxu0 0.0
        %927 = vmatprep.subr.mxu0 0.0
        %928 = vmatpush1.msra.mxu0 0.0
        %929 = vmatprep.subr.mxu0 0.0
        %930 = vmatpush1.msra.mxu0 0.0
        %931 = vmatprep.subr.mxu0 0.0
        %932 = vmatpush1.msra.mxu0 0.0
        %933 = vmatprep.subr.mxu0 0.0
        %934 = vmatpush1.msra.mxu0 0.0
        %935 = vmatprep.subr.mxu0 0.0
        %936 = vmatpush1.msra.mxu0 0.0
        %937 = vmatprep.subr.mxu0 0.0
        %938 = vmatpush1.msra.mxu0 0.0
        %939 = vmatprep.subr.mxu0 0.0
        %940 = vmatpush1.msra.mxu0 0.0
        %941 = vmatprep.subr.mxu0 0.0
        %942 = vmatpush1.msra.mxu0 0.0
        %943 = vmatprep.subr.mxu0 0.0
        %944 = vmatpush1.msra.mxu0 0.0
        %945 = vmatprep.subr.mxu0 0.0
        %946 = vmatpush1.msra.mxu0 %v891
        %947 = vmatprep.subr.mxu0 0.0
        %948 = vmatpush1.msra.mxu0 %v890
        %949 = vmatprep.subr.mxu0 0.0
        %950 = vmatpush1.msra.mxu0 %v889
        %951 = vmatprep.subr.mxu0 0.0
        %952 = vmatpush1.msra.mxu0 %v888
        %953 = vmatprep.subr.mxu0 0.0
        %954 = vmatpush2.msra.mxu0 0.0
        %955 = vmatprep.subr.mxu0 0.0
        %956 = vmatpush2.msra.mxu0 0.0
        %957 = vmatprep.subr.mxu0 0.0
        %958 = vmatpush2.msra.mxu0 0.0
        %959 = vmatprep.subr.mxu0 0.0
        %960 = vmatpush2.msra.mxu0 0.0
        %961 = vmatprep.subr.mxu0 0.0
        %962 = vmatpush2.msra.mxu0 0.0
        %963 = vmatprep.subr.mxu0 0.0
        %964 = vmatpush2.msra.mxu0 0.0
        %965 = vmatprep.subr.mxu0 0.0
        %966 = vmatpush2.msra.mxu0 0.0
        %967 = vmatprep.subr.mxu0 0.0
        %968 = vmatpush2.msra.mxu0 0.0
        %969 = vmatprep.subr.mxu0 0.0
        %970 = vmatpush2.msra.mxu0 0.0
        %971 = vmatprep.subr.mxu0 0.0
        %972 = vmatpush2.msra.mxu0 0.0
        %973 = vmatprep.subr.mxu0 0.0
        %974 = vmatpush2.msra.mxu0 0.0
        %975 = vmatprep.subr.mxu0 0.0
        %976 = vmatpush2.msra.mxu0 0.0
        %977 = vmatprep.subr.mxu0 0.0
        %978 = vmatpush2.msra.mxu0 0.0
        %979 = vmatprep.subr.mxu0 0.0
        %980 = vmatpush2.msra.mxu0 0.0
        %981 = vmatprep.subr.mxu0 0.0
        %982 = vmatpush2.msra.mxu0 0.0
        %983 = vmatprep.subr.mxu0 0.0
        %984 = vmatpush2.msra.mxu0 0.0
        %985 = vmatprep.mubr.f32.mxu0 0.0
        %986 = vmatmul.mubr.f32.gmra.mxu0 %v910
        %v987 = vpop.f32.mrf.mxu0
        %v988 = vadd.f32 %v906, %v987
        %v989 = vpop.f32.mrf.mxu0
        %990 = vmatprep.mubr.f32.mxu0 0.0
        %991 = vmatmul.mubr.f32.gmra.mxu0 %v913
        %v992 = vpop.f32.mrf.mxu0
        %v993 = vadd.f32 %v906, %v992
        %v994 = vpop.f32.mrf.mxu0
        %995 = vmatprep.mubr.f32.mxu0 0.0
        %996 = vmatmul.mubr.f32.gmra.mxu0 %v916
        %v997 = vpop.f32.mrf.mxu0
        %v998 = vadd.f32 %v906, %v997
        %v999 = vpop.f32.mrf.mxu0
        %1000 = vmatprep.mubr.f32.mxu0 0.0
        %1001 = vmatmul.mubr.f32.gmra.mxu0 %v919
        %v1002 = vpop.f32.mrf.mxu0
        %v1003 = vadd.f32 %v906, %v1002
        %v1004 = vpop.f32.mrf.mxu0
        %1005 = vdwg.mxu0
        %v1006 = vld [vmem:[#allocation6] sm:$0xff]
        %vm1007 = vcmp.eq.f32.partialorder %v1006, 0.0
        %v1008 = vsel %vm1007, -1e+30, 0.0
        %1010 = vrot.lane.b32.xlu0 %v988, 96
        %v1011 = vpop.permute.xlu0 %1010
        %vm1012 = vcmask 130048
        %v1013 = vsel %vm1012, %v988, 0
        %v1015 = vsel %vm1012, %v1011, 0
        %1017 = vmatprep.subr.mxu0 0.0
        %1018 = vmatpush1.xpose.msra.mxu0 0.0
        %1019 = vmatprep.subr.mxu0 0.0
        %1020 = vmatpush1.xpose.msra.mxu0 0.0
        %1021 = vmatprep.subr.mxu0 0.0
        %1022 = vmatpush1.xpose.msra.mxu0 0.0
        %1023 = vmatprep.subr.mxu0 0.0
        %1024 = vmatpush1.xpose.msra.mxu0 0.0
        %1025 = vmatprep.subr.mxu0 0.0
        %1026 = vmatpush1.xpose.msra.mxu0 0.0
        %1027 = vmatprep.subr.mxu0 0.0
        %1028 = vmatpush1.xpose.msra.mxu0 0.0
        %1029 = vmatprep.subr.mxu0 0.0
        %1030 = vmatpush1.xpose.msra.mxu0 0.0
        %1031 = vmatprep.subr.mxu0 0.0
        %1032 = vmatpush1.xpose.msra.mxu0 0.0
        %1033 = vmatprep.subr.mxu0 0.0
        %1034 = vmatpush1.xpose.msra.mxu0 0.0
        %1035 = vmatprep.subr.mxu0 0.0
        %1036 = vmatpush1.xpose.msra.mxu0 0.0
        %1037 = vmatprep.subr.mxu0 0.0
        %1038 = vmatpush1.xpose.msra.mxu0 0.0
        %1039 = vmatprep.subr.mxu0 0.0
        %1040 = vmatpush1.xpose.msra.mxu0 0.0
        %1041 = vmatprep.subr.mxu0 0.0
        %1042 = vmatpush1.xpose.msra.mxu0 0.0
        %1043 = vmatprep.subr.mxu0 0.0
        %1044 = vmatpush1.xpose.msra.mxu0 0.0
        %1045 = vmatprep.subr.mxu0 0.0
        %1046 = vmatpush1.xpose.msra.mxu0 0.0
        %1047 = vmatprep.subr.mxu0 0.0
        %1048 = vmatpush1.xpose.msra.mxu0 %v1015
        %1049 = vmatprep.subr.mxu0 0.0
        %1050 = vmatpush2.xpose.msra.mxu0 0.0
        %1051 = vmatprep.subr.mxu0 0.0
        %1052 = vmatpush2.xpose.msra.mxu0 0.0
        %1053 = vmatprep.subr.mxu0 0.0
        %1054 = vmatpush2.xpose.msra.mxu0 0.0
        %1055 = vmatprep.subr.mxu0 0.0
        %1056 = vmatpush2.xpose.msra.mxu0 0.0
        %1057 = vmatprep.subr.mxu0 0.0
        %1058 = vmatpush2.xpose.msra.mxu0 0.0
        %1059 = vmatprep.subr.mxu0 0.0
        %1060 = vmatpush2.xpose.msra.mxu0 0.0
        %1061 = vmatprep.subr.mxu0 0.0
        %1062 = vmatpush2.xpose.msra.mxu0 0.0
        %1063 = vmatprep.subr.mxu0 0.0
        %1064 = vmatpush2.xpose.msra.mxu0 0.0
        %1065 = vmatprep.subr.mxu0 0.0
        %1066 = vmatpush2.xpose.msra.mxu0 0.0
        %1067 = vmatprep.subr.mxu0 0.0
        %1068 = vmatpush2.xpose.msra.mxu0 0.0
        %1069 = vmatprep.subr.mxu0 0.0
        %1070 = vmatpush2.xpose.msra.mxu0 0.0
        %1071 = vmatprep.subr.mxu0 0.0
        %1072 = vmatpush2.xpose.msra.mxu0 0.0
        %1073 = vmatprep.subr.mxu0 0.0
        %1074 = vmatpush2.xpose.msra.mxu0 0.0
        %1075 = vmatprep.subr.mxu0 0.0
        %1076 = vmatpush2.xpose.msra.mxu0 0.0
        %1077 = vmatprep.subr.mxu0 0.0
        %1078 = vmatpush2.xpose.msra.mxu0 0.0
        %1079 = vmatprep.subr.mxu0 0.0
        %1080 = vmatpush2.xpose.msra.mxu0 0.0
        %1081 = vmatprep.mubr.f32.mxu0 0.0
        %1082 = vmatmul.mubr.f32.gmra.mxu0 %v1013
        %v1083 = vpop.f32.mrf.mxu0
        %v1084 = vadd.f32 %v1008, %v1083
        %v1085 = vpop.f32.mrf.mxu0
        %1086 = vdwg.mxu0
        %vm1087 = vcmask 64512
        %v1088 = vsel %vm1087, %v1084, -inf
        %1089 = vmax.xlane.f32.xlu0 %v1088
        %v1090 = vpop.xlane.xlu0 %1089
        %v1091 = vsub.f32 %v1084, %v1090
        %v1092 = vmul.f32 %v1091, 1.442695
        %v1093 = vpow.pop %v1092
        %v1094 = vsel %vm1087, %v1093, 0.0
        %1095 = vadd.xlane.f32.xlu0 %v1094
        %v1096 = vpop.xlane.xlu0 %1095
        %v1097 = vrcp.pop %v1096
        %v1098 = vmul.f32 %v1093, %v1097
        %1099 = vrot.lane.b32.xlu0 %v988, 64
        %v1100 = vpop.permute.xlu0 %1099
        %v1103 = vsel %vm1087, %v1098, 0
        %1105 = vmatprep.subr.mxu0 0.0
        %1106 = vmatpush1.msra.mxu0 0.0
        %1107 = vmatprep.subr.mxu0 0.0
        %1108 = vmatpush1.msra.mxu0 0.0
        %1109 = vmatprep.subr.mxu0 0.0
        %1110 = vmatpush1.msra.mxu0 0.0
        %1111 = vmatprep.subr.mxu0 0.0
        %1112 = vmatpush1.msra.mxu0 0.0
        %1113 = vmatprep.subr.mxu0 0.0
        %1114 = vmatpush1.msra.mxu0 0.0
        %1115 = vmatprep.subr.mxu0 0.0
        %1116 = vmatpush1.msra.mxu0 0.0
        %1117 = vmatprep.subr.mxu0 0.0
        %1118 = vmatpush1.msra.mxu0 0.0
        %1119 = vmatprep.subr.mxu0 0.0
        %1120 = vmatpush1.msra.mxu0 0.0
        %1121 = vmatprep.subr.mxu0 0.0
        %1122 = vmatpush1.msra.mxu0 0.0
        %1123 = vmatprep.subr.mxu0 0.0
        %1124 = vmatpush1.msra.mxu0 0.0
        %1125 = vmatprep.subr.mxu0 0.0
        %1126 = vmatpush1.msra.mxu0 0.0
        %1127 = vmatprep.subr.mxu0 0.0
        %1128 = vmatpush1.msra.mxu0 0.0
        %1129 = vmatprep.subr.mxu0 0.0
        %1130 = vmatpush1.msra.mxu0 0.0
        %1131 = vmatprep.subr.mxu0 0.0
        %1132 = vmatpush1.msra.mxu0 0.0
        %1133 = vmatprep.subr.mxu0 0.0
        %1134 = vmatpush1.msra.mxu0 0.0
        %1135 = vmatprep.subr.mxu0 0.0
        %1136 = vmatpush1.msra.mxu0 %v1100
        %1137 = vmatprep.subr.mxu0 0.0
        %1138 = vmatpush2.msra.mxu0 0.0
        %1139 = vmatprep.subr.mxu0 0.0
        %1140 = vmatpush2.msra.mxu0 0.0
        %1141 = vmatprep.subr.mxu0 0.0
        %1142 = vmatpush2.msra.mxu0 0.0
        %1143 = vmatprep.subr.mxu0 0.0
        %1144 = vmatpush2.msra.mxu0 0.0
        %1145 = vmatprep.subr.mxu0 0.0
        %1146 = vmatpush2.msra.mxu0 0.0
        %1147 = vmatprep.subr.mxu0 0.0
        %1148 = vmatpush2.msra.mxu0 0.0
        %1149 = vmatprep.subr.mxu0 0.0
        %1150 = vmatpush2.msra.mxu0 0.0
        %1151 = vmatprep.subr.mxu0 0.0
        %1152 = vmatpush2.msra.mxu0 0.0
        %1153 = vmatprep.subr.mxu0 0.0
        %1154 = vmatpush2.msra.mxu0 0.0
        %1155 = vmatprep.subr.mxu0 0.0
        %1156 = vmatpush2.msra.mxu0 0.0
        %1157 = vmatprep.subr.mxu0 0.0
        %1158 = vmatpush2.msra.mxu0 0.0
        %1159 = vmatprep.subr.mxu0 0.0
        %1160 = vmatpush2.msra.mxu0 0.0
        %1161 = vmatprep.subr.mxu0 0.0
        %1162 = vmatpush2.msra.mxu0 0.0
        %1163 = vmatprep.subr.mxu0 0.0
        %1164 = vmatpush2.msra.mxu0 0.0
        %1165 = vmatprep.subr.mxu0 0.0
        %1166 = vmatpush2.msra.mxu0 0.0
        %1167 = vmatprep.subr.mxu0 0.0
        %1168 = vmatpush2.msra.mxu0 0.0
        %1169 = vmatprep.mubr.f32.mxu0 0.0
        %1170 = vmatmul.mubr.f32.gmra.mxu0 %v1103
        %v1171 = vpop.f32.mrf.mxu0
        %v1172 = vadd.f32 0.0, %v1171
        %v1173 = vpop.f32.mrf.mxu0
        %1174 = vdwg.mxu0
        %1175 = vrot.lane.b32.xlu0 %v988, 112
        %v1176 = vpop.permute.xlu0 %1175
        %1177 = vrot.lane.b32.xlu0 %v988, 80
        %v1178 = vpop.permute.xlu0 %1177
        %v1179 = vsel %vm1012, %v1176, 0
        %v1181 = vsel %vm1012, %v1178, 0
        %1183 = vmatprep.subr.mxu0 0.0
        %1184 = vmatpush1.xpose.msra.mxu0 0.0
        %1185 = vmatprep.subr.mxu0 0.0
        %1186 = vmatpush1.xpose.msra.mxu0 0.0
        %1187 = vmatprep.subr.mxu0 0.0
        %1188 = vmatpush1.xpose.msra.mxu0 0.0
        %1189 = vmatprep.subr.mxu0 0.0
        %1190 = vmatpush1.xpose.msra.mxu0 0.0
        %1191 = vmatprep.subr.mxu0 0.0
        %1192 = vmatpush1.xpose.msra.mxu0 0.0
        %1193 = vmatprep.subr.mxu0 0.0
        %1194 = vmatpush1.xpose.msra.mxu0 0.0
        %1195 = vmatprep.subr.mxu0 0.0
        %1196 = vmatpush1.xpose.msra.mxu0 0.0
        %1197 = vmatprep.subr.mxu0 0.0
        %1198 = vmatpush1.xpose.msra.mxu0 0.0
        %1199 = vmatprep.subr.mxu0 0.0
        %1200 = vmatpush1.xpose.msra.mxu0 0.0
        %1201 = vmatprep.subr.mxu0 0.0
        %1202 = vmatpush1.xpose.msra.mxu0 0.0
        %1203 = vmatprep.subr.mxu0 0.0
        %1204 = vmatpush1.xpose.msra.mxu0 0.0
        %1205 = vmatprep.subr.mxu0 0.0
        %1206 = vmatpush1.xpose.msra.mxu0 0.0
        %1207 = vmatprep.subr.mxu0 0.0
        %1208 = vmatpush1.xpose.msra.mxu0 0.0
        %1209 = vmatprep.subr.mxu0 0.0
        %1210 = vmatpush1.xpose.msra.mxu0 0.0
        %1211 = vmatprep.subr.mxu0 0.0
        %1212 = vmatpush1.xpose.msra.mxu0 0.0
        %1213 = vmatprep.subr.mxu0 0.0
        %1214 = vmatpush1.xpose.msra.mxu0 %v1181
        %1215 = vmatprep.subr.mxu0 0.0
        %1216 = vmatpush2.xpose.msra.mxu0 0.0
        %1217 = vmatprep.subr.mxu0 0.0
        %1218 = vmatpush2.xpose.msra.mxu0 0.0
        %1219 = vmatprep.subr.mxu0 0.0
        %1220 = vmatpush2.xpose.msra.mxu0 0.0
        %1221 = vmatprep.subr.mxu0 0.0
        %1222 = vmatpush2.xpose.msra.mxu0 0.0
        %1223 = vmatprep.subr.mxu0 0.0
        %1224 = vmatpush2.xpose.msra.mxu0 0.0
        %1225 = vmatprep.subr.mxu0 0.0
        %1226 = vmatpush2.xpose.msra.mxu0 0.0
        %1227 = vmatprep.subr.mxu0 0.0
        %1228 = vmatpush2.xpose.msra.mxu0 0.0
        %1229 = vmatprep.subr.mxu0 0.0
        %1230 = vmatpush2.xpose.msra.mxu0 0.0
        %1231 = vmatprep.subr.mxu0 0.0
        %1232 = vmatpush2.xpose.msra.mxu0 0.0
        %1233 = vmatprep.subr.mxu0 0.0
        %1234 = vmatpush2.xpose.msra.mxu0 0.0
        %1235 = vmatprep.subr.mxu0 0.0
        %1236 = vmatpush2.xpose.msra.mxu0 0.0
        %1237 = vmatprep.subr.mxu0 0.0
        %1238 = vmatpush2.xpose.msra.mxu0 0.0
        %1239 = vmatprep.subr.mxu0 0.0
        %1240 = vmatpush2.xpose.msra.mxu0 0.0
        %1241 = vmatprep.subr.mxu0 0.0
        %1242 = vmatpush2.xpose.msra.mxu0 0.0
        %1243 = vmatprep.subr.mxu0 0.0
        %1244 = vmatpush2.xpose.msra.mxu0 0.0
        %1245 = vmatprep.subr.mxu0 0.0
        %1246 = vmatpush2.xpose.msra.mxu0 0.0
        %1247 = vmatprep.mubr.f32.mxu0 0.0
        %1248 = vmatmul.mubr.f32.gmra.mxu0 %v1179
        %v1249 = vpop.f32.mrf.mxu0
        %v1250 = vadd.f32 %v1008, %v1249
        %v1251 = vpop.f32.mrf.mxu0
        %1252 = vdwg.mxu0
        %v1253 = vsel %vm1087, %v1250, -inf
        %1254 = vmax.xlane.f32.xlu0 %v1253
        %v1255 = vpop.xlane.xlu0 %1254
        %v1256 = vsub.f32 %v1250, %v1255
        %v1257 = vmul.f32 %v1256, 1.442695
        %v1258 = vpow.pop %v1257
        %v1259 = vsel %vm1087, %v1258, 0.0
        %1260 = vadd.xlane.f32.xlu0 %v1259
        %v1261 = vpop.xlane.xlu0 %1260
        %v1262 = vrcp.pop %v1261
        %v1263 = vmul.f32 %v1258, %v1262
        %1264 = vrot.lane.b32.xlu0 %v988, 48
        %v1265 = vpop.permute.xlu0 %1264
        %v1268 = vsel %vm1087, %v1263, 0
        %1270 = vmatprep.subr.mxu0 0.0
        %1271 = vmatpush1.msra.mxu0 0.0
        %1272 = vmatprep.subr.mxu0 0.0
        %1273 = vmatpush1.msra.mxu0 0.0
        %1274 = vmatprep.subr.mxu0 0.0
        %1275 = vmatpush1.msra.mxu0 0.0
        %1276 = vmatprep.subr.mxu0 0.0
        %1277 = vmatpush1.msra.mxu0 0.0
        %1278 = vmatprep.subr.mxu0 0.0
        %1279 = vmatpush1.msra.mxu0 0.0
        %1280 = vmatprep.subr.mxu0 0.0
        %1281 = vmatpush1.msra.mxu0 0.0
        %1282 = vmatprep.subr.mxu0 0.0
        %1283 = vmatpush1.msra.mxu0 0.0
        %1284 = vmatprep.subr.mxu0 0.0
        %1285 = vmatpush1.msra.mxu0 0.0
        %1286 = vmatprep.subr.mxu0 0.0
        %1287 = vmatpush1.msra.mxu0 0.0
        %1288 = vmatprep.subr.mxu0 0.0
        %1289 = vmatpush1.msra.mxu0 0.0
        %1290 = vmatprep.subr.mxu0 0.0
        %1291 = vmatpush1.msra.mxu0 0.0
        %1292 = vmatprep.subr.mxu0 0.0
        %1293 = vmatpush1.msra.mxu0 0.0
        %1294 = vmatprep.subr.mxu0 0.0
        %1295 = vmatpush1.msra.mxu0 0.0
        %1296 = vmatprep.subr.mxu0 0.0
        %1297 = vmatpush1.msra.mxu0 0.0
        %1298 = vmatprep.subr.mxu0 0.0
        %1299 = vmatpush1.msra.mxu0 0.0
        %1300 = vmatprep.subr.mxu0 0.0
        %1301 = vmatpush1.msra.mxu0 %v1265
        %1302 = vmatprep.subr.mxu0 0.0
        %1303 = vmatpush2.msra.mxu0 0.0
        %1304 = vmatprep.subr.mxu0 0.0
        %1305 = vmatpush2.msra.mxu0 0.0
        %1306 = vmatprep.subr.mxu0 0.0
        %1307 = vmatpush2.msra.mxu0 0.0
        %1308 = vmatprep.subr.mxu0 0.0
        %1309 = vmatpush2.msra.mxu0 0.0
        %1310 = vmatprep.subr.mxu0 0.0
        %1311 = vmatpush2.msra.mxu0 0.0
        %1312 = vmatprep.subr.mxu0 0.0
        %1313 = vmatpush2.msra.mxu0 0.0
        %1314 = vmatprep.subr.mxu0 0.0
        %1315 = vmatpush2.msra.mxu0 0.0
        %1316 = vmatprep.subr.mxu0 0.0
        %1317 = vmatpush2.msra.mxu0 0.0
        %1318 = vmatprep.subr.mxu0 0.0
        %1319 = vmatpush2.msra.mxu0 0.0
        %1320 = vmatprep.subr.mxu0 0.0
        %1321 = vmatpush2.msra.mxu0 0.0
        %1322 = vmatprep.subr.mxu0 0.0
        %1323 = vmatpush2.msra.mxu0 0.0
        %1324 = vmatprep.subr.mxu0 0.0
        %1325 = vmatpush2.msra.mxu0 0.0
        %1326 = vmatprep.subr.mxu0 0.0
        %1327 = vmatpush2.msra.mxu0 0.0
        %1328 = vmatprep.subr.mxu0 0.0
        %1329 = vmatpush2.msra.mxu0 0.0
        %1330 = vmatprep.subr.mxu0 0.0
        %1331 = vmatpush2.msra.mxu0 0.0
        %1332 = vmatprep.subr.mxu0 0.0
        %1333 = vmatpush2.msra.mxu0 0.0
        %1334 = vmatprep.mubr.f32.mxu0 0.0
        %1335 = vmatmul.mubr.f32.gmra.mxu0 %v1268
        %v1336 = vpop.f32.mrf.mxu0
        %v1337 = vadd.f32 0.0, %v1336
        %v1338 = vpop.f32.mrf.mxu0
        %1339 = vdwg.mxu0
        %v1341 = vsel %vm1012, %v1337, 0
        %1343 = vmatprep.subr.mxu0 0.0
        %1344 = vmatpush1.msra.mxu0 0.0
        %1345 = vmatprep.subr.mxu0 0.0
        %1346 = vmatpush1.msra.mxu0 0.0
        %1347 = vmatprep.subr.mxu0 0.0
        %1348 = vmatpush1.msra.mxu0 0.0
        %1349 = vmatprep.subr.mxu0 0.0
        %1350 = vmatpush1.msra.mxu0 0.0
        %1351 = vmatprep.subr.mxu0 0.0
        %1352 = vmatpush1.msra.mxu0 0.0
        %1353 = vmatprep.subr.mxu0 0.0
        %1354 = vmatpush1.msra.mxu0 0.0
        %1355 = vmatprep.subr.mxu0 0.0
        %1356 = vmatpush1.msra.mxu0 0.0
        %1357 = vmatprep.subr.mxu0 0.0
        %1358 = vmatpush1.msra.mxu0 0.0
        %1359 = vmatprep.subr.mxu0 0.0
        %1360 = vmatpush1.msra.mxu0 0.0
        %1361 = vmatprep.subr.mxu0 0.0
        %1362 = vmatpush1.msra.mxu0 0.0
        %1363 = vmatprep.subr.mxu0 0.0
        %1364 = vmatpush1.msra.mxu0 0.0
        %1365 = vmatprep.subr.mxu0 0.0
        %1366 = vmatpush1.msra.mxu0 0.0
        %1367 = vmatprep.subr.mxu0 0.0
        %1368 = vmatpush1.msra.mxu0 0.0
        %1369 = vmatprep.subr.mxu0 0.0
        %1370 = vmatpush1.msra.mxu0 0.0
        %1371 = vmatprep.subr.mxu0 0.0
        %1372 = vmatpush1.msra.mxu0 %v898
        %1373 = vmatprep.subr.mxu0 0.0
        %1374 = vmatpush1.msra.mxu0 %v897
        %1375 = vmatprep.subr.mxu0 0.0
        %1376 = vmatpush2.msra.mxu0 0.0
        %1377 = vmatprep.subr.mxu0 0.0
        %1378 = vmatpush2.msra.mxu0 0.0
        %1379 = vmatprep.subr.mxu0 0.0
        %1380 = vmatpush2.msra.mxu0 0.0
        %1381 = vmatprep.subr.mxu0 0.0
        %1382 = vmatpush2.msra.mxu0 0.0
        %1383 = vmatprep.subr.mxu0 0.0
        %1384 = vmatpush2.msra.mxu0 0.0
        %1385 = vmatprep.subr.mxu0 0.0
        %1386 = vmatpush2.msra.mxu0 0.0
        %1387 = vmatprep.subr.mxu0 0.0
        %1388 = vmatpush2.msra.mxu0 0.0
        %1389 = vmatprep.subr.mxu0 0.0
        %1390 = vmatpush2.msra.mxu0 0.0
        %1391 = vmatprep.subr.mxu0 0.0
        %1392 = vmatpush2.msra.mxu0 0.0
        %1393 = vmatprep.subr.mxu0 0.0
        %1394 = vmatpush2.msra.mxu0 0.0
        %1395 = vmatprep.subr.mxu0 0.0
        %1396 = vmatpush2.msra.mxu0 0.0
        %1397 = vmatprep.subr.mxu0 0.0
        %1398 = vmatpush2.msra.mxu0 0.0
        %1399 = vmatprep.subr.mxu0 0.0
        %1400 = vmatpush2.msra.mxu0 0.0
        %1401 = vmatprep.subr.mxu0 0.0
        %1402 = vmatpush2.msra.mxu0 0.0
        %1403 = vmatprep.subr.mxu0 0.0
        %1404 = vmatpush2.msra.mxu0 0.0
        %1405 = vmatprep.subr.mxu0 0.0
        %1406 = vmatpush2.msra.mxu0 0.0
        %1407 = vmatprep.mubr.f32.mxu0 0.0
        %1408 = vmatmul.mubr.f32.gmra.mxu0 %v1341
        %v1409 = vpop.f32.mrf.mxu0
        %v1410 = vadd.f32 0.0, %v1409
        %v1411 = vpop.f32.mrf.mxu0
        %1412 = vdwg.mxu0
        %v1414 = vsel %vm1012, %v1172, 0
        %1416 = vmatprep.subr.mxu0 0.0
        %1417 = vmatpush1.msra.mxu0 0.0
        %1418 = vmatprep.subr.mxu0 0.0
        %1419 = vmatpush1.msra.mxu0 0.0
        %1420 = vmatprep.subr.mxu0 0.0
        %1421 = vmatpush1.msra.mxu0 0.0
        %1422 = vmatprep.subr.mxu0 0.0
        %1423 = vmatpush1.msra.mxu0 0.0
        %1424 = vmatprep.subr.mxu0 0.0
        %1425 = vmatpush1.msra.mxu0 0.0
        %1426 = vmatprep.subr.mxu0 0.0
        %1427 = vmatpush1.msra.mxu0 0.0
        %1428 = vmatprep.subr.mxu0 0.0
        %1429 = vmatpush1.msra.mxu0 0.0
        %1430 = vmatprep.subr.mxu0 0.0
        %1431 = vmatpush1.msra.mxu0 0.0
        %1432 = vmatprep.subr.mxu0 0.0
        %1433 = vmatpush1.msra.mxu0 0.0
        %1434 = vmatprep.subr.mxu0 0.0
        %1435 = vmatpush1.msra.mxu0 0.0
        %1436 = vmatprep.subr.mxu0 0.0
        %1437 = vmatpush1.msra.mxu0 0.0
        %1438 = vmatprep.subr.mxu0 0.0
        %1439 = vmatpush1.msra.mxu0 0.0
        %1440 = vmatprep.subr.mxu0 0.0
        %1441 = vmatpush1.msra.mxu0 0.0
        %1442 = vmatprep.subr.mxu0 0.0
        %1443 = vmatpush1.msra.mxu0 0.0
        %1444 = vmatprep.subr.mxu0 0.0
        %1445 = vmatpush1.msra.mxu0 %v896
        %1446 = vmatprep.subr.mxu0 0.0
        %1447 = vmatpush1.msra.mxu0 %v895
        %1448 = vmatprep.subr.mxu0 0.0
        %1449 = vmatpush2.msra.mxu0 0.0
        %1450 = vmatprep.subr.mxu0 0.0
        %1451 = vmatpush2.msra.mxu0 0.0
        %1452 = vmatprep.subr.mxu0 0.0
        %1453 = vmatpush2.msra.mxu0 0.0
        %1454 = vmatprep.subr.mxu0 0.0
        %1455 = vmatpush2.msra.mxu0 0.0
        %1456 = vmatprep.subr.mxu0 0.0
        %1457 = vmatpush2.msra.mxu0 0.0
        %1458 = vmatprep.subr.mxu0 0.0
        %1459 = vmatpush2.msra.mxu0 0.0
        %1460 = vmatprep.subr.mxu0 0.0
        %1461 = vmatpush2.msra.mxu0 0.0
        %1462 = vmatprep.subr.mxu0 0.0
        %1463 = vmatpush2.msra.mxu0 0.0
        %1464 = vmatprep.subr.mxu0 0.0
        %1465 = vmatpush2.msra.mxu0 0.0
        %1466 = vmatprep.subr.mxu0 0.0
        %1467 = vmatpush2.msra.mxu0 0.0
        %1468 = vmatprep.subr.mxu0 0.0
        %1469 = vmatpush2.msra.mxu0 0.0
        %1470 = vmatprep.subr.mxu0 0.0
        %1471 = vmatpush2.msra.mxu0 0.0
        %1472 = vmatprep.subr.mxu0 0.0
        %1473 = vmatpush2.msra.mxu0 0.0
        %1474 = vmatprep.subr.mxu0 0.0
        %1475 = vmatpush2.msra.mxu0 0.0
        %1476 = vmatprep.subr.mxu0 0.0
        %1477 = vmatpush2.msra.mxu0 0.0
        %1478 = vmatprep.subr.mxu0 0.0
        %1479 = vmatpush2.msra.mxu0 0.0
        %1480 = vmatprep.mubr.f32.mxu0 0.0
        %1481 = vmatmul.mubr.f32.gmra.mxu0 %v1414
        %v1482 = vpop.f32.mrf.mxu0
        %v1483 = vadd.f32 %v1410, %v1482
        %v1484 = vpop.f32.mrf.mxu0
        %1485 = vdwg.mxu0
        %1486 = vst.msk [vmem:[#allocation2] sm:$0xff] %vm908, %v1483
        %s1487 = scalar_lea.vmem [#allocation6], 8
        %v1488 = vld [vmem:[%s1487] sm:$0xff]
        %vm1489 = vcmp.eq.f32.partialorder %v1488, 0.0
        %v1490 = vsel %vm1489, -1e+30, 0.0
        %1492 = vrot.lane.b32.xlu0 %v993, 96
        %v1493 = vpop.permute.xlu0 %1492
        %v1494 = vsel %vm1012, %v993, 0
        %v1496 = vsel %vm1012, %v1493, 0
        %1498 = vmatprep.subr.mxu0 0.0
        %1499 = vmatpush1.xpose.msra.mxu0 0.0
        %1500 = vmatprep.subr.mxu0 0.0
        %1501 = vmatpush1.xpose.msra.mxu0 0.0
        %1502 = vmatprep.subr.mxu0 0.0
        %1503 = vmatpush1.xpose.msra.mxu0 0.0
        %1504 = vmatprep.subr.mxu0 0.0
        %1505 = vmatpush1.xpose.msra.mxu0 0.0
        %1506 = vmatprep.subr.mxu0 0.0
        %1507 = vmatpush1.xpose.msra.mxu0 0.0
        %1508 = vmatprep.subr.mxu0 0.0
        %1509 = vmatpush1.xpose.msra.mxu0 0.0
        %1510 = vmatprep.subr.mxu0 0.0
        %1511 = vmatpush1.xpose.msra.mxu0 0.0
        %1512 = vmatprep.subr.mxu0 0.0
        %1513 = vmatpush1.xpose.msra.mxu0 0.0
        %1514 = vmatprep.subr.mxu0 0.0
        %1515 = vmatpush1.xpose.msra.mxu0 0.0
        %1516 = vmatprep.subr.mxu0 0.0
        %1517 = vmatpush1.xpose.msra.mxu0 0.0
        %1518 = vmatprep.subr.mxu0 0.0
        %1519 = vmatpush1.xpose.msra.mxu0 0.0
        %1520 = vmatprep.subr.mxu0 0.0
        %1521 = vmatpush1.xpose.msra.mxu0 0.0
        %1522 = vmatprep.subr.mxu0 0.0
        %1523 = vmatpush1.xpose.msra.mxu0 0.0
        %1524 = vmatprep.subr.mxu0 0.0
        %1525 = vmatpush1.xpose.msra.mxu0 0.0
        %1526 = vmatprep.subr.mxu0 0.0
        %1527 = vmatpush1.xpose.msra.mxu0 0.0
        %1528 = vmatprep.subr.mxu0 0.0
        %1529 = vmatpush1.xpose.msra.mxu0 %v1496
        %1530 = vmatprep.subr.mxu0 0.0
        %1531 = vmatpush2.xpose.msra.mxu0 0.0
        %1532 = vmatprep.subr.mxu0 0.0
        %1533 = vmatpush2.xpose.msra.mxu0 0.0
        %1534 = vmatprep.subr.mxu0 0.0
        %1535 = vmatpush2.xpose.msra.mxu0 0.0
        %1536 = vmatprep.subr.mxu0 0.0
        %1537 = vmatpush2.xpose.msra.mxu0 0.0
        %1538 = vmatprep.subr.mxu0 0.0
        %1539 = vmatpush2.xpose.msra.mxu0 0.0
        %1540 = vmatprep.subr.mxu0 0.0
        %1541 = vmatpush2.xpose.msra.mxu0 0.0
        %1542 = vmatprep.subr.mxu0 0.0
        %1543 = vmatpush2.xpose.msra.mxu0 0.0
        %1544 = vmatprep.subr.mxu0 0.0
        %1545 = vmatpush2.xpose.msra.mxu0 0.0
        %1546 = vmatprep.subr.mxu0 0.0
        %1547 = vmatpush2.xpose.msra.mxu0 0.0
        %1548 = vmatprep.subr.mxu0 0.0
        %1549 = vmatpush2.xpose.msra.mxu0 0.0
        %1550 = vmatprep.subr.mxu0 0.0
        %1551 = vmatpush2.xpose.msra.mxu0 0.0
        %1552 = vmatprep.subr.mxu0 0.0
        %1553 = vmatpush2.xpose.msra.mxu0 0.0
        %1554 = vmatprep.subr.mxu0 0.0
        %1555 = vmatpush2.xpose.msra.mxu0 0.0
        %1556 = vmatprep.subr.mxu0 0.0
        %1557 = vmatpush2.xpose.msra.mxu0 0.0
        %1558 = vmatprep.subr.mxu0 0.0
        %1559 = vmatpush2.xpose.msra.mxu0 0.0
        %1560 = vmatprep.subr.mxu0 0.0
        %1561 = vmatpush2.xpose.msra.mxu0 0.0
        %1562 = vmatprep.mubr.f32.mxu0 0.0
        %1563 = vmatmul.mubr.f32.gmra.mxu0 %v1494
        %v1564 = vpop.f32.mrf.mxu0
        %v1565 = vadd.f32 %v1490, %v1564
        %v1566 = vpop.f32.mrf.mxu0
        %1567 = vdwg.mxu0
        %v1568 = vsel %vm1087, %v1565, -inf
        %1569 = vmax.xlane.f32.xlu0 %v1568
        %v1570 = vpop.xlane.xlu0 %1569
        %v1571 = vsub.f32 %v1565, %v1570
        %v1572 = vmul.f32 %v1571, 1.442695
        %v1573 = vpow.pop %v1572
        %v1574 = vsel %vm1087, %v1573, 0.0
        %1575 = vadd.xlane.f32.xlu0 %v1574
        %v1576 = vpop.xlane.xlu0 %1575
        %v1577 = vrcp.pop %v1576
        %v1578 = vmul.f32 %v1573, %v1577
        %1579 = vrot.lane.b32.xlu0 %v993, 64
        %v1580 = vpop.permute.xlu0 %1579
        %v1583 = vsel %vm1087, %v1578, 0
        %1585 = vmatprep.subr.mxu0 0.0
        %1586 = vmatpush1.msra.mxu0 0.0
        %1587 = vmatprep.subr.mxu0 0.0
        %1588 = vmatpush1.msra.mxu0 0.0
        %1589 = vmatprep.subr.mxu0 0.0
        %1590 = vmatpush1.msra.mxu0 0.0
        %1591 = vmatprep.subr.mxu0 0.0
        %1592 = vmatpush1.msra.mxu0 0.0
        %1593 = vmatprep.subr.mxu0 0.0
        %1594 = vmatpush1.msra.mxu0 0.0
        %1595 = vmatprep.subr.mxu0 0.0
        %1596 = vmatpush1.msra.mxu0 0.0
        %1597 = vmatprep.subr.mxu0 0.0
        %1598 = vmatpush1.msra.mxu0 0.0
        %1599 = vmatprep.subr.mxu0 0.0
        %1600 = vmatpush1.msra.mxu0 0.0
        %1601 = vmatprep.subr.mxu0 0.0
        %1602 = vmatpush1.msra.mxu0 0.0
        %1603 = vmatprep.subr.mxu0 0.0
        %1604 = vmatpush1.msra.mxu0 0.0
        %1605 = vmatprep.subr.mxu0 0.0
        %1606 = vmatpush1.msra.mxu0 0.0
        %1607 = vmatprep.subr.mxu0 0.0
        %1608 = vmatpush1.msra.mxu0 0.0
        %1609 = vmatprep.subr.mxu0 0.0
        %1610 = vmatpush1.msra.mxu0 0.0
        %1611 = vmatprep.subr.mxu0 0.0
        %1612 = vmatpush1.msra.mxu0 0.0
        %1613 = vmatprep.subr.mxu0 0.0
        %1614 = vmatpush1.msra.mxu0 0.0
        %1615 = vmatprep.subr.mxu0 0.0
        %1616 = vmatpush1.msra.mxu0 %v1580
        %1617 = vmatprep.subr.mxu0 0.0
        %1618 = vmatpush2.msra.mxu0 0.0
        %1619 = vmatprep.subr.mxu0 0.0
        %1620 = vmatpush2.msra.mxu0 0.0
        %1621 = vmatprep.subr.mxu0 0.0
        %1622 = vmatpush2.msra.mxu0 0.0
        %1623 = vmatprep.subr.mxu0 0.0
        %1624 = vmatpush2.msra.mxu0 0.0
        %1625 = vmatprep.subr.mxu0 0.0
        %1626 = vmatpush2.msra.mxu0 0.0
        %1627 = vmatprep.subr.mxu0 0.0
        %1628 = vmatpush2.msra.mxu0 0.0
        %1629 = vmatprep.subr.mxu0 0.0
        %1630 = vmatpush2.msra.mxu0 0.0
        %1631 = vmatprep.subr.mxu0 0.0
        %1632 = vmatpush2.msra.mxu0 0.0
        %1633 = vmatprep.subr.mxu0 0.0
        %1634 = vmatpush2.msra.mxu0 0.0
        %1635 = vmatprep.subr.mxu0 0.0
        %1636 = vmatpush2.msra.mxu0 0.0
        %1637 = vmatprep.subr.mxu0 0.0
        %1638 = vmatpush2.msra.mxu0 0.0
        %1639 = vmatprep.subr.mxu0 0.0
        %1640 = vmatpush2.msra.mxu0 0.0
        %1641 = vmatprep.subr.mxu0 0.0
        %1642 = vmatpush2.msra.mxu0 0.0
        %1643 = vmatprep.subr.mxu0 0.0
        %1644 = vmatpush2.msra.mxu0 0.0
        %1645 = vmatprep.subr.mxu0 0.0
        %1646 = vmatpush2.msra.mxu0 0.0
        %1647 = vmatprep.subr.mxu0 0.0
        %1648 = vmatpush2.msra.mxu0 0.0
        %1649 = vmatprep.mubr.f32.mxu0 0.0
        %1650 = vmatmul.mubr.f32.gmra.mxu0 %v1583
        %v1651 = vpop.f32.mrf.mxu0
        %v1652 = vadd.f32 0.0, %v1651
        %v1653 = vpop.f32.mrf.mxu0
        %1654 = vdwg.mxu0
        %1655 = vrot.lane.b32.xlu0 %v993, 112
        %v1656 = vpop.permute.xlu0 %1655
        %1657 = vrot.lane.b32.xlu0 %v993, 80
        %v1658 = vpop.permute.xlu0 %1657
        %v1659 = vsel %vm1012, %v1656, 0
        %v1661 = vsel %vm1012, %v1658, 0
        %1663 = vmatprep.subr.mxu0 0.0
        %1664 = vmatpush1.xpose.msra.mxu0 0.0
        %1665 = vmatprep.subr.mxu0 0.0
        %1666 = vmatpush1.xpose.msra.mxu0 0.0
        %1667 = vmatprep.subr.mxu0 0.0
        %1668 = vmatpush1.xpose.msra.mxu0 0.0
        %1669 = vmatprep.subr.mxu0 0.0
        %1670 = vmatpush1.xpose.msra.mxu0 0.0
        %1671 = vmatprep.subr.mxu0 0.0
        %1672 = vmatpush1.xpose.msra.mxu0 0.0
        %1673 = vmatprep.subr.mxu0 0.0
        %1674 = vmatpush1.xpose.msra.mxu0 0.0
        %1675 = vmatprep.subr.mxu0 0.0
        %1676 = vmatpush1.xpose.msra.mxu0 0.0
        %1677 = vmatprep.subr.mxu0 0.0
        %1678 = vmatpush1.xpose.msra.mxu0 0.0
        %1679 = vmatprep.subr.mxu0 0.0
        %1680 = vmatpush1.xpose.msra.mxu0 0.0
        %1681 = vmatprep.subr.mxu0 0.0
        %1682 = vmatpush1.xpose.msra.mxu0 0.0
        %1683 = vmatprep.subr.mxu0 0.0
        %1684 = vmatpush1.xpose.msra.mxu0 0.0
        %1685 = vmatprep.subr.mxu0 0.0
        %1686 = vmatpush1.xpose.msra.mxu0 0.0
        %1687 = vmatprep.subr.mxu0 0.0
        %1688 = vmatpush1.xpose.msra.mxu0 0.0
        %1689 = vmatprep.subr.mxu0 0.0
        %1690 = vmatpush1.xpose.msra.mxu0 0.0
        %1691 = vmatprep.subr.mxu0 0.0
        %1692 = vmatpush1.xpose.msra.mxu0 0.0
        %1693 = vmatprep.subr.mxu0 0.0
        %1694 = vmatpush1.xpose.msra.mxu0 %v1661
        %1695 = vmatprep.subr.mxu0 0.0
        %1696 = vmatpush2.xpose.msra.mxu0 0.0
        %1697 = vmatprep.subr.mxu0 0.0
        %1698 = vmatpush2.xpose.msra.mxu0 0.0
        %1699 = vmatprep.subr.mxu0 0.0
        %1700 = vmatpush2.xpose.msra.mxu0 0.0
        %1701 = vmatprep.subr.mxu0 0.0
        %1702 = vmatpush2.xpose.msra.mxu0 0.0
        %1703 = vmatprep.subr.mxu0 0.0
        %1704 = vmatpush2.xpose.msra.mxu0 0.0
        %1705 = vmatprep.subr.mxu0 0.0
        %1706 = vmatpush2.xpose.msra.mxu0 0.0
        %1707 = vmatprep.subr.mxu0 0.0
        %1708 = vmatpush2.xpose.msra.mxu0 0.0
        %1709 = vmatprep.subr.mxu0 0.0
        %1710 = vmatpush2.xpose.msra.mxu0 0.0
        %1711 = vmatprep.subr.mxu0 0.0
        %1712 = vmatpush2.xpose.msra.mxu0 0.0
        %1713 = vmatprep.subr.mxu0 0.0
        %1714 = vmatpush2.xpose.msra.mxu0 0.0
        %1715 = vmatprep.subr.mxu0 0.0
        %1716 = vmatpush2.xpose.msra.mxu0 0.0
        %1717 = vmatprep.subr.mxu0 0.0
        %1718 = vmatpush2.xpose.msra.mxu0 0.0
        %1719 = vmatprep.subr.mxu0 0.0
        %1720 = vmatpush2.xpose.msra.mxu0 0.0
        %1721 = vmatprep.subr.mxu0 0.0
        %1722 = vmatpush2.xpose.msra.mxu0 0.0
        %1723 = vmatprep.subr.mxu0 0.0
        %1724 = vmatpush2.xpose.msra.mxu0 0.0
        %1725 = vmatprep.subr.mxu0 0.0
        %1726 = vmatpush2.xpose.msra.mxu0 0.0
        %1727 = vmatprep.mubr.f32.mxu0 0.0
        %1728 = vmatmul.mubr.f32.gmra.mxu0 %v1659
        %v1729 = vpop.f32.mrf.mxu0
        %v1730 = vadd.f32 %v1490, %v1729
        %v1731 = vpop.f32.mrf.mxu0
        %1732 = vdwg.mxu0
        %v1733 = vsel %vm1087, %v1730, -inf
        %1734 = vmax.xlane.f32.xlu0 %v1733
        %v1735 = vpop.xlane.xlu0 %1734
        %v1736 = vsub.f32 %v1730, %v1735
        %v1737 = vmul.f32 %v1736, 1.442695
        %v1738 = vpow.pop %v1737
        %v1739 = vsel %vm1087, %v1738, 0.0
        %1740 = vadd.xlane.f32.xlu0 %v1739
        %v1741 = vpop.xlane.xlu0 %1740
        %v1742 = vrcp.pop %v1741
        %v1743 = vmul.f32 %v1738, %v1742
        %1744 = vrot.lane.b32.xlu0 %v993, 48
        %v1745 = vpop.permute.xlu0 %1744
        %v1748 = vsel %vm1087, %v1743, 0
        %1750 = vmatprep.subr.mxu0 0.0
        %1751 = vmatpush1.msra.mxu0 0.0
        %1752 = vmatprep.subr.mxu0 0.0
        %1753 = vmatpush1.msra.mxu0 0.0
        %1754 = vmatprep.subr.mxu0 0.0
        %1755 = vmatpush1.msra.mxu0 0.0
        %1756 = vmatprep.subr.mxu0 0.0
        %1757 = vmatpush1.msra.mxu0 0.0
        %1758 = vmatprep.subr.mxu0 0.0
        %1759 = vmatpush1.msra.mxu0 0.0
        %1760 = vmatprep.subr.mxu0 0.0
        %1761 = vmatpush1.msra.mxu0 0.0
        %1762 = vmatprep.subr.mxu0 0.0
        %1763 = vmatpush1.msra.mxu0 0.0
        %1764 = vmatprep.subr.mxu0 0.0
        %1765 = vmatpush1.msra.mxu0 0.0
        %1766 = vmatprep.subr.mxu0 0.0
        %1767 = vmatpush1.msra.mxu0 0.0
        %1768 = vmatprep.subr.mxu0 0.0
        %1769 = vmatpush1.msra.mxu0 0.0
        %1770 = vmatprep.subr.mxu0 0.0
        %1771 = vmatpush1.msra.mxu0 0.0
        %1772 = vmatprep.subr.mxu0 0.0
        %1773 = vmatpush1.msra.mxu0 0.0
        %1774 = vmatprep.subr.mxu0 0.0
        %1775 = vmatpush1.msra.mxu0 0.0
        %1776 = vmatprep.subr.mxu0 0.0
        %1777 = vmatpush1.msra.mxu0 0.0
        %1778 = vmatprep.subr.mxu0 0.0
        %1779 = vmatpush1.msra.mxu0 0.0
        %1780 = vmatprep.subr.mxu0 0.0
        %1781 = vmatpush1.msra.mxu0 %v1745
        %1782 = vmatprep.subr.mxu0 0.0
        %1783 = vmatpush2.msra.mxu0 0.0
        %1784 = vmatprep.subr.mxu0 0.0
        %1785 = vmatpush2.msra.mxu0 0.0
        %1786 = vmatprep.subr.mxu0 0.0
        %1787 = vmatpush2.msra.mxu0 0.0
        %1788 = vmatprep.subr.mxu0 0.0
        %1789 = vmatpush2.msra.mxu0 0.0
        %1790 = vmatprep.subr.mxu0 0.0
        %1791 = vmatpush2.msra.mxu0 0.0
        %1792 = vmatprep.subr.mxu0 0.0
        %1793 = vmatpush2.msra.mxu0 0.0
        %1794 = vmatprep.subr.mxu0 0.0
        %1795 = vmatpush2.msra.mxu0 0.0
        %1796 = vmatprep.subr.mxu0 0.0
        %1797 = vmatpush2.msra.mxu0 0.0
        %1798 = vmatprep.subr.mxu0 0.0
        %1799 = vmatpush2.msra.mxu0 0.0
        %1800 = vmatprep.subr.mxu0 0.0
        %1801 = vmatpush2.msra.mxu0 0.0
        %1802 = vmatprep.subr.mxu0 0.0
        %1803 = vmatpush2.msra.mxu0 0.0
        %1804 = vmatprep.subr.mxu0 0.0
        %1805 = vmatpush2.msra.mxu0 0.0
        %1806 = vmatprep.subr.mxu0 0.0
        %1807 = vmatpush2.msra.mxu0 0.0
        %1808 = vmatprep.subr.mxu0 0.0
        %1809 = vmatpush2.msra.mxu0 0.0
        %1810 = vmatprep.subr.mxu0 0.0
        %1811 = vmatpush2.msra.mxu0 0.0
        %1812 = vmatprep.subr.mxu0 0.0
        %1813 = vmatpush2.msra.mxu0 0.0
        %1814 = vmatprep.mubr.f32.mxu0 0.0
        %1815 = vmatmul.mubr.f32.gmra.mxu0 %v1748
        %v1816 = vpop.f32.mrf.mxu0
        %v1817 = vadd.f32 0.0, %v1816
        %v1818 = vpop.f32.mrf.mxu0
        %1819 = vdwg.mxu0
        %v1821 = vsel %vm1012, %v1817, 0
        %1823 = vmatprep.subr.mxu0 0.0
        %1824 = vmatpush1.msra.mxu0 0.0
        %1825 = vmatprep.subr.mxu0 0.0
        %1826 = vmatpush1.msra.mxu0 0.0
        %1827 = vmatprep.subr.mxu0 0.0
        %1828 = vmatpush1.msra.mxu0 0.0
        %1829 = vmatprep.subr.mxu0 0.0
        %1830 = vmatpush1.msra.mxu0 0.0
        %1831 = vmatprep.subr.mxu0 0.0
        %1832 = vmatpush1.msra.mxu0 0.0
        %1833 = vmatprep.subr.mxu0 0.0
        %1834 = vmatpush1.msra.mxu0 0.0
        %1835 = vmatprep.subr.mxu0 0.0
        %1836 = vmatpush1.msra.mxu0 0.0
        %1837 = vmatprep.subr.mxu0 0.0
        %1838 = vmatpush1.msra.mxu0 0.0
        %1839 = vmatprep.subr.mxu0 0.0
        %1840 = vmatpush1.msra.mxu0 0.0
        %1841 = vmatprep.subr.mxu0 0.0
        %1842 = vmatpush1.msra.mxu0 0.0
        %1843 = vmatprep.subr.mxu0 0.0
        %1844 = vmatpush1.msra.mxu0 0.0
        %1845 = vmatprep.subr.mxu0 0.0
        %1846 = vmatpush1.msra.mxu0 0.0
        %1847 = vmatprep.subr.mxu0 0.0
        %1848 = vmatpush1.msra.mxu0 0.0
        %1849 = vmatprep.subr.mxu0 0.0
        %1850 = vmatpush1.msra.mxu0 0.0
        %1851 = vmatprep.subr.mxu0 0.0
        %1852 = vmatpush1.msra.mxu0 %v898
        %1853 = vmatprep.subr.mxu0 0.0
        %1854 = vmatpush1.msra.mxu0 %v897
        %1855 = vmatprep.subr.mxu0 0.0
        %1856 = vmatpush2.msra.mxu0 0.0
        %1857 = vmatprep.subr.mxu0 0.0
        %1858 = vmatpush2.msra.mxu0 0.0
        %1859 = vmatprep.subr.mxu0 0.0
        %1860 = vmatpush2.msra.mxu0 0.0
        %1861 = vmatprep.subr.mxu0 0.0
        %1862 = vmatpush2.msra.mxu0 0.0
        %1863 = vmatprep.subr.mxu0 0.0
        %1864 = vmatpush2.msra.mxu0 0.0
        %1865 = vmatprep.subr.mxu0 0.0
        %1866 = vmatpush2.msra.mxu0 0.0
        %1867 = vmatprep.subr.mxu0 0.0
        %1868 = vmatpush2.msra.mxu0 0.0
        %1869 = vmatprep.subr.mxu0 0.0
        %1870 = vmatpush2.msra.mxu0 0.0
        %1871 = vmatprep.subr.mxu0 0.0
        %1872 = vmatpush2.msra.mxu0 0.0
        %1873 = vmatprep.subr.mxu0 0.0
        %1874 = vmatpush2.msra.mxu0 0.0
        %1875 = vmatprep.subr.mxu0 0.0
        %1876 = vmatpush2.msra.mxu0 0.0
        %1877 = vmatprep.subr.mxu0 0.0
        %1878 = vmatpush2.msra.mxu0 0.0
        %1879 = vmatprep.subr.mxu0 0.0
        %1880 = vmatpush2.msra.mxu0 0.0
        %1881 = vmatprep.subr.mxu0 0.0
        %1882 = vmatpush2.msra.mxu0 0.0
        %1883 = vmatprep.subr.mxu0 0.0
        %1884 = vmatpush2.msra.mxu0 0.0
        %1885 = vmatprep.subr.mxu0 0.0
        %1886 = vmatpush2.msra.mxu0 0.0
        %1887 = vmatprep.mubr.f32.mxu0 0.0
        %1888 = vmatmul.mubr.f32.gmra.mxu0 %v1821
        %v1889 = vpop.f32.mrf.mxu0
        %v1890 = vadd.f32 0.0, %v1889
        %v1891 = vpop.f32.mrf.mxu0
        %1892 = vdwg.mxu0
        %v1894 = vsel %vm1012, %v1652, 0
        %1896 = vmatprep.subr.mxu0 0.0
        %1897 = vmatpush1.msra.mxu0 0.0
        %1898 = vmatprep.subr.mxu0 0.0
        %1899 = vmatpush1.msra.mxu0 0.0
        %1900 = vmatprep.subr.mxu0 0.0
        %1901 = vmatpush1.msra.mxu0 0.0
        %1902 = vmatprep.subr.mxu0 0.0
        %1903 = vmatpush1.msra.mxu0 0.0
        %1904 = vmatprep.subr.mxu0 0.0
        %1905 = vmatpush1.msra.mxu0 0.0
        %1906 = vmatprep.subr.mxu0 0.0
        %1907 = vmatpush1.msra.mxu0 0.0
        %1908 = vmatprep.subr.mxu0 0.0
        %1909 = vmatpush1.msra.mxu0 0.0
        %1910 = vmatprep.subr.mxu0 0.0
        %1911 = vmatpush1.msra.mxu0 0.0
        %1912 = vmatprep.subr.mxu0 0.0
        %1913 = vmatpush1.msra.mxu0 0.0
        %1914 = vmatprep.subr.mxu0 0.0
        %1915 = vmatpush1.msra.mxu0 0.0
        %1916 = vmatprep.subr.mxu0 0.0
        %1917 = vmatpush1.msra.mxu0 0.0
        %1918 = vmatprep.subr.mxu0 0.0
        %1919 = vmatpush1.msra.mxu0 0.0
        %1920 = vmatprep.subr.mxu0 0.0
        %1921 = vmatpush1.msra.mxu0 0.0
        %1922 = vmatprep.subr.mxu0 0.0
        %1923 = vmatpush1.msra.mxu0 0.0
        %1924 = vmatprep.subr.mxu0 0.0
        %1925 = vmatpush1.msra.mxu0 %v896
        %1926 = vmatprep.subr.mxu0 0.0
        %1927 = vmatpush1.msra.mxu0 %v895
        %1928 = vmatprep.subr.mxu0 0.0
        %1929 = vmatpush2.msra.mxu0 0.0
        %1930 = vmatprep.subr.mxu0 0.0
        %1931 = vmatpush2.msra.mxu0 0.0
        %1932 = vmatprep.subr.mxu0 0.0
        %1933 = vmatpush2.msra.mxu0 0.0
        %1934 = vmatprep.subr.mxu0 0.0
        %1935 = vmatpush2.msra.mxu0 0.0
        %1936 = vmatprep.subr.mxu0 0.0
        %1937 = vmatpush2.msra.mxu0 0.0
        %1938 = vmatprep.subr.mxu0 0.0
        %1939 = vmatpush2.msra.mxu0 0.0
        %1940 = vmatprep.subr.mxu0 0.0
        %1941 = vmatpush2.msra.mxu0 0.0
        %1942 = vmatprep.subr.mxu0 0.0
        %1943 = vmatpush2.msra.mxu0 0.0
        %1944 = vmatprep.subr.mxu0 0.0
        %1945 = vmatpush2.msra.mxu0 0.0
        %1946 = vmatprep.subr.mxu0 0.0
        %1947 = vmatpush2.msra.mxu0 0.0
        %1948 = vmatprep.subr.mxu0 0.0
        %1949 = vmatpush2.msra.mxu0 0.0
        %1950 = vmatprep.subr.mxu0 0.0
        %1951 = vmatpush2.msra.mxu0 0.0
        %1952 = vmatprep.subr.mxu0 0.0
        %1953 = vmatpush2.msra.mxu0 0.0
        %1954 = vmatprep.subr.mxu0 0.0
        %1955 = vmatpush2.msra.mxu0 0.0
        %1956 = vmatprep.subr.mxu0 0.0
        %1957 = vmatpush2.msra.mxu0 0.0
        %1958 = vmatprep.subr.mxu0 0.0
        %1959 = vmatpush2.msra.mxu0 0.0
        %1960 = vmatprep.mubr.f32.mxu0 0.0
        %1961 = vmatmul.mubr.f32.gmra.mxu0 %v1894
        %v1962 = vpop.f32.mrf.mxu0
        %v1963 = vadd.f32 %v1890, %v1962
        %v1964 = vpop.f32.mrf.mxu0
        %1965 = vdwg.mxu0
        %1966 = vst.msk [vmem:[#allocation2 + $0x8] sm:$0xff] %vm908, %v1963
        %s1967 = scalar_lea.vmem [#allocation6], 16
        %v1968 = vld [vmem:[%s1967] sm:$0xff]
        %vm1969 = vcmp.eq.f32.partialorder %v1968, 0.0
        %v1970 = vsel %vm1969, -1e+30, 0.0
        %1972 = vrot.lane.b32.xlu0 %v998, 96
        %v1973 = vpop.permute.xlu0 %1972
        %v1974 = vsel %vm1012, %v998, 0
        %v1976 = vsel %vm1012, %v1973, 0
        %1978 = vmatprep.subr.mxu0 0.0
        %1979 = vmatpush1.xpose.msra.mxu0 0.0
        %1980 = vmatprep.subr.mxu0 0.0
        %1981 = vmatpush1.xpose.msra.mxu0 0.0
        %1982 = vmatprep.subr.mxu0 0.0
        %1983 = vmatpush1.xpose.msra.mxu0 0.0
        %1984 = vmatprep.subr.mxu0 0.0
        %1985 = vmatpush1.xpose.msra.mxu0 0.0
        %1986 = vmatprep.subr.mxu0 0.0
        %1987 = vmatpush1.xpose.msra.mxu0 0.0
        %1988 = vmatprep.subr.mxu0 0.0
        %1989 = vmatpush1.xpose.msra.mxu0 0.0
        %1990 = vmatprep.subr.mxu0 0.0
        %1991 = vmatpush1.xpose.msra.mxu0 0.0
        %1992 = vmatprep.subr.mxu0 0.0
        %1993 = vmatpush1.xpose.msra.mxu0 0.0
        %1994 = vmatprep.subr.mxu0 0.0
        %1995 = vmatpush1.xpose.msra.mxu0 0.0
        %1996 = vmatprep.subr.mxu0 0.0
        %1997 = vmatpush1.xpose.msra.mxu0 0.0
        %1998 = vmatprep.subr.mxu0 0.0
        %1999 = vmatpush1.xpose.msra.mxu0 0.0
        %2000 = vmatprep.subr.mxu0 0.0
        %2001 = vmatpush1.xpose.msra.mxu0 0.0
        %2002 = vmatprep.subr.mxu0 0.0
        %2003 = vmatpush1.xpose.msra.mxu0 0.0
        %2004 = vmatprep.subr.mxu0 0.0
        %2005 = vmatpush1.xpose.msra.mxu0 0.0
        %2006 = vmatprep.subr.mxu0 0.0
        %2007 = vmatpush1.xpose.msra.mxu0 0.0
        %2008 = vmatprep.subr.mxu0 0.0
        %2009 = vmatpush1.xpose.msra.mxu0 %v1976
        %2010 = vmatprep.subr.mxu0 0.0
        %2011 = vmatpush2.xpose.msra.mxu0 0.0
        %2012 = vmatprep.subr.mxu0 0.0
        %2013 = vmatpush2.xpose.msra.mxu0 0.0
        %2014 = vmatprep.subr.mxu0 0.0
        %2015 = vmatpush2.xpose.msra.mxu0 0.0
        %2016 = vmatprep.subr.mxu0 0.0
        %2017 = vmatpush2.xpose.msra.mxu0 0.0
        %2018 = vmatprep.subr.mxu0 0.0
        %2019 = vmatpush2.xpose.msra.mxu0 0.0
        %2020 = vmatprep.subr.mxu0 0.0
        %2021 = vmatpush2.xpose.msra.mxu0 0.0
        %2022 = vmatprep.subr.mxu0 0.0
        %2023 = vmatpush2.xpose.msra.mxu0 0.0
        %2024 = vmatprep.subr.mxu0 0.0
        %2025 = vmatpush2.xpose.msra.mxu0 0.0
        %2026 = vmatprep.subr.mxu0 0.0
        %2027 = vmatpush2.xpose.msra.mxu0 0.0
        %2028 = vmatprep.subr.mxu0 0.0
        %2029 = vmatpush2.xpose.msra.mxu0 0.0
        %2030 = vmatprep.subr.mxu0 0.0
        %2031 = vmatpush2.xpose.msra.mxu0 0.0
        %2032 = vmatprep.subr.mxu0 0.0
        %2033 = vmatpush2.xpose.msra.mxu0 0.0
        %2034 = vmatprep.subr.mxu0 0.0
        %2035 = vmatpush2.xpose.msra.mxu0 0.0
        %2036 = vmatprep.subr.mxu0 0.0
        %2037 = vmatpush2.xpose.msra.mxu0 0.0
        %2038 = vmatprep.subr.mxu0 0.0
        %2039 = vmatpush2.xpose.msra.mxu0 0.0
        %2040 = vmatprep.subr.mxu0 0.0
        %2041 = vmatpush2.xpose.msra.mxu0 0.0
        %2042 = vmatprep.mubr.f32.mxu0 0.0
        %2043 = vmatmul.mubr.f32.gmra.mxu0 %v1974
        %v2044 = vpop.f32.mrf.mxu0
        %v2045 = vadd.f32 %v1970, %v2044
        %v2046 = vpop.f32.mrf.mxu0
        %2047 = vdwg.mxu0
        %v2048 = vsel %vm1087, %v2045, -inf
        %2049 = vmax.xlane.f32.xlu0 %v2048
        %v2050 = vpop.xlane.xlu0 %2049
        %v2051 = vsub.f32 %v2045, %v2050
        %v2052 = vmul.f32 %v2051, 1.442695
        %v2053 = vpow.pop %v2052
        %v2054 = vsel %vm1087, %v2053, 0.0
        %2055 = vadd.xlane.f32.xlu0 %v2054
        %v2056 = vpop.xlane.xlu0 %2055
        %v2057 = vrcp.pop %v2056
        %v2058 = vmul.f32 %v2053, %v2057
        %2059 = vrot.lane.b32.xlu0 %v998, 64
        %v2060 = vpop.permute.xlu0 %2059
        %v2063 = vsel %vm1087, %v2058, 0
        %2065 = vmatprep.subr.mxu0 0.0
        %2066 = vmatpush1.msra.mxu0 0.0
        %2067 = vmatprep.subr.mxu0 0.0
        %2068 = vmatpush1.msra.mxu0 0.0
        %2069 = vmatprep.subr.mxu0 0.0
        %2070 = vmatpush1.msra.mxu0 0.0
        %2071 = vmatprep.subr.mxu0 0.0
        %2072 = vmatpush1.msra.mxu0 0.0
        %2073 = vmatprep.subr.mxu0 0.0
        %2074 = vmatpush1.msra.mxu0 0.0
        %2075 = vmatprep.subr.mxu0 0.0
        %2076 = vmatpush1.msra.mxu0 0.0
        %2077 = vmatprep.subr.mxu0 0.0
        %2078 = vmatpush1.msra.mxu0 0.0
        %2079 = vmatprep.subr.mxu0 0.0
        %2080 = vmatpush1.msra.mxu0 0.0
        %2081 = vmatprep.subr.mxu0 0.0
        %2082 = vmatpush1.msra.mxu0 0.0
        %2083 = vmatprep.subr.mxu0 0.0
        %2084 = vmatpush1.msra.mxu0 0.0
        %2085 = vmatprep.subr.mxu0 0.0
        %2086 = vmatpush1.msra.mxu0 0.0
        %2087 = vmatprep.subr.mxu0 0.0
        %2088 = vmatpush1.msra.mxu0 0.0
        %2089 = vmatprep.subr.mxu0 0.0
        %2090 = vmatpush1.msra.mxu0 0.0
        %2091 = vmatprep.subr.mxu0 0.0
        %2092 = vmatpush1.msra.mxu0 0.0
        %2093 = vmatprep.subr.mxu0 0.0
        %2094 = vmatpush1.msra.mxu0 0.0
        %2095 = vmatprep.subr.mxu0 0.0
        %2096 = vmatpush1.msra.mxu0 %v2060
        %2097 = vmatprep.subr.mxu0 0.0
        %2098 = vmatpush2.msra.mxu0 0.0
        %2099 = vmatprep.subr.mxu0 0.0
        %2100 = vmatpush2.msra.mxu0 0.0
        %2101 = vmatprep.subr.mxu0 0.0
        %2102 = vmatpush2.msra.mxu0 0.0
        %2103 = vmatprep.subr.mxu0 0.0
        %2104 = vmatpush2.msra.mxu0 0.0
        %2105 = vmatprep.subr.mxu0 0.0
        %2106 = vmatpush2.msra.mxu0 0.0
        %2107 = vmatprep.subr.mxu0 0.0
        %2108 = vmatpush2.msra.mxu0 0.0
        %2109 = vmatprep.subr.mxu0 0.0
        %2110 = vmatpush2.msra.mxu0 0.0
        %2111 = vmatprep.subr.mxu0 0.0
        %2112 = vmatpush2.msra.mxu0 0.0
        %2113 = vmatprep.subr.mxu0 0.0
        %2114 = vmatpush2.msra.mxu0 0.0
        %2115 = vmatprep.subr.mxu0 0.0
        %2116 = vmatpush2.msra.mxu0 0.0
        %2117 = vmatprep.subr.mxu0 0.0
        %2118 = vmatpush2.msra.mxu0 0.0
        %2119 = vmatprep.subr.mxu0 0.0
        %2120 = vmatpush2.msra.mxu0 0.0
        %2121 = vmatprep.subr.mxu0 0.0
        %2122 = vmatpush2.msra.mxu0 0.0
        %2123 = vmatprep.subr.mxu0 0.0
        %2124 = vmatpush2.msra.mxu0 0.0
        %2125 = vmatprep.subr.mxu0 0.0
        %2126 = vmatpush2.msra.mxu0 0.0
        %2127 = vmatprep.subr.mxu0 0.0
        %2128 = vmatpush2.msra.mxu0 0.0
        %2129 = vmatprep.mubr.f32.mxu0 0.0
        %2130 = vmatmul.mubr.f32.gmra.mxu0 %v2063
        %v2131 = vpop.f32.mrf.mxu0
        %v2132 = vadd.f32 0.0, %v2131
        %v2133 = vpop.f32.mrf.mxu0
        %2134 = vdwg.mxu0
        %2135 = vrot.lane.b32.xlu0 %v998, 112
        %v2136 = vpop.permute.xlu0 %2135
        %2137 = vrot.lane.b32.xlu0 %v998, 80
        %v2138 = vpop.permute.xlu0 %2137
        %v2139 = vsel %vm1012, %v2136, 0
        %v2141 = vsel %vm1012, %v2138, 0
        %2143 = vmatprep.subr.mxu0 0.0
        %2144 = vmatpush1.xpose.msra.mxu0 0.0
        %2145 = vmatprep.subr.mxu0 0.0
        %2146 = vmatpush1.xpose.msra.mxu0 0.0
        %2147 = vmatprep.subr.mxu0 0.0
        %2148 = vmatpush1.xpose.msra.mxu0 0.0
        %2149 = vmatprep.subr.mxu0 0.0
        %2150 = vmatpush1.xpose.msra.mxu0 0.0
        %2151 = vmatprep.subr.mxu0 0.0
        %2152 = vmatpush1.xpose.msra.mxu0 0.0
        %2153 = vmatprep.subr.mxu0 0.0
        %2154 = vmatpush1.xpose.msra.mxu0 0.0
        %2155 = vmatprep.subr.mxu0 0.0
        %2156 = vmatpush1.xpose.msra.mxu0 0.0
        %2157 = vmatprep.subr.mxu0 0.0
        %2158 = vmatpush1.xpose.msra.mxu0 0.0
        %2159 = vmatprep.subr.mxu0 0.0
        %2160 = vmatpush1.xpose.msra.mxu0 0.0
        %2161 = vmatprep.subr.mxu0 0.0
        %2162 = vmatpush1.xpose.msra.mxu0 0.0
        %2163 = vmatprep.subr.mxu0 0.0
        %2164 = vmatpush1.xpose.msra.mxu0 0.0
        %2165 = vmatprep.subr.mxu0 0.0
        %2166 = vmatpush1.xpose.msra.mxu0 0.0
        %2167 = vmatprep.subr.mxu0 0.0
        %2168 = vmatpush1.xpose.msra.mxu0 0.0
        %2169 = vmatprep.subr.mxu0 0.0
        %2170 = vmatpush1.xpose.msra.mxu0 0.0
        %2171 = vmatprep.subr.mxu0 0.0
        %2172 = vmatpush1.xpose.msra.mxu0 0.0
        %2173 = vmatprep.subr.mxu0 0.0
        %2174 = vmatpush1.xpose.msra.mxu0 %v2141
        %2175 = vmatprep.subr.mxu0 0.0
        %2176 = vmatpush2.xpose.msra.mxu0 0.0
        %2177 = vmatprep.subr.mxu0 0.0
        %2178 = vmatpush2.xpose.msra.mxu0 0.0
        %2179 = vmatprep.subr.mxu0 0.0
        %2180 = vmatpush2.xpose.msra.mxu0 0.0
        %2181 = vmatprep.subr.mxu0 0.0
        %2182 = vmatpush2.xpose.msra.mxu0 0.0
        %2183 = vmatprep.subr.mxu0 0.0
        %2184 = vmatpush2.xpose.msra.mxu0 0.0
        %2185 = vmatprep.subr.mxu0 0.0
        %2186 = vmatpush2.xpose.msra.mxu0 0.0
        %2187 = vmatprep.subr.mxu0 0.0
        %2188 = vmatpush2.xpose.msra.mxu0 0.0
        %2189 = vmatprep.subr.mxu0 0.0
        %2190 = vmatpush2.xpose.msra.mxu0 0.0
        %2191 = vmatprep.subr.mxu0 0.0
        %2192 = vmatpush2.xpose.msra.mxu0 0.0
        %2193 = vmatprep.subr.mxu0 0.0
        %2194 = vmatpush2.xpose.msra.mxu0 0.0
        %2195 = vmatprep.subr.mxu0 0.0
        %2196 = vmatpush2.xpose.msra.mxu0 0.0
        %2197 = vmatprep.subr.mxu0 0.0
        %2198 = vmatpush2.xpose.msra.mxu0 0.0
        %2199 = vmatprep.subr.mxu0 0.0
        %2200 = vmatpush2.xpose.msra.mxu0 0.0
        %2201 = vmatprep.subr.mxu0 0.0
        %2202 = vmatpush2.xpose.msra.mxu0 0.0
        %2203 = vmatprep.subr.mxu0 0.0
        %2204 = vmatpush2.xpose.msra.mxu0 0.0
        %2205 = vmatprep.subr.mxu0 0.0
        %2206 = vmatpush2.xpose.msra.mxu0 0.0
        %2207 = vmatprep.mubr.f32.mxu0 0.0
        %2208 = vmatmul.mubr.f32.gmra.mxu0 %v2139
        %v2209 = vpop.f32.mrf.mxu0
        %v2210 = vadd.f32 %v1970, %v2209
        %v2211 = vpop.f32.mrf.mxu0
        %2212 = vdwg.mxu0
        %v2213 = vsel %vm1087, %v2210, -inf
        %2214 = vmax.xlane.f32.xlu0 %v2213
        %v2215 = vpop.xlane.xlu0 %2214
        %v2216 = vsub.f32 %v2210, %v2215
        %v2217 = vmul.f32 %v2216, 1.442695
        %v2218 = vpow.pop %v2217
        %v2219 = vsel %vm1087, %v2218, 0.0
        %2220 = vadd.xlane.f32.xlu0 %v2219
        %v2221 = vpop.xlane.xlu0 %2220
        %v2222 = vrcp.pop %v2221
        %v2223 = vmul.f32 %v2218, %v2222
        %2224 = vrot.lane.b32.xlu0 %v998, 48
        %v2225 = vpop.permute.xlu0 %2224
        %v2228 = vsel %vm1087, %v2223, 0
        %2230 = vmatprep.subr.mxu0 0.0
        %2231 = vmatpush1.msra.mxu0 0.0
        %2232 = vmatprep.subr.mxu0 0.0
        %2233 = vmatpush1.msra.mxu0 0.0
        %2234 = vmatprep.subr.mxu0 0.0
        %2235 = vmatpush1.msra.mxu0 0.0
        %2236 = vmatprep.subr.mxu0 0.0
        %2237 = vmatpush1.msra.mxu0 0.0
        %2238 = vmatprep.subr.mxu0 0.0
        %2239 = vmatpush1.msra.mxu0 0.0
        %2240 = vmatprep.subr.mxu0 0.0
        %2241 = vmatpush1.msra.mxu0 0.0
        %2242 = vmatprep.subr.mxu0 0.0
        %2243 = vmatpush1.msra.mxu0 0.0
        %2244 = vmatprep.subr.mxu0 0.0
        %2245 = vmatpush1.msra.mxu0 0.0
        %2246 = vmatprep.subr.mxu0 0.0
        %2247 = vmatpush1.msra.mxu0 0.0
        %2248 = vmatprep.subr.mxu0 0.0
        %2249 = vmatpush1.msra.mxu0 0.0
        %2250 = vmatprep.subr.mxu0 0.0
        %2251 = vmatpush1.msra.mxu0 0.0
        %2252 = vmatprep.subr.mxu0 0.0
        %2253 = vmatpush1.msra.mxu0 0.0
        %2254 = vmatprep.subr.mxu0 0.0
        %2255 = vmatpush1.msra.mxu0 0.0
        %2256 = vmatprep.subr.mxu0 0.0
        %2257 = vmatpush1.msra.mxu0 0.0
        %2258 = vmatprep.subr.mxu0 0.0
        %2259 = vmatpush1.msra.mxu0 0.0
        %2260 = vmatprep.subr.mxu0 0.0
        %2261 = vmatpush1.msra.mxu0 %v2225
        %2262 = vmatprep.subr.mxu0 0.0
        %2263 = vmatpush2.msra.mxu0 0.0
        %2264 = vmatprep.subr.mxu0 0.0
        %2265 = vmatpush2.msra.mxu0 0.0
        %2266 = vmatprep.subr.mxu0 0.0
        %2267 = vmatpush2.msra.mxu0 0.0
        %2268 = vmatprep.subr.mxu0 0.0
        %2269 = vmatpush2.msra.mxu0 0.0
        %2270 = vmatprep.subr.mxu0 0.0
        %2271 = vmatpush2.msra.mxu0 0.0
        %2272 = vmatprep.subr.mxu0 0.0
        %2273 = vmatpush2.msra.mxu0 0.0
        %2274 = vmatprep.subr.mxu0 0.0
        %2275 = vmatpush2.msra.mxu0 0.0
        %2276 = vmatprep.subr.mxu0 0.0
        %2277 = vmatpush2.msra.mxu0 0.0
        %2278 = vmatprep.subr.mxu0 0.0
        %2279 = vmatpush2.msra.mxu0 0.0
        %2280 = vmatprep.subr.mxu0 0.0
        %2281 = vmatpush2.msra.mxu0 0.0
        %2282 = vmatprep.subr.mxu0 0.0
        %2283 = vmatpush2.msra.mxu0 0.0
        %2284 = vmatprep.subr.mxu0 0.0
        %2285 = vmatpush2.msra.mxu0 0.0
        %2286 = vmatprep.subr.mxu0 0.0
        %2287 = vmatpush2.msra.mxu0 0.0
        %2288 = vmatprep.subr.mxu0 0.0
        %2289 = vmatpush2.msra.mxu0 0.0
        %2290 = vmatprep.subr.mxu0 0.0
        %2291 = vmatpush2.msra.mxu0 0.0
        %2292 = vmatprep.subr.mxu0 0.0
        %2293 = vmatpush2.msra.mxu0 0.0
        %2294 = vmatprep.mubr.f32.mxu0 0.0
        %2295 = vmatmul.mubr.f32.gmra.mxu0 %v2228
        %v2296 = vpop.f32.mrf.mxu0
        %v2297 = vadd.f32 0.0, %v2296
        %v2298 = vpop.f32.mrf.mxu0
        %2299 = vdwg.mxu0
        %v2301 = vsel %vm1012, %v2297, 0
        %2303 = vmatprep.subr.mxu0 0.0
        %2304 = vmatpush1.msra.mxu0 0.0
        %2305 = vmatprep.subr.mxu0 0.0
        %2306 = vmatpush1.msra.mxu0 0.0
        %2307 = vmatprep.subr.mxu0 0.0
        %2308 = vmatpush1.msra.mxu0 0.0
        %2309 = vmatprep.subr.mxu0 0.0
        %2310 = vmatpush1.msra.mxu0 0.0
        %2311 = vmatprep.subr.mxu0 0.0
        %2312 = vmatpush1.msra.mxu0 0.0
        %2313 = vmatprep.subr.mxu0 0.0
        %2314 = vmatpush1.msra.mxu0 0.0
        %2315 = vmatprep.subr.mxu0 0.0
        %2316 = vmatpush1.msra.mxu0 0.0
        %2317 = vmatprep.subr.mxu0 0.0
        %2318 = vmatpush1.msra.mxu0 0.0
        %2319 = vmatprep.subr.mxu0 0.0
        %2320 = vmatpush1.msra.mxu0 0.0
        %2321 = vmatprep.subr.mxu0 0.0
        %2322 = vmatpush1.msra.mxu0 0.0
        %2323 = vmatprep.subr.mxu0 0.0
        %2324 = vmatpush1.msra.mxu0 0.0
        %2325 = vmatprep.subr.mxu0 0.0
        %2326 = vmatpush1.msra.mxu0 0.0
        %2327 = vmatprep.subr.mxu0 0.0
        %2328 = vmatpush1.msra.mxu0 0.0
        %2329 = vmatprep.subr.mxu0 0.0
        %2330 = vmatpush1.msra.mxu0 0.0
        %2331 = vmatprep.subr.mxu0 0.0
        %2332 = vmatpush1.msra.mxu0 %v898
        %2333 = vmatprep.subr.mxu0 0.0
        %2334 = vmatpush1.msra.mxu0 %v897
        %2335 = vmatprep.subr.mxu0 0.0
        %2336 = vmatpush2.msra.mxu0 0.0
        %2337 = vmatprep.subr.mxu0 0.0
        %2338 = vmatpush2.msra.mxu0 0.0
        %2339 = vmatprep.subr.mxu0 0.0
        %2340 = vmatpush2.msra.mxu0 0.0
        %2341 = vmatprep.subr.mxu0 0.0
        %2342 = vmatpush2.msra.mxu0 0.0
        %2343 = vmatprep.subr.mxu0 0.0
        %2344 = vmatpush2.msra.mxu0 0.0
        %2345 = vmatprep.subr.mxu0 0.0
        %2346 = vmatpush2.msra.mxu0 0.0
        %2347 = vmatprep.subr.mxu0 0.0
        %2348 = vmatpush2.msra.mxu0 0.0
        %2349 = vmatprep.subr.mxu0 0.0
        %2350 = vmatpush2.msra.mxu0 0.0
        %2351 = vmatprep.subr.mxu0 0.0
        %2352 = vmatpush2.msra.mxu0 0.0
        %2353 = vmatprep.subr.mxu0 0.0
        %2354 = vmatpush2.msra.mxu0 0.0
        %2355 = vmatprep.subr.mxu0 0.0
        %2356 = vmatpush2.msra.mxu0 0.0
        %2357 = vmatprep.subr.mxu0 0.0
        %2358 = vmatpush2.msra.mxu0 0.0
        %2359 = vmatprep.subr.mxu0 0.0
        %2360 = vmatpush2.msra.mxu0 0.0
        %2361 = vmatprep.subr.mxu0 0.0
        %2362 = vmatpush2.msra.mxu0 0.0
        %2363 = vmatprep.subr.mxu0 0.0
        %2364 = vmatpush2.msra.mxu0 0.0
        %2365 = vmatprep.subr.mxu0 0.0
        %2366 = vmatpush2.msra.mxu0 0.0
        %2367 = vmatprep.mubr.f32.mxu0 0.0
        %2368 = vmatmul.mubr.f32.gmra.mxu0 %v2301
        %v2369 = vpop.f32.mrf.mxu0
        %v2370 = vadd.f32 0.0, %v2369
        %v2371 = vpop.f32.mrf.mxu0
        %2372 = vdwg.mxu0
        %v2374 = vsel %vm1012, %v2132, 0
        %2376 = vmatprep.subr.mxu0 0.0
        %2377 = vmatpush1.msra.mxu0 0.0
        %2378 = vmatprep.subr.mxu0 0.0
        %2379 = vmatpush1.msra.mxu0 0.0
        %2380 = vmatprep.subr.mxu0 0.0
        %2381 = vmatpush1.msra.mxu0 0.0
        %2382 = vmatprep.subr.mxu0 0.0
        %2383 = vmatpush1.msra.mxu0 0.0
        %2384 = vmatprep.subr.mxu0 0.0
        %2385 = vmatpush1.msra.mxu0 0.0
        %2386 = vmatprep.subr.mxu0 0.0
        %2387 = vmatpush1.msra.mxu0 0.0
        %2388 = vmatprep.subr.mxu0 0.0
        %2389 = vmatpush1.msra.mxu0 0.0
        %2390 = vmatprep.subr.mxu0 0.0
        %2391 = vmatpush1.msra.mxu0 0.0
        %2392 = vmatprep.subr.mxu0 0.0
        %2393 = vmatpush1.msra.mxu0 0.0
        %2394 = vmatprep.subr.mxu0 0.0
        %2395 = vmatpush1.msra.mxu0 0.0
        %2396 = vmatprep.subr.mxu0 0.0
        %2397 = vmatpush1.msra.mxu0 0.0
        %2398 = vmatprep.subr.mxu0 0.0
        %2399 = vmatpush1.msra.mxu0 0.0
        %2400 = vmatprep.subr.mxu0 0.0
        %2401 = vmatpush1.msra.mxu0 0.0
        %2402 = vmatprep.subr.mxu0 0.0
        %2403 = vmatpush1.msra.mxu0 0.0
        %2404 = vmatprep.subr.mxu0 0.0
        %2405 = vmatpush1.msra.mxu0 %v896
        %2406 = vmatprep.subr.mxu0 0.0
        %2407 = vmatpush1.msra.mxu0 %v895
        %2408 = vmatprep.subr.mxu0 0.0
        %2409 = vmatpush2.msra.mxu0 0.0
        %2410 = vmatprep.subr.mxu0 0.0
        %2411 = vmatpush2.msra.mxu0 0.0
        %2412 = vmatprep.subr.mxu0 0.0
        %2413 = vmatpush2.msra.mxu0 0.0
        %2414 = vmatprep.subr.mxu0 0.0
        %2415 = vmatpush2.msra.mxu0 0.0
        %2416 = vmatprep.subr.mxu0 0.0
        %2417 = vmatpush2.msra.mxu0 0.0
        %2418 = vmatprep.subr.mxu0 0.0
        %2419 = vmatpush2.msra.mxu0 0.0
        %2420 = vmatprep.subr.mxu0 0.0
        %2421 = vmatpush2.msra.mxu0 0.0
        %2422 = vmatprep.subr.mxu0 0.0
        %2423 = vmatpush2.msra.mxu0 0.0
        %2424 = vmatprep.subr.mxu0 0.0
        %2425 = vmatpush2.msra.mxu0 0.0
        %2426 = vmatprep.subr.mxu0 0.0
        %2427 = vmatpush2.msra.mxu0 0.0
        %2428 = vmatprep.subr.mxu0 0.0
        %2429 = vmatpush2.msra.mxu0 0.0
        %2430 = vmatprep.subr.mxu0 0.0
        %2431 = vmatpush2.msra.mxu0 0.0
        %2432 = vmatprep.subr.mxu0 0.0
        %2433 = vmatpush2.msra.mxu0 0.0
        %2434 = vmatprep.subr.mxu0 0.0
        %2435 = vmatpush2.msra.mxu0 0.0
        %2436 = vmatprep.subr.mxu0 0.0
        %2437 = vmatpush2.msra.mxu0 0.0
        %2438 = vmatprep.subr.mxu0 0.0
        %2439 = vmatpush2.msra.mxu0 0.0
        %2440 = vmatprep.mubr.f32.mxu0 0.0
        %2441 = vmatmul.mubr.f32.gmra.mxu0 %v2374
        %v2442 = vpop.f32.mrf.mxu0
        %v2443 = vadd.f32 %v2370, %v2442
        %v2444 = vpop.f32.mrf.mxu0
        %2445 = vdwg.mxu0
        %2446 = vst.msk [vmem:[#allocation2 + $0x10] sm:$0xff] %vm908, %v2443
        %s2447 = scalar_lea.vmem [#allocation6], 24
        %v2448 = vld [vmem:[%s2447] sm:$0xff]
        %vm2449 = vcmp.eq.f32.partialorder %v2448, 0.0
        %v2450 = vsel %vm2449, -1e+30, 0.0
        %2452 = vrot.lane.b32.xlu0 %v1003, 96
        %v2453 = vpop.permute.xlu0 %2452
        %v2454 = vsel %vm1012, %v1003, 0
        %v2456 = vsel %vm1012, %v2453, 0
        %2458 = vmatprep.subr.mxu0 0.0
        %2459 = vmatpush1.xpose.msra.mxu0 0.0
        %2460 = vmatprep.subr.mxu0 0.0
        %2461 = vmatpush1.xpose.msra.mxu0 0.0
        %2462 = vmatprep.subr.mxu0 0.0
        %2463 = vmatpush1.xpose.msra.mxu0 0.0
        %2464 = vmatprep.subr.mxu0 0.0
        %2465 = vmatpush1.xpose.msra.mxu0 0.0
        %2466 = vmatprep.subr.mxu0 0.0
        %2467 = vmatpush1.xpose.msra.mxu0 0.0
        %2468 = vmatprep.subr.mxu0 0.0
        %2469 = vmatpush1.xpose.msra.mxu0 0.0
        %2470 = vmatprep.subr.mxu0 0.0
        %2471 = vmatpush1.xpose.msra.mxu0 0.0
        %2472 = vmatprep.subr.mxu0 0.0
        %2473 = vmatpush1.xpose.msra.mxu0 0.0
        %2474 = vmatprep.subr.mxu0 0.0
        %2475 = vmatpush1.xpose.msra.mxu0 0.0
        %2476 = vmatprep.subr.mxu0 0.0
        %2477 = vmatpush1.xpose.msra.mxu0 0.0
        %2478 = vmatprep.subr.mxu0 0.0
        %2479 = vmatpush1.xpose.msra.mxu0 0.0
        %2480 = vmatprep.subr.mxu0 0.0
        %2481 = vmatpush1.xpose.msra.mxu0 0.0
        %2482 = vmatprep.subr.mxu0 0.0
        %2483 = vmatpush1.xpose.msra.mxu0 0.0
        %2484 = vmatprep.subr.mxu0 0.0
        %2485 = vmatpush1.xpose.msra.mxu0 0.0
        %2486 = vmatprep.subr.mxu0 0.0
        %2487 = vmatpush1.xpose.msra.mxu0 0.0
        %2488 = vmatprep.subr.mxu0 0.0
        %2489 = vmatpush1.xpose.msra.mxu0 %v2456
        %2490 = vmatprep.subr.mxu0 0.0
        %2491 = vmatpush2.xpose.msra.mxu0 0.0
        %2492 = vmatprep.subr.mxu0 0.0
        %2493 = vmatpush2.xpose.msra.mxu0 0.0
        %2494 = vmatprep.subr.mxu0 0.0
        %2495 = vmatpush2.xpose.msra.mxu0 0.0
        %2496 = vmatprep.subr.mxu0 0.0
        %2497 = vmatpush2.xpose.msra.mxu0 0.0
        %2498 = vmatprep.subr.mxu0 0.0
        %2499 = vmatpush2.xpose.msra.mxu0 0.0
        %2500 = vmatprep.subr.mxu0 0.0
        %2501 = vmatpush2.xpose.msra.mxu0 0.0
        %2502 = vmatprep.subr.mxu0 0.0
        %2503 = vmatpush2.xpose.msra.mxu0 0.0
        %2504 = vmatprep.subr.mxu0 0.0
        %2505 = vmatpush2.xpose.msra.mxu0 0.0
        %2506 = vmatprep.subr.mxu0 0.0
        %2507 = vmatpush2.xpose.msra.mxu0 0.0
        %2508 = vmatprep.subr.mxu0 0.0
        %2509 = vmatpush2.xpose.msra.mxu0 0.0
        %2510 = vmatprep.subr.mxu0 0.0
        %2511 = vmatpush2.xpose.msra.mxu0 0.0
        %2512 = vmatprep.subr.mxu0 0.0
        %2513 = vmatpush2.xpose.msra.mxu0 0.0
        %2514 = vmatprep.subr.mxu0 0.0
        %2515 = vmatpush2.xpose.msra.mxu0 0.0
        %2516 = vmatprep.subr.mxu0 0.0
        %2517 = vmatpush2.xpose.msra.mxu0 0.0
        %2518 = vmatprep.subr.mxu0 0.0
        %2519 = vmatpush2.xpose.msra.mxu0 0.0
        %2520 = vmatprep.subr.mxu0 0.0
        %2521 = vmatpush2.xpose.msra.mxu0 0.0
        %2522 = vmatprep.mubr.f32.mxu0 0.0
        %2523 = vmatmul.mubr.f32.gmra.mxu0 %v2454
        %v2524 = vpop.f32.mrf.mxu0
        %v2525 = vadd.f32 %v2450, %v2524
        %v2526 = vpop.f32.mrf.mxu0
        %2527 = vdwg.mxu0
        %v2528 = vsel %vm1087, %v2525, -inf
        %2529 = vmax.xlane.f32.xlu0 %v2528
        %v2530 = vpop.xlane.xlu0 %2529
        %v2531 = vsub.f32 %v2525, %v2530
        %v2532 = vmul.f32 %v2531, 1.442695
        %v2533 = vpow.pop %v2532
        %v2534 = vsel %vm1087, %v2533, 0.0
        %2535 = vadd.xlane.f32.xlu0 %v2534
        %v2536 = vpop.xlane.xlu0 %2535
        %v2537 = vrcp.pop %v2536
        %v2538 = vmul.f32 %v2533, %v2537
        %2539 = vrot.lane.b32.xlu0 %v1003, 64
        %v2540 = vpop.permute.xlu0 %2539
        %v2543 = vsel %vm1087, %v2538, 0
        %2545 = vmatprep.subr.mxu0 0.0
        %2546 = vmatpush1.msra.mxu0 0.0
        %2547 = vmatprep.subr.mxu0 0.0
        %2548 = vmatpush1.msra.mxu0 0.0
        %2549 = vmatprep.subr.mxu0 0.0
        %2550 = vmatpush1.msra.mxu0 0.0
        %2551 = vmatprep.subr.mxu0 0.0
        %2552 = vmatpush1.msra.mxu0 0.0
        %2553 = vmatprep.subr.mxu0 0.0
        %2554 = vmatpush1.msra.mxu0 0.0
        %2555 = vmatprep.subr.mxu0 0.0
        %2556 = vmatpush1.msra.mxu0 0.0
        %2557 = vmatprep.subr.mxu0 0.0
        %2558 = vmatpush1.msra.mxu0 0.0
        %2559 = vmatprep.subr.mxu0 0.0
        %2560 = vmatpush1.msra.mxu0 0.0
        %2561 = vmatprep.subr.mxu0 0.0
        %2562 = vmatpush1.msra.mxu0 0.0
        %2563 = vmatprep.subr.mxu0 0.0
        %2564 = vmatpush1.msra.mxu0 0.0
        %2565 = vmatprep.subr.mxu0 0.0
        %2566 = vmatpush1.msra.mxu0 0.0
        %2567 = vmatprep.subr.mxu0 0.0
        %2568 = vmatpush1.msra.mxu0 0.0
        %2569 = vmatprep.subr.mxu0 0.0
        %2570 = vmatpush1.msra.mxu0 0.0
        %2571 = vmatprep.subr.mxu0 0.0
        %2572 = vmatpush1.msra.mxu0 0.0
        %2573 = vmatprep.subr.mxu0 0.0
        %2574 = vmatpush1.msra.mxu0 0.0
        %2575 = vmatprep.subr.mxu0 0.0
        %2576 = vmatpush1.msra.mxu0 %v2540
        %2577 = vmatprep.subr.mxu0 0.0
        %2578 = vmatpush2.msra.mxu0 0.0
        %2579 = vmatprep.subr.mxu0 0.0
        %2580 = vmatpush2.msra.mxu0 0.0
        %2581 = vmatprep.subr.mxu0 0.0
        %2582 = vmatpush2.msra.mxu0 0.0
        %2583 = vmatprep.subr.mxu0 0.0
        %2584 = vmatpush2.msra.mxu0 0.0
        %2585 = vmatprep.subr.mxu0 0.0
        %2586 = vmatpush2.msra.mxu0 0.0
        %2587 = vmatprep.subr.mxu0 0.0
        %2588 = vmatpush2.msra.mxu0 0.0
        %2589 = vmatprep.subr.mxu0 0.0
        %2590 = vmatpush2.msra.mxu0 0.0
        %2591 = vmatprep.subr.mxu0 0.0
        %2592 = vmatpush2.msra.mxu0 0.0
        %2593 = vmatprep.subr.mxu0 0.0
        %2594 = vmatpush2.msra.mxu0 0.0
        %2595 = vmatprep.subr.mxu0 0.0
        %2596 = vmatpush2.msra.mxu0 0.0
        %2597 = vmatprep.subr.mxu0 0.0
        %2598 = vmatpush2.msra.mxu0 0.0
        %2599 = vmatprep.subr.mxu0 0.0
        %2600 = vmatpush2.msra.mxu0 0.0
        %2601 = vmatprep.subr.mxu0 0.0
        %2602 = vmatpush2.msra.mxu0 0.0
        %2603 = vmatprep.subr.mxu0 0.0
        %2604 = vmatpush2.msra.mxu0 0.0
        %2605 = vmatprep.subr.mxu0 0.0
        %2606 = vmatpush2.msra.mxu0 0.0
        %2607 = vmatprep.subr.mxu0 0.0
        %2608 = vmatpush2.msra.mxu0 0.0
        %2609 = vmatprep.mubr.f32.mxu0 0.0
        %2610 = vmatmul.mubr.f32.gmra.mxu0 %v2543
        %v2611 = vpop.f32.mrf.mxu0
        %v2612 = vadd.f32 0.0, %v2611
        %v2613 = vpop.f32.mrf.mxu0
        %2614 = vdwg.mxu0
        %2615 = vrot.lane.b32.xlu0 %v1003, 112
        %v2616 = vpop.permute.xlu0 %2615
        %2617 = vrot.lane.b32.xlu0 %v1003, 80
        %v2618 = vpop.permute.xlu0 %2617
        %v2619 = vsel %vm1012, %v2616, 0
        %v2621 = vsel %vm1012, %v2618, 0
        %2623 = vmatprep.subr.mxu0 0.0
        %2624 = vmatpush1.xpose.msra.mxu0 0.0
        %2625 = vmatprep.subr.mxu0 0.0
        %2626 = vmatpush1.xpose.msra.mxu0 0.0
        %2627 = vmatprep.subr.mxu0 0.0
        %2628 = vmatpush1.xpose.msra.mxu0 0.0
        %2629 = vmatprep.subr.mxu0 0.0
        %2630 = vmatpush1.xpose.msra.mxu0 0.0
        %2631 = vmatprep.subr.mxu0 0.0
        %2632 = vmatpush1.xpose.msra.mxu0 0.0
        %2633 = vmatprep.subr.mxu0 0.0
        %2634 = vmatpush1.xpose.msra.mxu0 0.0
        %2635 = vmatprep.subr.mxu0 0.0
        %2636 = vmatpush1.xpose.msra.mxu0 0.0
        %2637 = vmatprep.subr.mxu0 0.0
        %2638 = vmatpush1.xpose.msra.mxu0 0.0
        %2639 = vmatprep.subr.mxu0 0.0
        %2640 = vmatpush1.xpose.msra.mxu0 0.0
        %2641 = vmatprep.subr.mxu0 0.0
        %2642 = vmatpush1.xpose.msra.mxu0 0.0
        %2643 = vmatprep.subr.mxu0 0.0
        %2644 = vmatpush1.xpose.msra.mxu0 0.0
        %2645 = vmatprep.subr.mxu0 0.0
        %2646 = vmatpush1.xpose.msra.mxu0 0.0
        %2647 = vmatprep.subr.mxu0 0.0
        %2648 = vmatpush1.xpose.msra.mxu0 0.0
        %2649 = vmatprep.subr.mxu0 0.0
        %2650 = vmatpush1.xpose.msra.mxu0 0.0
        %2651 = vmatprep.subr.mxu0 0.0
        %2652 = vmatpush1.xpose.msra.mxu0 0.0
        %2653 = vmatprep.subr.mxu0 0.0
        %2654 = vmatpush1.xpose.msra.mxu0 %v2621
        %2655 = vmatprep.subr.mxu0 0.0
        %2656 = vmatpush2.xpose.msra.mxu0 0.0
        %2657 = vmatprep.subr.mxu0 0.0
        %2658 = vmatpush2.xpose.msra.mxu0 0.0
        %2659 = vmatprep.subr.mxu0 0.0
        %2660 = vmatpush2.xpose.msra.mxu0 0.0
        %2661 = vmatprep.subr.mxu0 0.0
        %2662 = vmatpush2.xpose.msra.mxu0 0.0
        %2663 = vmatprep.subr.mxu0 0.0
        %2664 = vmatpush2.xpose.msra.mxu0 0.0
        %2665 = vmatprep.subr.mxu0 0.0
        %2666 = vmatpush2.xpose.msra.mxu0 0.0
        %2667 = vmatprep.subr.mxu0 0.0
        %2668 = vmatpush2.xpose.msra.mxu0 0.0
        %2669 = vmatprep.subr.mxu0 0.0
        %2670 = vmatpush2.xpose.msra.mxu0 0.0
        %2671 = vmatprep.subr.mxu0 0.0
        %2672 = vmatpush2.xpose.msra.mxu0 0.0
        %2673 = vmatprep.subr.mxu0 0.0
        %2674 = vmatpush2.xpose.msra.mxu0 0.0
        %2675 = vmatprep.subr.mxu0 0.0
        %2676 = vmatpush2.xpose.msra.mxu0 0.0
        %2677 = vmatprep.subr.mxu0 0.0
        %2678 = vmatpush2.xpose.msra.mxu0 0.0
        %2679 = vmatprep.subr.mxu0 0.0
        %2680 = vmatpush2.xpose.msra.mxu0 0.0
        %2681 = vmatprep.subr.mxu0 0.0
        %2682 = vmatpush2.xpose.msra.mxu0 0.0
        %2683 = vmatprep.subr.mxu0 0.0
        %2684 = vmatpush2.xpose.msra.mxu0 0.0
        %2685 = vmatprep.subr.mxu0 0.0
        %2686 = vmatpush2.xpose.msra.mxu0 0.0
        %2687 = vmatprep.mubr.f32.mxu0 0.0
        %2688 = vmatmul.mubr.f32.gmra.mxu0 %v2619
        %v2689 = vpop.f32.mrf.mxu0
        %v2690 = vadd.f32 %v2450, %v2689
        %v2691 = vpop.f32.mrf.mxu0
        %2692 = vdwg.mxu0
        %v2693 = vsel %vm1087, %v2690, -inf
        %2694 = vmax.xlane.f32.xlu0 %v2693
        %v2695 = vpop.xlane.xlu0 %2694
        %v2696 = vsub.f32 %v2690, %v2695
        %v2697 = vmul.f32 %v2696, 1.442695
        %v2698 = vpow.pop %v2697
        %v2699 = vsel %vm1087, %v2698, 0.0
        %2700 = vadd.xlane.f32.xlu0 %v2699
        %v2701 = vpop.xlane.xlu0 %2700
        %v2702 = vrcp.pop %v2701
        %v2703 = vmul.f32 %v2698, %v2702
        %2704 = vrot.lane.b32.xlu0 %v1003, 48
        %v2705 = vpop.permute.xlu0 %2704
        %v2708 = vsel %vm1087, %v2703, 0
        %2710 = vmatprep.subr.mxu0 0.0
        %2711 = vmatpush1.msra.mxu0 0.0
        %2712 = vmatprep.subr.mxu0 0.0
        %2713 = vmatpush1.msra.mxu0 0.0
        %2714 = vmatprep.subr.mxu0 0.0
        %2715 = vmatpush1.msra.mxu0 0.0
        %2716 = vmatprep.subr.mxu0 0.0
        %2717 = vmatpush1.msra.mxu0 0.0
        %2718 = vmatprep.subr.mxu0 0.0
        %2719 = vmatpush1.msra.mxu0 0.0
        %2720 = vmatprep.subr.mxu0 0.0
        %2721 = vmatpush1.msra.mxu0 0.0
        %2722 = vmatprep.subr.mxu0 0.0
        %2723 = vmatpush1.msra.mxu0 0.0
        %2724 = vmatprep.subr.mxu0 0.0
        %2725 = vmatpush1.msra.mxu0 0.0
        %2726 = vmatprep.subr.mxu0 0.0
        %2727 = vmatpush1.msra.mxu0 0.0
        %2728 = vmatprep.subr.mxu0 0.0
        %2729 = vmatpush1.msra.mxu0 0.0
        %2730 = vmatprep.subr.mxu0 0.0
        %2731 = vmatpush1.msra.mxu0 0.0
        %2732 = vmatprep.subr.mxu0 0.0
        %2733 = vmatpush1.msra.mxu0 0.0
        %2734 = vmatprep.subr.mxu0 0.0
        %2735 = vmatpush1.msra.mxu0 0.0
        %2736 = vmatprep.subr.mxu0 0.0
        %2737 = vmatpush1.msra.mxu0 0.0
        %2738 = vmatprep.subr.mxu0 0.0
        %2739 = vmatpush1.msra.mxu0 0.0
        %2740 = vmatprep.subr.mxu0 0.0
        %2741 = vmatpush1.msra.mxu0 %v2705
        %2742 = vmatprep.subr.mxu0 0.0
        %2743 = vmatpush2.msra.mxu0 0.0
        %2744 = vmatprep.subr.mxu0 0.0
        %2745 = vmatpush2.msra.mxu0 0.0
        %2746 = vmatprep.subr.mxu0 0.0
        %2747 = vmatpush2.msra.mxu0 0.0
        %2748 = vmatprep.subr.mxu0 0.0
        %2749 = vmatpush2.msra.mxu0 0.0
        %2750 = vmatprep.subr.mxu0 0.0
        %2751 = vmatpush2.msra.mxu0 0.0
        %2752 = vmatprep.subr.mxu0 0.0
        %2753 = vmatpush2.msra.mxu0 0.0
        %2754 = vmatprep.subr.mxu0 0.0
        %2755 = vmatpush2.msra.mxu0 0.0
        %2756 = vmatprep.subr.mxu0 0.0
        %2757 = vmatpush2.msra.mxu0 0.0
        %2758 = vmatprep.subr.mxu0 0.0
        %2759 = vmatpush2.msra.mxu0 0.0
        %2760 = vmatprep.subr.mxu0 0.0
        %2761 = vmatpush2.msra.mxu0 0.0
        %2762 = vmatprep.subr.mxu0 0.0
        %2763 = vmatpush2.msra.mxu0 0.0
        %2764 = vmatprep.subr.mxu0 0.0
        %2765 = vmatpush2.msra.mxu0 0.0
        %2766 = vmatprep.subr.mxu0 0.0
        %2767 = vmatpush2.msra.mxu0 0.0
        %2768 = vmatprep.subr.mxu0 0.0
        %2769 = vmatpush2.msra.mxu0 0.0
        %2770 = vmatprep.subr.mxu0 0.0
        %2771 = vmatpush2.msra.mxu0 0.0
        %2772 = vmatprep.subr.mxu0 0.0
        %2773 = vmatpush2.msra.mxu0 0.0
        %2774 = vmatprep.mubr.f32.mxu0 0.0
        %2775 = vmatmul.mubr.f32.gmra.mxu0 %v2708
        %v2776 = vpop.f32.mrf.mxu0
        %v2777 = vadd.f32 0.0, %v2776
        %v2778 = vpop.f32.mrf.mxu0
        %2779 = vdwg.mxu0
        %v2781 = vsel %vm1012, %v2777, 0
        %2783 = vmatprep.subr.mxu0 0.0
        %2784 = vmatpush1.msra.mxu0 0.0
        %2785 = vmatprep.subr.mxu0 0.0
        %2786 = vmatpush1.msra.mxu0 0.0
        %2787 = vmatprep.subr.mxu0 0.0
        %2788 = vmatpush1.msra.mxu0 0.0
        %2789 = vmatprep.subr.mxu0 0.0
        %2790 = vmatpush1.msra.mxu0 0.0
        %2791 = vmatprep.subr.mxu0 0.0
        %2792 = vmatpush1.msra.mxu0 0.0
        %2793 = vmatprep.subr.mxu0 0.0
        %2794 = vmatpush1.msra.mxu0 0.0
        %2795 = vmatprep.subr.mxu0 0.0
        %2796 = vmatpush1.msra.mxu0 0.0
        %2797 = vmatprep.subr.mxu0 0.0
        %2798 = vmatpush1.msra.mxu0 0.0
        %2799 = vmatprep.subr.mxu0 0.0
        %2800 = vmatpush1.msra.mxu0 0.0
        %2801 = vmatprep.subr.mxu0 0.0
        %2802 = vmatpush1.msra.mxu0 0.0
        %2803 = vmatprep.subr.mxu0 0.0
        %2804 = vmatpush1.msra.mxu0 0.0
        %2805 = vmatprep.subr.mxu0 0.0
        %2806 = vmatpush1.msra.mxu0 0.0
        %2807 = vmatprep.subr.mxu0 0.0
        %2808 = vmatpush1.msra.mxu0 0.0
        %2809 = vmatprep.subr.mxu0 0.0
        %2810 = vmatpush1.msra.mxu0 0.0
        %2811 = vmatprep.subr.mxu0 0.0
        %2812 = vmatpush1.msra.mxu0 %v898
        %2813 = vmatprep.subr.mxu0 0.0
        %2814 = vmatpush1.msra.mxu0 %v897
        %2815 = vmatprep.subr.mxu0 0.0
        %2816 = vmatpush2.msra.mxu0 0.0
        %2817 = vmatprep.subr.mxu0 0.0
        %2818 = vmatpush2.msra.mxu0 0.0
        %2819 = vmatprep.subr.mxu0 0.0
        %2820 = vmatpush2.msra.mxu0 0.0
        %2821 = vmatprep.subr.mxu0 0.0
        %2822 = vmatpush2.msra.mxu0 0.0
        %2823 = vmatprep.subr.mxu0 0.0
        %2824 = vmatpush2.msra.mxu0 0.0
        %2825 = vmatprep.subr.mxu0 0.0
        %2826 = vmatpush2.msra.mxu0 0.0
        %2827 = vmatprep.subr.mxu0 0.0
        %2828 = vmatpush2.msra.mxu0 0.0
        %2829 = vmatprep.subr.mxu0 0.0
        %2830 = vmatpush2.msra.mxu0 0.0
        %2831 = vmatprep.subr.mxu0 0.0
        %2832 = vmatpush2.msra.mxu0 0.0
        %2833 = vmatprep.subr.mxu0 0.0
        %2834 = vmatpush2.msra.mxu0 0.0
        %2835 = vmatprep.subr.mxu0 0.0
        %2836 = vmatpush2.msra.mxu0 0.0
        %2837 = vmatprep.subr.mxu0 0.0
        %2838 = vmatpush2.msra.mxu0 0.0
        %2839 = vmatprep.subr.mxu0 0.0
        %2840 = vmatpush2.msra.mxu0 0.0
        %2841 = vmatprep.subr.mxu0 0.0
        %2842 = vmatpush2.msra.mxu0 0.0
        %2843 = vmatprep.subr.mxu0 0.0
        %2844 = vmatpush2.msra.mxu0 0.0
        %2845 = vmatprep.subr.mxu0 0.0
        %2846 = vmatpush2.msra.mxu0 0.0
        %2847 = vmatprep.mubr.f32.mxu0 0.0
        %2848 = vmatmul.mubr.f32.gmra.mxu0 %v2781
        %v2849 = vpop.f32.mrf.mxu0
        %v2850 = vadd.f32 0.0, %v2849
        %v2851 = vpop.f32.mrf.mxu0
        %2852 = vdwg.mxu0
        %v2854 = vsel %vm1012, %v2612, 0
        %2856 = vmatprep.subr.mxu0 0.0
        %2857 = vmatpush1.msra.mxu0 0.0
        %2858 = vmatprep.subr.mxu0 0.0
        %2859 = vmatpush1.msra.mxu0 0.0
        %2860 = vmatprep.subr.mxu0 0.0
        %2861 = vmatpush1.msra.mxu0 0.0
        %2862 = vmatprep.subr.mxu0 0.0
        %2863 = vmatpush1.msra.mxu0 0.0
        %2864 = vmatprep.subr.mxu0 0.0
        %2865 = vmatpush1.msra.mxu0 0.0
        %2866 = vmatprep.subr.mxu0 0.0
        %2867 = vmatpush1.msra.mxu0 0.0
        %2868 = vmatprep.subr.mxu0 0.0
        %2869 = vmatpush1.msra.mxu0 0.0
        %2870 = vmatprep.subr.mxu0 0.0
        %2871 = vmatpush1.msra.mxu0 0.0
        %2872 = vmatprep.subr.mxu0 0.0
        %2873 = vmatpush1.msra.mxu0 0.0
        %2874 = vmatprep.subr.mxu0 0.0
        %2875 = vmatpush1.msra.mxu0 0.0
        %2876 = vmatprep.subr.mxu0 0.0
        %2877 = vmatpush1.msra.mxu0 0.0
        %2878 = vmatprep.subr.mxu0 0.0
        %2879 = vmatpush1.msra.mxu0 0.0
        %2880 = vmatprep.subr.mxu0 0.0
        %2881 = vmatpush1.msra.mxu0 0.0
        %2882 = vmatprep.subr.mxu0 0.0
        %2883 = vmatpush1.msra.mxu0 0.0
        %2884 = vmatprep.subr.mxu0 0.0
        %2885 = vmatpush1.msra.mxu0 %v896
        %2886 = vmatprep.subr.mxu0 0.0
        %2887 = vmatpush1.msra.mxu0 %v895
        %2888 = vmatprep.subr.mxu0 0.0
        %2889 = vmatpush2.msra.mxu0 0.0
        %2890 = vmatprep.subr.mxu0 0.0
        %2891 = vmatpush2.msra.mxu0 0.0
        %2892 = vmatprep.subr.mxu0 0.0
        %2893 = vmatpush2.msra.mxu0 0.0
        %2894 = vmatprep.subr.mxu0 0.0
        %2895 = vmatpush2.msra.mxu0 0.0
        %2896 = vmatprep.subr.mxu0 0.0
        %2897 = vmatpush2.msra.mxu0 0.0
        %2898 = vmatprep.subr.mxu0 0.0
        %2899 = vmatpush2.msra.mxu0 0.0
        %2900 = vmatprep.subr.mxu0 0.0
        %2901 = vmatpush2.msra.mxu0 0.0
        %2902 = vmatprep.subr.mxu0 0.0
        %2903 = vmatpush2.msra.mxu0 0.0
        %2904 = vmatprep.subr.mxu0 0.0
        %2905 = vmatpush2.msra.mxu0 0.0
        %2906 = vmatprep.subr.mxu0 0.0
        %2907 = vmatpush2.msra.mxu0 0.0
        %2908 = vmatprep.subr.mxu0 0.0
        %2909 = vmatpush2.msra.mxu0 0.0
        %2910 = vmatprep.subr.mxu0 0.0
        %2911 = vmatpush2.msra.mxu0 0.0
        %2912 = vmatprep.subr.mxu0 0.0
        %2913 = vmatpush2.msra.mxu0 0.0
        %2914 = vmatprep.subr.mxu0 0.0
        %2915 = vmatpush2.msra.mxu0 0.0
        %2916 = vmatprep.subr.mxu0 0.0
        %2917 = vmatpush2.msra.mxu0 0.0
        %2918 = vmatprep.subr.mxu0 0.0
        %2919 = vmatpush2.msra.mxu0 0.0
        %2920 = vmatprep.mubr.f32.mxu0 0.0
        %2921 = vmatmul.mubr.f32.gmra.mxu0 %v2854
        %v2922 = vpop.f32.mrf.mxu0
        %v2923 = vadd.f32 %v2850, %v2922
        %v2924 = vpop.f32.mrf.mxu0
        %2925 = vdwg.mxu0
        %2926 = vst.msk [vmem:[#allocation2 + $0x18] sm:$0xff] %vm908, %v2923
        %v2927 = vld [vmem:[#allocation2] sm:$0xff]
        %v2928 = vld [vmem:[#allocation2 + $0x8] sm:$0xff]
        %v2929 = vld [vmem:[#allocation2 + $0x10] sm:$0xff]
        %v2930 = vld [vmem:[#allocation2 + $0x18] sm:$0xff]
        %v2931 = vlaneseq
        %v2932 = vshrl.u32 %v2931, 7
        %v2933 = vsub.s32 0, %v2932
        %v2934 = vrot.slane %v901, %v2933
        %v2935 = vadd.f32 %v2927, %v2934
        %v2936 = vadd.f32 %v2928, %v2934
        %v2937 = vadd.f32 %v2929, %v2934
        %v2938 = vadd.f32 %v2930, %v2934
        %v2939 = vadd.f32 %v882, %v2935
        %v2940 = vadd.f32 %v883, %v2936
        %v2941 = vadd.f32 %v884, %v2937
        %v2942 = vadd.f32 %v885, %v2938
        %v2943 = vsel %vm908, %v2939, 0.0
        %2944 = vadd.xlane.f32.xlu0 %v2943
        %v2945 = vpop.xlane.xlu0 %2944
        %v2946 = vsel %vm908, %v2940, 0.0
        %2947 = vadd.xlane.f32.xlu0 %v2946
        %v2948 = vpop.xlane.xlu0 %2947
        %v2949 = vsel %vm908, %v2941, 0.0
        %2950 = vadd.xlane.f32.xlu0 %v2949
        %v2951 = vpop.xlane.xlu0 %2950
        %v2952 = vsel %vm908, %v2942, 0.0
        %2953 = vadd.xlane.f32.xlu0 %v2952
        %v2954 = vpop.xlane.xlu0 %2953
        %v2955 = vrcp.pop 32.0
        %v2956 = vmul.f32 %v2945, %v2955
        %v2957 = vmul.f32 %v2948, %v2955
        %v2958 = vmul.f32 %v2951, %v2955
        %v2959 = vmul.f32 %v2954, %v2955
        %v2960 = vsub.f32 %v2939, %v2956
        %v2961 = vsub.f32 %v2940, %v2957
        %v2962 = vsub.f32 %v2941, %v2958
        %v2963 = vsub.f32 %v2942, %v2959
        %v2964 = vmul.f32 %v2960, %v2960
        %v2965 = vmul.f32 %v2961, %v2961
        %v2966 = vmul.f32 %v2962, %v2962
        %v2967 = vmul.f32 %v2963, %v2963
        %v2968 = vsel %vm908, %v2964, 0.0
        %2969 = vadd.xlane.f32.xlu0 %v2968
        %v2970 = vpop.xlane.xlu0 %2969
        %v2971 = vsel %vm908, %v2965, 0.0
        %2972 = vadd.xlane.f32.xlu0 %v2971
        %v2973 = vpop.xlane.xlu0 %2972
        %v2974 = vsel %vm908, %v2966, 0.0
        %2975 = vadd.xlane.f32.xlu0 %v2974
        %v2976 = vpop.xlane.xlu0 %2975
        %v2977 = vsel %vm908, %v2967, 0.0
        %2978 = vadd.xlane.f32.xlu0 %v2977
        %v2979 = vpop.xlane.xlu0 %2978
        %v2980 = vmul.f32 %v2970, %v2955
        %v2981 = vmul.f32 %v2973, %v2955
        %v2982 = vmul.f32 %v2976, %v2955
        %v2983 = vmul.f32 %v2979, %v2955
        %v2984 = vadd.f32 %v2980, 1e-05
        %v2985 = vadd.f32 %v2981, 1e-05
        %v2986 = vadd.f32 %v2982, 1e-05
        %v2987 = vadd.f32 %v2983, 1e-05
        %v2988 = vrsqrt.pop %v2984
        %v2989 = vrsqrt.pop %v2985
        %v2990 = vrsqrt.pop %v2986
        %v2991 = vrsqrt.pop %v2987
        %v2992 = vmul.f32 %v2960, %v2988
        %v2993 = vmul.f32 %v2961, %v2989
        %v2994 = vmul.f32 %v2962, %v2990
        %v2995 = vmul.f32 %v2963, %v2991
        %v2996 = vlaneseq
        %v2997 = vshrl.u32 %v2996, 7
        %v2998 = vsub.s32 3, %v2997
        %v2999 = vrot.slane %v901, %v2998
        %v3000 = vmul.f32 %v2992, %v2999
        %v3001 = vmul.f32 %v2993, %v2999
        %v3002 = vmul.f32 %v2994, %v2999
        %v3003 = vmul.f32 %v2995, %v2999
        %v3004 = vlaneseq
        %v3005 = vshrl.u32 %v3004, 7
        %v3006 = vsub.s32 4, %v3005
        %v3007 = vrot.slane %v901, %v3006
        %v3008 = vadd.f32 %v3000, %v3007
        %v3009 = vadd.f32 %v3001, %v3007
        %v3010 = vadd.f32 %v3002, %v3007
        %v3011 = vadd.f32 %v3003, %v3007
        %s3012 = scalar_lea.vmem [#allocation15], %s886
        %v3013 = vld [vmem:[%s3012] sm:$0xff]
        %v3014 = vld [vmem:[%s3012 + $0x8] sm:$0xff]
        %v3015 = vld [vmem:[%s3012 + $0x10] sm:$0xff]
        %v3016 = vld [vmem:[%s3012 + $0x18] sm:$0xff]
        %v3017 = vlaneseq
        %v3018 = vshrl.u32 %v3017, 7
        %v3019 = vsub.s32 1, %v3018
        %v3020 = vrot.slane %v901, %v3019
        %v3022 = vsel %vm908, %v3008, 0
        %v3025 = vsel %vm908, %v3009, 0
        %v3028 = vsel %vm908, %v3010, 0
        %v3031 = vsel %vm908, %v3011, 0
        %3033 = vmatprep.subr.mxu0 0.0
        %3034 = vmatpush1.msra.mxu0 0.0
        %3035 = vmatprep.subr.mxu0 0.0
        %3036 = vmatpush1.msra.mxu0 0.0
        %3037 = vmatprep.subr.mxu0 0.0
        %3038 = vmatpush1.msra.mxu0 0.0
        %3039 = vmatprep.subr.mxu0 0.0
        %3040 = vmatpush1.msra.mxu0 0.0
        %3041 = vmatprep.subr.mxu0 0.0
        %3042 = vmatpush1.msra.mxu0 0.0
        %3043 = vmatprep.subr.mxu0 0.0
        %3044 = vmatpush1.msra.mxu0 0.0
        %3045 = vmatprep.subr.mxu0 0.0
        %3046 = vmatpush1.msra.mxu0 0.0
        %3047 = vmatprep.subr.mxu0 0.0
        %3048 = vmatpush1.msra.mxu0 0.0
        %3049 = vmatprep.subr.mxu0 0.0
        %3050 = vmatpush1.msra.mxu0 0.0
        %3051 = vmatprep.subr.mxu0 0.0
        %3052 = vmatpush1.msra.mxu0 0.0
        %3053 = vmatprep.subr.mxu0 0.0
        %3054 = vmatpush1.msra.mxu0 0.0
        %3055 = vmatprep.subr.mxu0 0.0
        %3056 = vmatpush1.msra.mxu0 0.0
        %3057 = vmatprep.subr.mxu0 0.0
        %3058 = vmatpush1.msra.mxu0 %v3016
        %3059 = vmatprep.subr.mxu0 0.0
        %3060 = vmatpush1.msra.mxu0 %v3015
        %3061 = vmatprep.subr.mxu0 0.0
        %3062 = vmatpush1.msra.mxu0 %v3014
        %3063 = vmatprep.subr.mxu0 0.0
        %3064 = vmatpush1.msra.mxu0 %v3013
        %3065 = vmatprep.subr.mxu0 0.0
        %3066 = vmatpush2.msra.mxu0 0.0
        %3067 = vmatprep.subr.mxu0 0.0
        %3068 = vmatpush2.msra.mxu0 0.0
        %3069 = vmatprep.subr.mxu0 0.0
        %3070 = vmatpush2.msra.mxu0 0.0
        %3071 = vmatprep.subr.mxu0 0.0
        %3072 = vmatpush2.msra.mxu0 0.0
        %3073 = vmatprep.subr.mxu0 0.0
        %3074 = vmatpush2.msra.mxu0 0.0
        %3075 = vmatprep.subr.mxu0 0.0
        %3076 = vmatpush2.msra.mxu0 0.0
        %3077 = vmatprep.subr.mxu0 0.0
        %3078 = vmatpush2.msra.mxu0 0.0
        %3079 = vmatprep.subr.mxu0 0.0
        %3080 = vmatpush2.msra.mxu0 0.0
        %3081 = vmatprep.subr.mxu0 0.0
        %3082 = vmatpush2.msra.mxu0 0.0
        %3083 = vmatprep.subr.mxu0 0.0
        %3084 = vmatpush2.msra.mxu0 0.0
        %3085 = vmatprep.subr.mxu0 0.0
        %3086 = vmatpush2.msra.mxu0 0.0
        %3087 = vmatprep.subr.mxu0 0.0
        %3088 = vmatpush2.msra.mxu0 0.0
        %3089 = vmatprep.subr.mxu0 0.0
        %3090 = vmatpush2.msra.mxu0 0.0
        %3091 = vmatprep.subr.mxu0 0.0
        %3092 = vmatpush2.msra.mxu0 0.0
        %3093 = vmatprep.subr.mxu0 0.0
        %3094 = vmatpush2.msra.mxu0 0.0
        %3095 = vmatprep.subr.mxu0 0.0
        %3096 = vmatpush2.msra.mxu0 0.0
        %3097 = vmatprep.mubr.f32.mxu0 0.0
        %3098 = vmatmul.mubr.f32.gmra.mxu0 %v3022
        %v3099 = vpop.f32.mrf.mxu0
        %v3100 = vadd.f32 %v3020, %v3099
        %v3101 = vpop.f32.mrf.mxu0
        %3102 = vmatprep.mubr.f32.mxu0 0.0
        %3103 = vmatmul.mubr.f32.gmra.mxu0 %v3025
        %v3104 = vpop.f32.mrf.mxu0
        %v3105 = vadd.f32 %v3020, %v3104
        %v3106 = vpop.f32.mrf.mxu0
        %3107 = vmatprep.mubr.f32.mxu0 0.0
        %3108 = vmatmul.mubr.f32.gmra.mxu0 %v3028
        %v3109 = vpop.f32.mrf.mxu0
        %v3110 = vadd.f32 %v3020, %v3109
        %v3111 = vpop.f32.mrf.mxu0
        %3112 = vmatprep.mubr.f32.mxu0 0.0
        %3113 = vmatmul.mubr.f32.gmra.mxu0 %v3031
        %v3114 = vpop.f32.mrf.mxu0
        %v3115 = vadd.f32 %v3020, %v3114
        %v3116 = vpop.f32.mrf.mxu0
        %3117 = vdwg.mxu0
        %v3118 = vmul.f32 %v3100, 0.5
        %v3119 = vmul.f32 %v3105, 0.5
        %v3120 = vmul.f32 %v3110, 0.5
        %v3121 = vmul.f32 %v3115, 0.5
        %v3122 = vmul.f32 %v3100, 0.70710677
        %v3123 = vmul.f32 %v3105, 0.70710677
        %v3124 = vmul.f32 %v3110, 0.70710677
        %v3125 = vmul.f32 %v3115, 0.70710677
        %vm3126 = vcmp.ge.f32.partialorder %v3122, 0.0
        %vm3127 = vcmp.ge.f32.partialorder %v3123, 0.0
        %vm3128 = vcmp.ge.f32.partialorder %v3124, 0.0
        %vm3129 = vcmp.ge.f32.partialorder %v3125, 0.0
        %v3130 = vsel %vm3126, 1.0, -1.0
        %v3131 = vsel %vm3127, 1.0, -1.0
        %v3132 = vsel %vm3128, 1.0, -1.0
        %v3133 = vsel %vm3129, 1.0, -1.0
        %v3134 = vand.u32 2147483647, %v3122
        %v3135 = vand.u32 2147483647, %v3123
        %v3136 = vand.u32 2147483647, %v3124
        %v3137 = vand.u32 2147483647, %v3125
        %v3138 = vmul.f32 %v3134, 0.3275911
        %v3139 = vmul.f32 %v3135, 0.3275911
        %v3140 = vmul.f32 %v3136, 0.3275911
        %v3141 = vmul.f32 %v3137, 0.3275911
        %v3142 = vadd.f32 %v3138, 1.0
        %v3143 = vadd.f32 %v3139, 1.0
        %v3144 = vadd.f32 %v3140, 1.0
        %v3145 = vadd.f32 %v3141, 1.0
        %v3146 = vrcp.pop %v3142
        %v3147 = vrcp.pop %v3143
        %v3148 = vrcp.pop %v3144
        %v3149 = vrcp.pop %v3145
        %v3150 = vmul.f32 %v3146, 1.0614054
        %v3151 = vmul.f32 %v3147, 1.0614054
        %v3152 = vmul.f32 %v3148, 1.0614054
        %v3153 = vmul.f32 %v3149, 1.0614054
        %v3154 = vadd.f32 %v3150, -1.4531521
        %v3155 = vadd.f32 %v3151, -1.4531521
        %v3156 = vadd.f32 %v3152, -1.4531521
        %v3157 = vadd.f32 %v3153, -1.4531521
        %v3158 = vmul.f32 %v3154, %v3146
        %v3159 = vmul.f32 %v3155, %v3147
        %v3160 = vmul.f32 %v3156, %v3148
        %v3161 = vmul.f32 %v3157, %v3149
        %v3162 = vadd.f32 %v3158, 1.4214138
        %v3163 = vadd.f32 %v3159, 1.4214138
        %v3164 = vadd.f32 %v3160, 1.4214138
        %v3165 = vadd.f32 %v3161, 1.4214138
        %v3166 = vmul.f32 %v3162, %v3146
        %v3167 = vmul.f32 %v3163, %v3147
        %v3168 = vmul.f32 %v3164, %v3148
        %v3169 = vmul.f32 %v3165, %v3149
        %v3170 = vadd.f32 %v3166, -0.28449672
        %v3171 = vadd.f32 %v3167, -0.28449672
        %v3172 = vadd.f32 %v3168, -0.28449672
        %v3173 = vadd.f32 %v3169, -0.28449672
        %v3174 = vmul.f32 %v3170, %v3146
        %v3175 = vmul.f32 %v3171, %v3147
        %v3176 = vmul.f32 %v3172, %v3148
        %v3177 = vmul.f32 %v3173, %v3149
        %v3178 = vadd.f32 %v3174, 0.2548296
        %v3179 = vadd.f32 %v3175, 0.2548296
        %v3180 = vadd.f32 %v3176, 0.2548296
        %v3181 = vadd.f32 %v3177, 0.2548296
        %v3182 = vmul.f32 %v3178, %v3146
        %v3183 = vmul.f32 %v3179, %v3147
        %v3184 = vmul.f32 %v3180, %v3148
        %v3185 = vmul.f32 %v3181, %v3149
        %v3186 = vsub.f32 0.0, %v3134
        %v3187 = vsub.f32 0.0, %v3135
        %v3188 = vsub.f32 0.0, %v3136
        %v3189 = vsub.f32 0.0, %v3137
        %v3190 = vmul.f32 %v3186, %v3134
        %v3191 = vmul.f32 %v3187, %v3135
        %v3192 = vmul.f32 %v3188, %v3136
        %v3193 = vmul.f32 %v3189, %v3137
        %v3194 = vmul.f32 %v3190, 1.442695
        %v3195 = vpow.pop %v3194
        %v3196 = vmul.f32 %v3191, 1.442695
        %v3197 = vpow.pop %v3196
        %v3198 = vmul.f32 %v3192, 1.442695
        %v3199 = vpow.pop %v3198
        %v3200 = vmul.f32 %v3193, 1.442695
        %v3201 = vpow.pop %v3200
        %v3202 = vmul.f32 %v3182, %v3195
        %v3203 = vmul.f32 %v3183, %v3197
        %v3204 = vmul.f32 %v3184, %v3199
        %v3205 = vmul.f32 %v3185, %v3201
        %v3206 = vsub.f32 1.0, %v3202
        %v3207 = vsub.f32 1.0, %v3203
        %v3208 = vsub.f32 1.0, %v3204
        %v3209 = vsub.f32 1.0, %v3205
        %v3210 = vmul.f32 %v3130, %v3206
        %v3211 = vmul.f32 %v3131, %v3207
        %v3212 = vmul.f32 %v3132, %v3208
        %v3213 = vmul.f32 %v3133, %v3209
        %v3214 = vadd.f32 %v3210, 1.0
        %v3215 = vadd.f32 %v3211, 1.0
        %v3216 = vadd.f32 %v3212, 1.0
        %v3217 = vadd.f32 %v3213, 1.0
        %v3218 = vmul.f32 %v3118, %v3214
        %v3219 = vmul.f32 %v3119, %v3215
        %v3220 = vmul.f32 %v3120, %v3216
        %v3221 = vmul.f32 %v3121, %v3217
        %s3222 = scalar_lea.vmem [#allocation17], %s886
        %v3223 = vld [vmem:[%s3222] sm:$0xff]
        %v3224 = vld [vmem:[%s3222 + $0x8] sm:$0xff]
        %v3225 = vld [vmem:[%s3222 + $0x10] sm:$0xff]
        %v3226 = vld [vmem:[%s3222 + $0x18] sm:$0xff]
        %v3227 = vlaneseq
        %v3228 = vshrl.u32 %v3227, 7
        %v3229 = vsub.s32 2, %v3228
        %v3230 = vrot.slane %v901, %v3229
        %v3232 = vsel %vm908, %v3218, 0
        %v3235 = vsel %vm908, %v3219, 0
        %v3238 = vsel %vm908, %v3220, 0
        %v3241 = vsel %vm908, %v3221, 0
        %3243 = vmatprep.subr.mxu0 0.0
        %3244 = vmatpush1.msra.mxu0 0.0
        %3245 = vmatprep.subr.mxu0 0.0
        %3246 = vmatpush1.msra.mxu0 0.0
        %3247 = vmatprep.subr.mxu0 0.0
        %3248 = vmatpush1.msra.mxu0 0.0
        %3249 = vmatprep.subr.mxu0 0.0
        %3250 = vmatpush1.msra.mxu0 0.0
        %3251 = vmatprep.subr.mxu0 0.0
        %3252 = vmatpush1.msra.mxu0 0.0
        %3253 = vmatprep.subr.mxu0 0.0
        %3254 = vmatpush1.msra.mxu0 0.0
        %3255 = vmatprep.subr.mxu0 0.0
        %3256 = vmatpush1.msra.mxu0 0.0
        %3257 = vmatprep.subr.mxu0 0.0
        %3258 = vmatpush1.msra.mxu0 0.0
        %3259 = vmatprep.subr.mxu0 0.0
        %3260 = vmatpush1.msra.mxu0 0.0
        %3261 = vmatprep.subr.mxu0 0.0
        %3262 = vmatpush1.msra.mxu0 0.0
        %3263 = vmatprep.subr.mxu0 0.0
        %3264 = vmatpush1.msra.mxu0 0.0
        %3265 = vmatprep.subr.mxu0 0.0
        %3266 = vmatpush1.msra.mxu0 0.0
        %3267 = vmatprep.subr.mxu0 0.0
        %3268 = vmatpush1.msra.mxu0 %v3226
        %3269 = vmatprep.subr.mxu0 0.0
        %3270 = vmatpush1.msra.mxu0 %v3225
        %3271 = vmatprep.subr.mxu0 0.0
        %3272 = vmatpush1.msra.mxu0 %v3224
        %3273 = vmatprep.subr.mxu0 0.0
        %3274 = vmatpush1.msra.mxu0 %v3223
        %3275 = vmatprep.subr.mxu0 0.0
        %3276 = vmatpush2.msra.mxu0 0.0
        %3277 = vmatprep.subr.mxu0 0.0
        %3278 = vmatpush2.msra.mxu0 0.0
        %3279 = vmatprep.subr.mxu0 0.0
        %3280 = vmatpush2.msra.mxu0 0.0
        %3281 = vmatprep.subr.mxu0 0.0
        %3282 = vmatpush2.msra.mxu0 0.0
        %3283 = vmatprep.subr.mxu0 0.0
        %3284 = vmatpush2.msra.mxu0 0.0
        %3285 = vmatprep.subr.mxu0 0.0
        %3286 = vmatpush2.msra.mxu0 0.0
        %3287 = vmatprep.subr.mxu0 0.0
        %3288 = vmatpush2.msra.mxu0 0.0
        %3289 = vmatprep.subr.mxu0 0.0
        %3290 = vmatpush2.msra.mxu0 0.0
        %3291 = vmatprep.subr.mxu0 0.0
        %3292 = vmatpush2.msra.mxu0 0.0
        %3293 = vmatprep.subr.mxu0 0.0
        %3294 = vmatpush2.msra.mxu0 0.0
        %3295 = vmatprep.subr.mxu0 0.0
        %3296 = vmatpush2.msra.mxu0 0.0
        %3297 = vmatprep.subr.mxu0 0.0
        %3298 = vmatpush2.msra.mxu0 0.0
        %3299 = vmatprep.subr.mxu0 0.0
        %3300 = vmatpush2.msra.mxu0 0.0
        %3301 = vmatprep.subr.mxu0 0.0
        %3302 = vmatpush2.msra.mxu0 0.0
        %3303 = vmatprep.subr.mxu0 0.0
        %3304 = vmatpush2.msra.mxu0 0.0
        %3305 = vmatprep.subr.mxu0 0.0
        %3306 = vmatpush2.msra.mxu0 0.0
        %3307 = vmatprep.mubr.f32.mxu0 0.0
        %3308 = vmatmul.mubr.f32.gmra.mxu0 %v3232
        %v3309 = vpop.f32.mrf.mxu0
        %v3310 = vadd.f32 %v3230, %v3309
        %v3311 = vpop.f32.mrf.mxu0
        %3312 = vmatprep.mubr.f32.mxu0 0.0
        %3313 = vmatmul.mubr.f32.gmra.mxu0 %v3235
        %v3314 = vpop.f32.mrf.mxu0
        %v3315 = vadd.f32 %v3230, %v3314
        %v3316 = vpop.f32.mrf.mxu0
        %3317 = vmatprep.mubr.f32.mxu0 0.0
        %3318 = vmatmul.mubr.f32.gmra.mxu0 %v3238
        %v3319 = vpop.f32.mrf.mxu0
        %v3320 = vadd.f32 %v3230, %v3319
        %v3321 = vpop.f32.mrf.mxu0
        %3322 = vmatprep.mubr.f32.mxu0 0.0
        %3323 = vmatmul.mubr.f32.gmra.mxu0 %v3241
        %v3324 = vpop.f32.mrf.mxu0
        %v3325 = vadd.f32 %v3230, %v3324
        %v3326 = vpop.f32.mrf.mxu0
        %3327 = vdwg.mxu0
        %v3328 = vadd.f32 %v3008, %v3310
        %v3329 = vadd.f32 %v3009, %v3315
        %v3330 = vadd.f32 %v3010, %v3320
        %v3331 = vadd.f32 %v3011, %v3325
        %v3332 = vsel %vm908, %v3328, 0.0
        %3333 = vadd.xlane.f32.xlu0 %v3332
        %v3334 = vpop.xlane.xlu0 %3333
        %v3335 = vsel %vm908, %v3329, 0.0
        %3336 = vadd.xlane.f32.xlu0 %v3335
        %v3337 = vpop.xlane.xlu0 %3336
        %v3338 = vsel %vm908, %v3330, 0.0
        %3339 = vadd.xlane.f32.xlu0 %v3338
        %v3340 = vpop.xlane.xlu0 %3339
        %v3341 = vsel %vm908, %v3331, 0.0
        %3342 = vadd.xlane.f32.xlu0 %v3341
        %v3343 = vpop.xlane.xlu0 %3342
        %v3344 = vmul.f32 %v3334, %v2955
        %v3345 = vmul.f32 %v3337, %v2955
        %v3346 = vmul.f32 %v3340, %v2955
        %v3347 = vmul.f32 %v3343, %v2955
        %v3348 = vsub.f32 %v3328, %v3344
        %v3349 = vsub.f32 %v3329, %v3345
        %v3350 = vsub.f32 %v3330, %v3346
        %v3351 = vsub.f32 %v3331, %v3347
        %v3352 = vmul.f32 %v3348, %v3348
        %v3353 = vmul.f32 %v3349, %v3349
        %v3354 = vmul.f32 %v3350, %v3350
        %v3355 = vmul.f32 %v3351, %v3351
        %v3356 = vsel %vm908, %v3352, 0.0
        %3357 = vadd.xlane.f32.xlu0 %v3356
        %v3358 = vpop.xlane.xlu0 %3357
        %v3359 = vsel %vm908, %v3353, 0.0
        %3360 = vadd.xlane.f32.xlu0 %v3359
        %v3361 = vpop.xlane.xlu0 %3360
        %v3362 = vsel %vm908, %v3354, 0.0
        %3363 = vadd.xlane.f32.xlu0 %v3362
        %v3364 = vpop.xlane.xlu0 %3363
        %v3365 = vsel %vm908, %v3355, 0.0
        %3366 = vadd.xlane.f32.xlu0 %v3365
        %v3367 = vpop.xlane.xlu0 %3366
        %v3368 = vmul.f32 %v3358, %v2955
        %v3369 = vmul.f32 %v3361, %v2955
        %v3370 = vmul.f32 %v3364, %v2955
        %v3371 = vmul.f32 %v3367, %v2955
        %v3372 = vadd.f32 %v3368, 1e-05
        %v3373 = vadd.f32 %v3369, 1e-05
        %v3374 = vadd.f32 %v3370, 1e-05
        %v3375 = vadd.f32 %v3371, 1e-05
        %v3376 = vrsqrt.pop %v3372
        %v3377 = vrsqrt.pop %v3373
        %v3378 = vrsqrt.pop %v3374
        %v3379 = vrsqrt.pop %v3375
        %v3380 = vmul.f32 %v3348, %v3376
        %v3381 = vmul.f32 %v3349, %v3377
        %v3382 = vmul.f32 %v3350, %v3378
        %v3383 = vmul.f32 %v3351, %v3379
        %v3384 = vlaneseq
        %v3385 = vshrl.u32 %v3384, 7
        %v3386 = vsub.s32 5, %v3385
        %v3387 = vrot.slane %v901, %v3386
        %v3388 = vmul.f32 %v3380, %v3387
        %v3389 = vmul.f32 %v3381, %v3387
        %v3390 = vmul.f32 %v3382, %v3387
        %v3391 = vmul.f32 %v3383, %v3387
        %v3392 = vlaneseq
        %v3393 = vshrl.u32 %v3392, 7
        %v3394 = vsub.s32 6, %v3393
        %v3395 = vrot.slane %v901, %v3394
        %v3396 = vadd.f32 %v3388, %v3395
        %v3397 = vadd.f32 %v3389, %v3395
        %v3398 = vadd.f32 %v3390, %v3395
        %v3399 = vadd.f32 %v3391, %v3395
        %3400 = vst.msk [vmem:[#allocation18] sm:$0xff] %vm908, %v3396
        %3401 = vst.msk [vmem:[#allocation18 + $0x8] sm:$0xff] %vm908, %v3397
        %3402 = vst.msk [vmem:[#allocation18 + $0x10] sm:$0xff] %vm908, %v3398
        %3403 = vst.msk [vmem:[#allocation18 + $0x18] sm:$0xff] %vm908, %v3399
        // Predicated region
        $region105: #{tpu_custom_call.1} parent=63 // pred_check
          %p3404 = pneg %p299
        $region106: #{tpu_custom_call.1} parent=63 // pred_check_branch
          %3406 = sbr.rel (%p3404) target = $region108
        $region107: #{tpu_custom_call.1} parent=63 // pred_region
          %s3407 = smul.u32 4, %s32
          %s3409 = ssub.s32 512, 512
          %3410 = vsyncadd [#allocation5], %s3409
          %s3411 = smul.addr %s3407, 128
          %s3412 = scalar_lea.hbm %s11, %s3411
          %s3413 = sshll.u32 [#allocation18], 4
          %s3414 = int_to_ptr.vmem [resolvable:$true] %s3413
          %3419 = dma.vmem_to_hbm [thread:$0]  %s3414, 512, %s3412, [#allocation5], 128, 128, 8
        $region108: #{tpu_custom_call.1} parent=63 // pred_fallthru
          _
        // Predicated region
        $region109: #{tpu_custom_call.1} parent=63 // pred_check
          %p3420 = pneg %p299
        $region110: #{tpu_custom_call.1} parent=63 // pred_check_branch
          %3422 = sbr.rel (%p3420) target = $region112
        $region111: #{tpu_custom_call.1} parent=63 // pred_region
          %3423 = dma.done [#allocation5], 512
        $region112: #{tpu_custom_call.1} parent=63 // pred_fallthru
          _
      $region64: #{tpu_custom_call.1} parent=5 // pred_fallthru
        _
      %p3424 = scmp.le.s32.totalorder 2, %s23
      // Predicated region
      $region113: #{tpu_custom_call.1} parent=5 // pred_check
        %p3425 = pneg %p3424
      $region114: #{tpu_custom_call.1} parent=5 // pred_check_branch
        %3427 = sbr.rel (%p3425) target = $region116
      $region115: #{tpu_custom_call.1} parent=5 // pred_region
        %s3428 = ssub.s32 %s23, 2
      $region116: #{tpu_custom_call.1} parent=5 // pred_fallthru
        _
    $region6: #{tpu_custom_call.1} parent=1 // loop_footer
      %s27 = sadd.s32 1, %s23
    $region7: #{tpu_custom_call.1} parent=1 // loop_footer_branch
      %22 = sbr.rel target = $region3
    $region8: #{tpu_custom_call.1} parent=1 // loop_exit
      _
    %3429 = vsyncpa [#allocation4], 1
    %s3430 = scalar_lea.sflag [#allocation4], 1
    %3431 = vsyncpa %s3430, 1
    %3432 = vsyncpa [#allocation7], 1
    %3433 = vsyncpa [#allocation10], 1
    %3434 = vsyncpa [#allocation13], 1
    %3435 = vsyncpa [#allocation16], 1
    %3436 = vsyncpa [#allocation5], 1
    %s3437 = scalar_lea.sflag [#allocation5], 1
    %3438 = vsyncpa %s3437, 1

</llo_original>
